<compile_context>
chip_gen: v6e
topology: v6e:2x2x1
jax: 0.10.0
libtpu: 0.0.40
codegen_flags: <defaults>
</compile_context>

<pallas_src>
import functools

import jax
import jax.numpy as jnp
from jax import lax
from jax.experimental import pallas as pl
from jax.experimental.pallas import tpu as pltpu

K = 15          # depthwise kernel size
PAD = K // 2    # = 7
AK = 3          # avg-pool kernel size
APAD = AK // 2  # = 1


def nsb_kernel(x_ref, masks_ref, dwk_ref, s1_ref, b1_ref, w1_ref, s2_ref,
               b2_ref, out_ref, *, H, W, Cb):
    # x_ref:     (1, Cb, H*W)   one packed block (B_blk batch elems x C chans)
    # masks_ref: (2K, H*W) f32  rows 0..K-1: w-masks (dj=j-PAD), K..2K-1: h-masks
    # dwk_ref:   (K*Cb, K)      depthwise weights: row i*Cb+c, column j (=dj tap)
    # s1/b1:     (Cb, 1)        folded BN1 (+ depthwise-conv bias), tiled
    # w1_ref:    (Cb, Cb)       block-diagonal 1x1 conv weight
    # s2/b2:     (Cb, 1)        folded BN2 (+ pointwise-conv bias), tiled
    HW = H * W
    x = x_ref[0].astype(jnp.float32)                       # (Cb, HW), lane-dense

    # ---- depthwise 15x15 conv, zero padding 7 (groups = C) ----------------
    # Column stage: 15 masked lane rotations, reused by all 15 row offsets.
    xw = []
    for j in range(K):
        dj = j - PAD
        t = x if dj == 0 else pltpu.roll(x, (-dj) % HW, 1)     # XLU rotation
        xw.append(t * masks_ref[j:j + 1, :])                   # w-validity mask
    # Row stage: per-row weighted sums (pure FMAs) + one row roll + h-mask.
    acc = None
    for i in range(K):
        di = i - PAD
        w_row = dwk_ref[i * Cb:(i + 1) * Cb, :].astype(jnp.float32)   # (Cb, K)
        inner = w_row[:, 0:1] * xw[0]
        for j in range(1, K):
            inner = inner + w_row[:, j:j + 1] * xw[j]
        r = inner if di == 0 else pltpu.roll(inner, (-di * W) % HW, 1)
        r = r * masks_ref[K + i:K + i + 1, :]                  # h-validity mask
        acc = r if acc is None else acc + r

    # ---- BatchNorm1 (folded per-channel affine) ----
    x_con = acc * s1_ref[...] + b1_ref[...]

    # ---- AvgPool2d(3, stride=1, padding=1), count_include_pad=True --------
    # Separable: masked +/-1 lane rolls, then masked +/-W row rolls, scale 1/9.
    left = pltpu.roll(x_con, 1, 1) * masks_ref[PAD - 1:PAD, :]            # dj=-1
    right = pltpu.roll(x_con, (-1) % HW, 1) * masks_ref[PAD + 1:PAD + 2, :]  # dj=+1
    rowsum = x_con + left + right
    up = pltpu.roll(rowsum, W, 1) * masks_ref[K + PAD - 1:K + PAD, :]     # di=-1
    down = pltpu.roll(rowsum, (-W) % HW, 1) * masks_ref[K + PAD + 1:K + PAD + 2, :]
    ap = (rowsum + up + down) * (1.0 / 9.0)

    # ---- 1x1 conv on (x_con - ap): one block-diag MXU matmul, BN2, sigmoid ----
    diff = x_con - ap                                           # (Cb, HW)
    z = jnp.dot(w1_ref[...], diff, preferred_element_type=jnp.float32)
    z = z * s2_ref[...] + b2_ref[...]
    gate = jax.nn.sigmoid(z)

    # ---- output: gate * x (re-read x_ref; lane-dense unmasked store) ----
    out_ref[0] = (gate * x_ref[0].astype(jnp.float32)).astype(out_ref.dtype)


def _pick_b_blk(B, C):
    """Smallest divisor of B whose packed channel count fills >= 8 sublanes."""
    for cand in range(1, B + 1):
        if B % cand == 0 and cand * C >= 8:
            return cand
    return B


def nsb_forward(x_nchw, dwk_kkc, s1, b1, w1, s2, b2):
    """x_nchw: (B, C, H, W) -> (B, C, H, W).  dwk_kkc: (K, K, C) depthwise
    weights.  BN (+conv bias) folded into s*/b* (inference mode)."""
    B, C, H, W = x_nchw.shape
    HW = H * W
    B_blk = _pick_b_blk(B, C)
    G = B // B_blk
    Cb = B_blk * C

    # Batch-packed, channel-major, flat-spatial slabs -- free reshapes.
    x_g = x_nchw.reshape(G, Cb, HW)

    # Precomputed 0/1 boundary masks: rows 0..K-1 are w-masks (offset j-PAD),
    # rows K..2K-1 are h-masks (offset i-PAD).
    ww = jnp.arange(W).reshape(1, W)
    hh = jnp.arange(H).reshape(H, 1)
    wmasks = [jnp.broadcast_to((ww + (j - PAD) >= 0) & (ww + (j - PAD) < W),
                               (H, W)).reshape(1, HW).astype(jnp.float32)
              for j in range(K)]
    hmasks = [jnp.broadcast_to((hh + (i - PAD) >= 0) & (hh + (i - PAD) < H),
                               (H, W)).reshape(1, HW).astype(jnp.float32)
              for i in range(K)]
    masks = jnp.concatenate(wmasks + hmasks, axis=0)        # (2K, HW)

    # Depthwise weights: (K*Cb, K) -- row i*Cb + (packed channel), lanes = dj.
    w_kkcb = jnp.tile(dwk_kkc, (1, 1, B_blk))               # (K, K, Cb)
    dwk = jnp.transpose(w_kkcb, (0, 2, 1)).reshape(K * Cb, K).astype(jnp.float32)

    # Folded BN affines, tiled across the packed batch.
    s1c = jnp.tile(s1.reshape(-1), B_blk).reshape(Cb, 1).astype(jnp.float32)
    b1c = jnp.tile(b1.reshape(-1), B_blk).reshape(Cb, 1).astype(jnp.float32)
    s2c = jnp.tile(s2.reshape(-1), B_blk).reshape(Cb, 1).astype(jnp.float32)
    b2c = jnp.tile(b2.reshape(-1), B_blk).reshape(Cb, 1).astype(jnp.float32)

    # Block-diagonal 1x1 weight: one matmul covers all packed batch elements.
    w1_big = jnp.kron(jnp.eye(B_blk, dtype=jnp.float32), w1.astype(jnp.float32))

    kernel = functools.partial(nsb_kernel, H=H, W=W, Cb=Cb)

    # VMEM budget: a few dozen (Cb, HW) f32 slabs (I/O double buffers + the 15
    # column-shift slabs + temporaries), with a floor/cap safe for v7x (64 MiB).
    slab_bytes = Cb * HW * 4
    vmem_limit = int(max(16 * 1024 * 1024,
                         min(96 * 1024 * 1024, 64 * slab_bytes)))

    out = pl.pallas_call(
        kernel,
        out_shape=jax.ShapeDtypeStruct((G, Cb, HW), x_nchw.dtype),
        grid_spec=pltpu.PrefetchScalarGridSpec(
            num_scalar_prefetch=0,
            grid=(G,),
            in_specs=[
                pl.BlockSpec((1, Cb, HW), lambda g: (g, 0, 0)),    # x
                pl.BlockSpec((2 * K, HW), lambda g: (0, 0)),       # masks
                pl.BlockSpec((K * Cb, K), lambda g: (0, 0)),       # dwk
                pl.BlockSpec((Cb, 1), lambda g: (0, 0)),           # s1
                pl.BlockSpec((Cb, 1), lambda g: (0, 0)),           # b1
                pl.BlockSpec((Cb, Cb), lambda g: (0, 0)),          # w1 (block-diag)
                pl.BlockSpec((Cb, 1), lambda g: (0, 0)),           # s2
                pl.BlockSpec((Cb, 1), lambda g: (0, 0)),           # b2
            ],
            out_specs=pl.BlockSpec((1, Cb, HW), lambda g: (g, 0, 0)),
        ),
        compiler_params=pltpu.CompilerParams(
            dimension_semantics=("parallel",),
            vmem_limit_bytes=vmem_limit),
    )(x_g, masks, dwk, s1c, b1c, w1_big, s2c, b2c)
    return out.reshape(B, C, H, W)


def nsb_reference(x_nchw, dwk_kkc, s1, b1, w1, s2, b2):
    """Pure-JAX reference (same folded-BN inference semantics)."""
    B, C, H, W = x_nchw.shape
    x = jnp.transpose(x_nchw, (0, 2, 3, 1))                  # NHWC
    rhs = dwk_kkc.reshape(K, K, 1, C)                        # HWIO, depthwise
    x_con = lax.conv_general_dilated(
        x, rhs, window_strides=(1, 1), padding=((PAD, PAD), (PAD, PAD)),
        feature_group_count=C,
        dimension_numbers=("NHWC", "HWIO", "NHWC"))
    x_con = x_con * s1.reshape(-1) + b1.reshape(-1)
    ap = lax.reduce_window(
        x_con, 0.0, lax.add, (1, 3, 3, 1), (1, 1, 1, 1),
        padding=((0, 0), (1, 1), (1, 1), (0, 0))) / 9.0
    diff = x_con - ap
    z = jnp.einsum("bhwc,dc->bhwd", diff, w1) * s2.reshape(-1) + b2.reshape(-1)
    gate = jax.nn.sigmoid(z)
    out = gate * x
    return jnp.transpose(out, (0, 3, 1, 2))


if __name__ == "__main__":
    B, C, H, W = 2, 4, 16, 16
    eps = 1e-5

    # ---- deterministic input ----
    x = jax.random.normal(jax.random.PRNGKey(0), (B, C, H, W), jnp.float32)

    # ---- deterministic parameters (synthetic, module-__init__ shapes) ----
    keys = jax.random.split(jax.random.PRNGKey(42), 12)
    # context: depthwise Conv2d(C, C, 15, padding=7, groups=C), weight (C,1,15,15)
    dwk_pt = jax.random.normal(keys[0], (C, 1, K, K), jnp.float32) * 0.05
    dw_bias = jax.random.normal(keys[1], (C,), jnp.float32) * 0.05
    # BatchNorm2d(C) #1
    g1 = jax.random.uniform(keys[2], (C,), minval=0.5, maxval=1.5)
    be1 = jax.random.normal(keys[3], (C,)) * 0.1
    rm1 = jax.random.normal(keys[4], (C,)) * 0.1
    rv1 = jax.random.uniform(keys[5], (C,), minval=0.5, maxval=1.5)
    # conv: Conv2d(C, C, 1), weight (C_out, C_in, 1, 1)
    w1_pt = jax.random.normal(keys[6], (C, C, 1, 1), jnp.float32) * 0.2
    pw_bias = jax.random.normal(keys[7], (C,), jnp.float32) * 0.05
    # BatchNorm2d(C) #2
    g2 = jax.random.uniform(keys[8], (C,), minval=0.5, maxval=1.5)
    be2 = jax.random.normal(keys[9], (C,)) * 0.1
    rm2 = jax.random.normal(keys[10], (C,)) * 0.1
    rv2 = jax.random.uniform(keys[11], (C,), minval=0.5, maxval=1.5)

    # ---- re-layout weights + fold conv-bias/BN (inference mode) ----
    dwk_kkc = jnp.transpose(dwk_pt[:, 0, :, :], (1, 2, 0))   # (K, K, C)
    w1 = w1_pt[:, :, 0, 0]                                   # (C_out, C_in)
    scale1 = g1 / jnp.sqrt(rv1 + eps)
    bias1 = be1 + (dw_bias - rm1) * scale1
    scale2 = g2 / jnp.sqrt(rv2 + eps)
    bias2 = be2 + (pw_bias - rm2) * scale2

    out = nsb_forward(x, dwk_kkc, scale1, bias1, w1, scale2, bias2)
    out = jax.block_until_ready(out)

    ref = nsb_reference(x, dwk_kkc, scale1, bias1, w1, scale2, bias2)
    assert out.shape == (B, C, H, W)
    assert jnp.allclose(out, ref, rtol=1e-4, atol=1e-4), (
        float(jnp.max(jnp.abs(out - ref))))

    print("KERNEL_OK")
</pallas_src>

<mosaic_0001>
module attributes {stable_mosaic.version = 11 : i64} {
  func.func @nsb_kernel(%arg0: i32, %arg1: memref<1x8x256xf32, #tpu.memory_space<vmem>>, %arg2: memref<30x256xf32, #tpu.memory_space<vmem>>, %arg3: memref<120x15xf32, #tpu.memory_space<vmem>>, %arg4: memref<8x1xf32, #tpu.memory_space<vmem>>, %arg5: memref<8x1xf32, #tpu.memory_space<vmem>>, %arg6: memref<8x8xf32, #tpu.memory_space<vmem>>, %arg7: memref<8x1xf32, #tpu.memory_space<vmem>>, %arg8: memref<8x1xf32, #tpu.memory_space<vmem>>, %arg9: memref<1x8x256xf32, #tpu.memory_space<vmem>>) attributes {dimension_semantics = [#tpu.dimension_semantics<parallel>], iteration_bounds = array<i64: 1>, scalar_prefetch = 0 : i64, scratch_operands = 0 : i64, tpu.core_type = #tpu.core_type<tc>, window_params = [{transform_indices = @transform_0, window_bounds = array<i64: 1, 8, 256>}, {pipeline_mode = #tpu.pipeline_mode<synchronous>, transform_indices = @transform_1, window_bounds = array<i64: 30, 256>}, {pipeline_mode = #tpu.pipeline_mode<synchronous>, transform_indices = @transform_2, window_bounds = array<i64: 120, 15>}, {pipeline_mode = #tpu.pipeline_mode<synchronous>, transform_indices = @transform_3, window_bounds = array<i64: 8, 1>}, {pipeline_mode = #tpu.pipeline_mode<synchronous>, transform_indices = @transform_4, window_bounds = array<i64: 8, 1>}, {pipeline_mode = #tpu.pipeline_mode<synchronous>, transform_indices = @transform_5, window_bounds = array<i64: 8, 8>}, {pipeline_mode = #tpu.pipeline_mode<synchronous>, transform_indices = @transform_6, window_bounds = array<i64: 8, 1>}, {pipeline_mode = #tpu.pipeline_mode<synchronous>, transform_indices = @transform_7, window_bounds = array<i64: 8, 1>}, {transform_indices = @transform_8, window_bounds = array<i64: 1, 8, 256>}]} {
    %c0 = arith.constant 0 : index
    %c0_0 = arith.constant 0 : index
    %c0_1 = arith.constant 0 : index
    %0 = vector.load %arg1[%c0, %c0_0, %c0_1] : memref<1x8x256xf32, #tpu.memory_space<vmem>>, vector<1x8x256xf32>
    %1 = vector.shape_cast %0 : vector<1x8x256xf32> to vector<8x256xf32>
    %c7_i32 = arith.constant 7 : i32
    %2 = tpu.dynamic_rotate %1 by %c7_i32 dim 1 : vector<8x256xf32>, i32 -> vector<8x256xf32>
    %c0_2 = arith.constant 0 : index
    %c0_3 = arith.constant 0 : index
    %3 = vector.load %arg2[%c0_2, %c0_3] : memref<30x256xf32, #tpu.memory_space<vmem>>, vector<1x256xf32>
    %4 = vector.broadcast %3 : vector<1x256xf32> to vector<8x256xf32>
    %5 = arith.mulf %2, %4 : vector<8x256xf32>
    %c6_i32 = arith.constant 6 : i32
    %6 = tpu.dynamic_rotate %1 by %c6_i32 dim 1 : vector<8x256xf32>, i32 -> vector<8x256xf32>
    %c1 = arith.constant 1 : index
    %c0_4 = arith.constant 0 : index
    %7 = vector.load %arg2[%c1, %c0_4] : memref<30x256xf32, #tpu.memory_space<vmem>>, vector<1x256xf32>
    %8 = vector.broadcast %7 : vector<1x256xf32> to vector<8x256xf32>
    %9 = arith.mulf %6, %8 : vector<8x256xf32>
    %c5_i32 = arith.constant 5 : i32
    %10 = tpu.dynamic_rotate %1 by %c5_i32 dim 1 : vector<8x256xf32>, i32 -> vector<8x256xf32>
    %c2 = arith.constant 2 : index
    %c0_5 = arith.constant 0 : index
    %11 = vector.load %arg2[%c2, %c0_5] : memref<30x256xf32, #tpu.memory_space<vmem>>, vector<1x256xf32>
    %12 = vector.broadcast %11 : vector<1x256xf32> to vector<8x256xf32>
    %13 = arith.mulf %10, %12 : vector<8x256xf32>
    %c4_i32 = arith.constant 4 : i32
    %14 = tpu.dynamic_rotate %1 by %c4_i32 dim 1 : vector<8x256xf32>, i32 -> vector<8x256xf32>
    %c3 = arith.constant 3 : index
    %c0_6 = arith.constant 0 : index
    %15 = vector.load %arg2[%c3, %c0_6] : memref<30x256xf32, #tpu.memory_space<vmem>>, vector<1x256xf32>
    %16 = vector.broadcast %15 : vector<1x256xf32> to vector<8x256xf32>
    %17 = arith.mulf %14, %16 : vector<8x256xf32>
    %c3_i32 = arith.constant 3 : i32
    %18 = tpu.dynamic_rotate %1 by %c3_i32 dim 1 : vector<8x256xf32>, i32 -> vector<8x256xf32>
    %c4 = arith.constant 4 : index
    %c0_7 = arith.constant 0 : index
    %19 = vector.load %arg2[%c4, %c0_7] : memref<30x256xf32, #tpu.memory_space<vmem>>, vector<1x256xf32>
    %20 = vector.broadcast %19 : vector<1x256xf32> to vector<8x256xf32>
    %21 = arith.mulf %18, %20 : vector<8x256xf32>
    %c2_i32 = arith.constant 2 : i32
    %22 = tpu.dynamic_rotate %1 by %c2_i32 dim 1 : vector<8x256xf32>, i32 -> vector<8x256xf32>
    %c5 = arith.constant 5 : index
    %c0_8 = arith.constant 0 : index
    %23 = vector.load %arg2[%c5, %c0_8] : memref<30x256xf32, #tpu.memory_space<vmem>>, vector<1x256xf32>
    %24 = vector.broadcast %23 : vector<1x256xf32> to vector<8x256xf32>
    %25 = arith.mulf %22, %24 : vector<8x256xf32>
    %c1_i32 = arith.constant 1 : i32
    %26 = tpu.dynamic_rotate %1 by %c1_i32 dim 1 : vector<8x256xf32>, i32 -> vector<8x256xf32>
    %c6 = arith.constant 6 : index
    %c0_9 = arith.constant 0 : index
    %27 = vector.load %arg2[%c6, %c0_9] : memref<30x256xf32, #tpu.memory_space<vmem>>, vector<1x256xf32>
    %28 = vector.broadcast %27 : vector<1x256xf32> to vector<8x256xf32>
    %29 = arith.mulf %26, %28 : vector<8x256xf32>
    %c7 = arith.constant 7 : index
    %c0_10 = arith.constant 0 : index
    %30 = vector.load %arg2[%c7, %c0_10] : memref<30x256xf32, #tpu.memory_space<vmem>>, vector<1x256xf32>
    %31 = vector.broadcast %30 : vector<1x256xf32> to vector<8x256xf32>
    %32 = arith.mulf %1, %31 : vector<8x256xf32>
    %c255_i32 = arith.constant 255 : i32
    %33 = tpu.dynamic_rotate %1 by %c255_i32 dim 1 : vector<8x256xf32>, i32 -> vector<8x256xf32>
    %c8 = arith.constant 8 : index
    %c0_11 = arith.constant 0 : index
    %34 = vector.load %arg2[%c8, %c0_11] : memref<30x256xf32, #tpu.memory_space<vmem>>, vector<1x256xf32>
    %35 = vector.broadcast %34 : vector<1x256xf32> to vector<8x256xf32>
    %36 = arith.mulf %33, %35 : vector<8x256xf32>
    %c254_i32 = arith.constant 254 : i32
    %37 = tpu.dynamic_rotate %1 by %c254_i32 dim 1 : vector<8x256xf32>, i32 -> vector<8x256xf32>
    %c9 = arith.constant 9 : index
    %c0_12 = arith.constant 0 : index
    %38 = vector.load %arg2[%c9, %c0_12] : memref<30x256xf32, #tpu.memory_space<vmem>>, vector<1x256xf32>
    %39 = vector.broadcast %38 : vector<1x256xf32> to vector<8x256xf32>
    %40 = arith.mulf %37, %39 : vector<8x256xf32>
    %c253_i32 = arith.constant 253 : i32
    %41 = tpu.dynamic_rotate %1 by %c253_i32 dim 1 : vector<8x256xf32>, i32 -> vector<8x256xf32>
    %c10 = arith.constant 10 : index
    %c0_13 = arith.constant 0 : index
    %42 = vector.load %arg2[%c10, %c0_13] : memref<30x256xf32, #tpu.memory_space<vmem>>, vector<1x256xf32>
    %43 = vector.broadcast %42 : vector<1x256xf32> to vector<8x256xf32>
    %44 = arith.mulf %41, %43 : vector<8x256xf32>
    %c252_i32 = arith.constant 252 : i32
    %45 = tpu.dynamic_rotate %1 by %c252_i32 dim 1 : vector<8x256xf32>, i32 -> vector<8x256xf32>
    %c11 = arith.constant 11 : index
    %c0_14 = arith.constant 0 : index
    %46 = vector.load %arg2[%c11, %c0_14] : memref<30x256xf32, #tpu.memory_space<vmem>>, vector<1x256xf32>
    %47 = vector.broadcast %46 : vector<1x256xf32> to vector<8x256xf32>
    %48 = arith.mulf %45, %47 : vector<8x256xf32>
    %c251_i32 = arith.constant 251 : i32
    %49 = tpu.dynamic_rotate %1 by %c251_i32 dim 1 : vector<8x256xf32>, i32 -> vector<8x256xf32>
    %c12 = arith.constant 12 : index
    %c0_15 = arith.constant 0 : index
    %50 = vector.load %arg2[%c12, %c0_15] : memref<30x256xf32, #tpu.memory_space<vmem>>, vector<1x256xf32>
    %51 = vector.broadcast %50 : vector<1x256xf32> to vector<8x256xf32>
    %52 = arith.mulf %49, %51 : vector<8x256xf32>
    %c250_i32 = arith.constant 250 : i32
    %53 = tpu.dynamic_rotate %1 by %c250_i32 dim 1 : vector<8x256xf32>, i32 -> vector<8x256xf32>
    %c13 = arith.constant 13 : index
    %c0_16 = arith.constant 0 : index
    %54 = vector.load %arg2[%c13, %c0_16] : memref<30x256xf32, #tpu.memory_space<vmem>>, vector<1x256xf32>
    %55 = vector.broadcast %54 : vector<1x256xf32> to vector<8x256xf32>
    %56 = arith.mulf %53, %55 : vector<8x256xf32>
    %c249_i32 = arith.constant 249 : i32
    %57 = tpu.dynamic_rotate %1 by %c249_i32 dim 1 : vector<8x256xf32>, i32 -> vector<8x256xf32>
    %c14 = arith.constant 14 : index
    %c0_17 = arith.constant 0 : index
    %58 = vector.load %arg2[%c14, %c0_17] : memref<30x256xf32, #tpu.memory_space<vmem>>, vector<1x256xf32>
    %59 = vector.broadcast %58 : vector<1x256xf32> to vector<8x256xf32>
    %60 = arith.mulf %57, %59 : vector<8x256xf32>
    %c0_18 = arith.constant 0 : index
    %c0_19 = arith.constant 0 : index
    %61 = vector.load %arg3[%c0_18, %c0_19] : memref<120x15xf32, #tpu.memory_space<vmem>>, vector<8x15xf32>
    %62 = vector.extract_strided_slice %61 {offsets = [0, 0], sizes = [8, 1], strides = [1, 1]} : vector<8x15xf32> to vector<8x1xf32>
    %63 = vector.broadcast %62 : vector<8x1xf32> to vector<8x256xf32>
    %64 = arith.mulf %63, %5 : vector<8x256xf32>
    %65 = vector.extract_strided_slice %61 {offsets = [0, 1], sizes = [8, 1], strides = [1, 1]} : vector<8x15xf32> to vector<8x1xf32>
    %66 = vector.broadcast %65 : vector<8x1xf32> to vector<8x256xf32>
    %67 = arith.mulf %66, %9 : vector<8x256xf32>
    %68 = arith.addf %64, %67 : vector<8x256xf32>
    %69 = vector.extract_strided_slice %61 {offsets = [0, 2], sizes = [8, 1], strides = [1, 1]} : vector<8x15xf32> to vector<8x1xf32>
    %70 = vector.broadcast %69 : vector<8x1xf32> to vector<8x256xf32>
    %71 = arith.mulf %70, %13 : vector<8x256xf32>
    %72 = arith.addf %68, %71 : vector<8x256xf32>
    %73 = vector.extract_strided_slice %61 {offsets = [0, 3], sizes = [8, 1], strides = [1, 1]} : vector<8x15xf32> to vector<8x1xf32>
    %74 = vector.broadcast %73 : vector<8x1xf32> to vector<8x256xf32>
    %75 = arith.mulf %74, %17 : vector<8x256xf32>
    %76 = arith.addf %72, %75 : vector<8x256xf32>
    %77 = vector.extract_strided_slice %61 {offsets = [0, 4], sizes = [8, 1], strides = [1, 1]} : vector<8x15xf32> to vector<8x1xf32>
    %78 = vector.broadcast %77 : vector<8x1xf32> to vector<8x256xf32>
    %79 = arith.mulf %78, %21 : vector<8x256xf32>
    %80 = arith.addf %76, %79 : vector<8x256xf32>
    %81 = vector.extract_strided_slice %61 {offsets = [0, 5], sizes = [8, 1], strides = [1, 1]} : vector<8x15xf32> to vector<8x1xf32>
    %82 = vector.broadcast %81 : vector<8x1xf32> to vector<8x256xf32>
    %83 = arith.mulf %82, %25 : vector<8x256xf32>
    %84 = arith.addf %80, %83 : vector<8x256xf32>
    %85 = vector.extract_strided_slice %61 {offsets = [0, 6], sizes = [8, 1], strides = [1, 1]} : vector<8x15xf32> to vector<8x1xf32>
    %86 = vector.broadcast %85 : vector<8x1xf32> to vector<8x256xf32>
    %87 = arith.mulf %86, %29 : vector<8x256xf32>
    %88 = arith.addf %84, %87 : vector<8x256xf32>
    %89 = vector.extract_strided_slice %61 {offsets = [0, 7], sizes = [8, 1], strides = [1, 1]} : vector<8x15xf32> to vector<8x1xf32>
    %90 = vector.broadcast %89 : vector<8x1xf32> to vector<8x256xf32>
    %91 = arith.mulf %90, %32 : vector<8x256xf32>
    %92 = arith.addf %88, %91 : vector<8x256xf32>
    %93 = vector.extract_strided_slice %61 {offsets = [0, 8], sizes = [8, 1], strides = [1, 1]} : vector<8x15xf32> to vector<8x1xf32>
    %94 = vector.broadcast %93 : vector<8x1xf32> to vector<8x256xf32>
    %95 = arith.mulf %94, %36 : vector<8x256xf32>
    %96 = arith.addf %92, %95 : vector<8x256xf32>
    %97 = vector.extract_strided_slice %61 {offsets = [0, 9], sizes = [8, 1], strides = [1, 1]} : vector<8x15xf32> to vector<8x1xf32>
    %98 = vector.broadcast %97 : vector<8x1xf32> to vector<8x256xf32>
    %99 = arith.mulf %98, %40 : vector<8x256xf32>
    %100 = arith.addf %96, %99 : vector<8x256xf32>
    %101 = vector.extract_strided_slice %61 {offsets = [0, 10], sizes = [8, 1], strides = [1, 1]} : vector<8x15xf32> to vector<8x1xf32>
    %102 = vector.broadcast %101 : vector<8x1xf32> to vector<8x256xf32>
    %103 = arith.mulf %102, %44 : vector<8x256xf32>
    %104 = arith.addf %100, %103 : vector<8x256xf32>
    %105 = vector.extract_strided_slice %61 {offsets = [0, 11], sizes = [8, 1], strides = [1, 1]} : vector<8x15xf32> to vector<8x1xf32>
    %106 = vector.broadcast %105 : vector<8x1xf32> to vector<8x256xf32>
    %107 = arith.mulf %106, %48 : vector<8x256xf32>
    %108 = arith.addf %104, %107 : vector<8x256xf32>
    %109 = vector.extract_strided_slice %61 {offsets = [0, 12], sizes = [8, 1], strides = [1, 1]} : vector<8x15xf32> to vector<8x1xf32>
    %110 = vector.broadcast %109 : vector<8x1xf32> to vector<8x256xf32>
    %111 = arith.mulf %110, %52 : vector<8x256xf32>
    %112 = arith.addf %108, %111 : vector<8x256xf32>
    %113 = vector.extract_strided_slice %61 {offsets = [0, 13], sizes = [8, 1], strides = [1, 1]} : vector<8x15xf32> to vector<8x1xf32>
    %114 = vector.broadcast %113 : vector<8x1xf32> to vector<8x256xf32>
    %115 = arith.mulf %114, %56 : vector<8x256xf32>
    %116 = arith.addf %112, %115 : vector<8x256xf32>
    %117 = vector.extract_strided_slice %61 {offsets = [0, 14], sizes = [8, 1], strides = [1, 1]} : vector<8x15xf32> to vector<8x1xf32>
    %118 = vector.broadcast %117 : vector<8x1xf32> to vector<8x256xf32>
    %119 = arith.mulf %118, %60 : vector<8x256xf32>
    %120 = arith.addf %116, %119 : vector<8x256xf32>
    %c112_i32 = arith.constant 112 : i32
    %121 = tpu.dynamic_rotate %120 by %c112_i32 dim 1 : vector<8x256xf32>, i32 -> vector<8x256xf32>
    %c15 = arith.constant 15 : index
    %c0_20 = arith.constant 0 : index
    %122 = vector.load %arg2[%c15, %c0_20] : memref<30x256xf32, #tpu.memory_space<vmem>>, vector<1x256xf32>
    %123 = vector.broadcast %122 : vector<1x256xf32> to vector<8x256xf32>
    %124 = arith.mulf %121, %123 : vector<8x256xf32>
    %c8_21 = arith.constant 8 : index
    %c0_22 = arith.constant 0 : index
    %125 = vector.load %arg3[%c8_21, %c0_22] : memref<120x15xf32, #tpu.memory_space<vmem>>, vector<8x15xf32>
    %126 = vector.extract_strided_slice %125 {offsets = [0, 0], sizes = [8, 1], strides = [1, 1]} : vector<8x15xf32> to vector<8x1xf32>
    %127 = vector.broadcast %126 : vector<8x1xf32> to vector<8x256xf32>
    %128 = arith.mulf %127, %5 : vector<8x256xf32>
    %129 = vector.extract_strided_slice %125 {offsets = [0, 1], sizes = [8, 1], strides = [1, 1]} : vector<8x15xf32> to vector<8x1xf32>
    %130 = vector.broadcast %129 : vector<8x1xf32> to vector<8x256xf32>
    %131 = arith.mulf %130, %9 : vector<8x256xf32>
    %132 = arith.addf %128, %131 : vector<8x256xf32>
    %133 = vector.extract_strided_slice %125 {offsets = [0, 2], sizes = [8, 1], strides = [1, 1]} : vector<8x15xf32> to vector<8x1xf32>
    %134 = vector.broadcast %133 : vector<8x1xf32> to vector<8x256xf32>
    %135 = arith.mulf %134, %13 : vector<8x256xf32>
    %136 = arith.addf %132, %135 : vector<8x256xf32>
    %137 = vector.extract_strided_slice %125 {offsets = [0, 3], sizes = [8, 1], strides = [1, 1]} : vector<8x15xf32> to vector<8x1xf32>
    %138 = vector.broadcast %137 : vector<8x1xf32> to vector<8x256xf32>
    %139 = arith.mulf %138, %17 : vector<8x256xf32>
    %140 = arith.addf %136, %139 : vector<8x256xf32>
    %141 = vector.extract_strided_slice %125 {offsets = [0, 4], sizes = [8, 1], strides = [1, 1]} : vector<8x15xf32> to vector<8x1xf32>
    %142 = vector.broadcast %141 : vector<8x1xf32> to vector<8x256xf32>
    %143 = arith.mulf %142, %21 : vector<8x256xf32>
    %144 = arith.addf %140, %143 : vector<8x256xf32>
    %145 = vector.extract_strided_slice %125 {offsets = [0, 5], sizes = [8, 1], strides = [1, 1]} : vector<8x15xf32> to vector<8x1xf32>
    %146 = vector.broadcast %145 : vector<8x1xf32> to vector<8x256xf32>
    %147 = arith.mulf %146, %25 : vector<8x256xf32>
    %148 = arith.addf %144, %147 : vector<8x256xf32>
    %149 = vector.extract_strided_slice %125 {offsets = [0, 6], sizes = [8, 1], strides = [1, 1]} : vector<8x15xf32> to vector<8x1xf32>
    %150 = vector.broadcast %149 : vector<8x1xf32> to vector<8x256xf32>
    %151 = arith.mulf %150, %29 : vector<8x256xf32>
    %152 = arith.addf %148, %151 : vector<8x256xf32>
    %153 = vector.extract_strided_slice %125 {offsets = [0, 7], sizes = [8, 1], strides = [1, 1]} : vector<8x15xf32> to vector<8x1xf32>
    %154 = vector.broadcast %153 : vector<8x1xf32> to vector<8x256xf32>
    %155 = arith.mulf %154, %32 : vector<8x256xf32>
    %156 = arith.addf %152, %155 : vector<8x256xf32>
    %157 = vector.extract_strided_slice %125 {offsets = [0, 8], sizes = [8, 1], strides = [1, 1]} : vector<8x15xf32> to vector<8x1xf32>
    %158 = vector.broadcast %157 : vector<8x1xf32> to vector<8x256xf32>
    %159 = arith.mulf %158, %36 : vector<8x256xf32>
    %160 = arith.addf %156, %159 : vector<8x256xf32>
    %161 = vector.extract_strided_slice %125 {offsets = [0, 9], sizes = [8, 1], strides = [1, 1]} : vector<8x15xf32> to vector<8x1xf32>
    %162 = vector.broadcast %161 : vector<8x1xf32> to vector<8x256xf32>
    %163 = arith.mulf %162, %40 : vector<8x256xf32>
    %164 = arith.addf %160, %163 : vector<8x256xf32>
    %165 = vector.extract_strided_slice %125 {offsets = [0, 10], sizes = [8, 1], strides = [1, 1]} : vector<8x15xf32> to vector<8x1xf32>
    %166 = vector.broadcast %165 : vector<8x1xf32> to vector<8x256xf32>
    %167 = arith.mulf %166, %44 : vector<8x256xf32>
    %168 = arith.addf %164, %167 : vector<8x256xf32>
    %169 = vector.extract_strided_slice %125 {offsets = [0, 11], sizes = [8, 1], strides = [1, 1]} : vector<8x15xf32> to vector<8x1xf32>
    %170 = vector.broadcast %169 : vector<8x1xf32> to vector<8x256xf32>
    %171 = arith.mulf %170, %48 : vector<8x256xf32>
    %172 = arith.addf %168, %171 : vector<8x256xf32>
    %173 = vector.extract_strided_slice %125 {offsets = [0, 12], sizes = [8, 1], strides = [1, 1]} : vector<8x15xf32> to vector<8x1xf32>
    %174 = vector.broadcast %173 : vector<8x1xf32> to vector<8x256xf32>
    %175 = arith.mulf %174, %52 : vector<8x256xf32>
    %176 = arith.addf %172, %175 : vector<8x256xf32>
    %177 = vector.extract_strided_slice %125 {offsets = [0, 13], sizes = [8, 1], strides = [1, 1]} : vector<8x15xf32> to vector<8x1xf32>
    %178 = vector.broadcast %177 : vector<8x1xf32> to vector<8x256xf32>
    %179 = arith.mulf %178, %56 : vector<8x256xf32>
    %180 = arith.addf %176, %179 : vector<8x256xf32>
    %181 = vector.extract_strided_slice %125 {offsets = [0, 14], sizes = [8, 1], strides = [1, 1]} : vector<8x15xf32> to vector<8x1xf32>
    %182 = vector.broadcast %181 : vector<8x1xf32> to vector<8x256xf32>
    %183 = arith.mulf %182, %60 : vector<8x256xf32>
    %184 = arith.addf %180, %183 : vector<8x256xf32>
    %c96_i32 = arith.constant 96 : i32
    %185 = tpu.dynamic_rotate %184 by %c96_i32 dim 1 : vector<8x256xf32>, i32 -> vector<8x256xf32>
    %c16 = arith.constant 16 : index
    %c0_23 = arith.constant 0 : index
    %186 = vector.load %arg2[%c16, %c0_23] : memref<30x256xf32, #tpu.memory_space<vmem>>, vector<1x256xf32>
    %187 = vector.broadcast %186 : vector<1x256xf32> to vector<8x256xf32>
    %188 = arith.mulf %185, %187 : vector<8x256xf32>
    %189 = arith.addf %124, %188 : vector<8x256xf32>
    %c16_24 = arith.constant 16 : index
    %c0_25 = arith.constant 0 : index
    %190 = vector.load %arg3[%c16_24, %c0_25] : memref<120x15xf32, #tpu.memory_space<vmem>>, vector<8x15xf32>
    %191 = vector.extract_strided_slice %190 {offsets = [0, 0], sizes = [8, 1], strides = [1, 1]} : vector<8x15xf32> to vector<8x1xf32>
    %192 = vector.broadcast %191 : vector<8x1xf32> to vector<8x256xf32>
    %193 = arith.mulf %192, %5 : vector<8x256xf32>
    %194 = vector.extract_strided_slice %190 {offsets = [0, 1], sizes = [8, 1], strides = [1, 1]} : vector<8x15xf32> to vector<8x1xf32>
    %195 = vector.broadcast %194 : vector<8x1xf32> to vector<8x256xf32>
    %196 = arith.mulf %195, %9 : vector<8x256xf32>
    %197 = arith.addf %193, %196 : vector<8x256xf32>
    %198 = vector.extract_strided_slice %190 {offsets = [0, 2], sizes = [8, 1], strides = [1, 1]} : vector<8x15xf32> to vector<8x1xf32>
    %199 = vector.broadcast %198 : vector<8x1xf32> to vector<8x256xf32>
    %200 = arith.mulf %199, %13 : vector<8x256xf32>
    %201 = arith.addf %197, %200 : vector<8x256xf32>
    %202 = vector.extract_strided_slice %190 {offsets = [0, 3], sizes = [8, 1], strides = [1, 1]} : vector<8x15xf32> to vector<8x1xf32>
    %203 = vector.broadcast %202 : vector<8x1xf32> to vector<8x256xf32>
    %204 = arith.mulf %203, %17 : vector<8x256xf32>
    %205 = arith.addf %201, %204 : vector<8x256xf32>
    %206 = vector.extract_strided_slice %190 {offsets = [0, 4], sizes = [8, 1], strides = [1, 1]} : vector<8x15xf32> to vector<8x1xf32>
    %207 = vector.broadcast %206 : vector<8x1xf32> to vector<8x256xf32>
    %208 = arith.mulf %207, %21 : vector<8x256xf32>
    %209 = arith.addf %205, %208 : vector<8x256xf32>
    %210 = vector.extract_strided_slice %190 {offsets = [0, 5], sizes = [8, 1], strides = [1, 1]} : vector<8x15xf32> to vector<8x1xf32>
    %211 = vector.broadcast %210 : vector<8x1xf32> to vector<8x256xf32>
    %212 = arith.mulf %211, %25 : vector<8x256xf32>
    %213 = arith.addf %209, %212 : vector<8x256xf32>
    %214 = vector.extract_strided_slice %190 {offsets = [0, 6], sizes = [8, 1], strides = [1, 1]} : vector<8x15xf32> to vector<8x1xf32>
    %215 = vector.broadcast %214 : vector<8x1xf32> to vector<8x256xf32>
    %216 = arith.mulf %215, %29 : vector<8x256xf32>
    %217 = arith.addf %213, %216 : vector<8x256xf32>
    %218 = vector.extract_strided_slice %190 {offsets = [0, 7], sizes = [8, 1], strides = [1, 1]} : vector<8x15xf32> to vector<8x1xf32>
    %219 = vector.broadcast %218 : vector<8x1xf32> to vector<8x256xf32>
    %220 = arith.mulf %219, %32 : vector<8x256xf32>
    %221 = arith.addf %217, %220 : vector<8x256xf32>
    %222 = vector.extract_strided_slice %190 {offsets = [0, 8], sizes = [8, 1], strides = [1, 1]} : vector<8x15xf32> to vector<8x1xf32>
    %223 = vector.broadcast %222 : vector<8x1xf32> to vector<8x256xf32>
    %224 = arith.mulf %223, %36 : vector<8x256xf32>
    %225 = arith.addf %221, %224 : vector<8x256xf32>
    %226 = vector.extract_strided_slice %190 {offsets = [0, 9], sizes = [8, 1], strides = [1, 1]} : vector<8x15xf32> to vector<8x1xf32>
    %227 = vector.broadcast %226 : vector<8x1xf32> to vector<8x256xf32>
    %228 = arith.mulf %227, %40 : vector<8x256xf32>
    %229 = arith.addf %225, %228 : vector<8x256xf32>
    %230 = vector.extract_strided_slice %190 {offsets = [0, 10], sizes = [8, 1], strides = [1, 1]} : vector<8x15xf32> to vector<8x1xf32>
    %231 = vector.broadcast %230 : vector<8x1xf32> to vector<8x256xf32>
    %232 = arith.mulf %231, %44 : vector<8x256xf32>
    %233 = arith.addf %229, %232 : vector<8x256xf32>
    %234 = vector.extract_strided_slice %190 {offsets = [0, 11], sizes = [8, 1], strides = [1, 1]} : vector<8x15xf32> to vector<8x1xf32>
    %235 = vector.broadcast %234 : vector<8x1xf32> to vector<8x256xf32>
    %236 = arith.mulf %235, %48 : vector<8x256xf32>
    %237 = arith.addf %233, %236 : vector<8x256xf32>
    %238 = vector.extract_strided_slice %190 {offsets = [0, 12], sizes = [8, 1], strides = [1, 1]} : vector<8x15xf32> to vector<8x1xf32>
    %239 = vector.broadcast %238 : vector<8x1xf32> to vector<8x256xf32>
    %240 = arith.mulf %239, %52 : vector<8x256xf32>
    %241 = arith.addf %237, %240 : vector<8x256xf32>
    %242 = vector.extract_strided_slice %190 {offsets = [0, 13], sizes = [8, 1], strides = [1, 1]} : vector<8x15xf32> to vector<8x1xf32>
    %243 = vector.broadcast %242 : vector<8x1xf32> to vector<8x256xf32>
    %244 = arith.mulf %243, %56 : vector<8x256xf32>
    %245 = arith.addf %241, %244 : vector<8x256xf32>
    %246 = vector.extract_strided_slice %190 {offsets = [0, 14], sizes = [8, 1], strides = [1, 1]} : vector<8x15xf32> to vector<8x1xf32>
    %247 = vector.broadcast %246 : vector<8x1xf32> to vector<8x256xf32>
    %248 = arith.mulf %247, %60 : vector<8x256xf32>
    %249 = arith.addf %245, %248 : vector<8x256xf32>
    %c80_i32 = arith.constant 80 : i32
    %250 = tpu.dynamic_rotate %249 by %c80_i32 dim 1 : vector<8x256xf32>, i32 -> vector<8x256xf32>
    %c17 = arith.constant 17 : index
    %c0_26 = arith.constant 0 : index
    %251 = vector.load %arg2[%c17, %c0_26] : memref<30x256xf32, #tpu.memory_space<vmem>>, vector<1x256xf32>
    %252 = vector.broadcast %251 : vector<1x256xf32> to vector<8x256xf32>
    %253 = arith.mulf %250, %252 : vector<8x256xf32>
    %254 = arith.addf %189, %253 : vector<8x256xf32>
    %c24 = arith.constant 24 : index
    %c0_27 = arith.constant 0 : index
    %255 = vector.load %arg3[%c24, %c0_27] : memref<120x15xf32, #tpu.memory_space<vmem>>, vector<8x15xf32>
    %256 = vector.extract_strided_slice %255 {offsets = [0, 0], sizes = [8, 1], strides = [1, 1]} : vector<8x15xf32> to vector<8x1xf32>
    %257 = vector.broadcast %256 : vector<8x1xf32> to vector<8x256xf32>
    %258 = arith.mulf %257, %5 : vector<8x256xf32>
    %259 = vector.extract_strided_slice %255 {offsets = [0, 1], sizes = [8, 1], strides = [1, 1]} : vector<8x15xf32> to vector<8x1xf32>
    %260 = vector.broadcast %259 : vector<8x1xf32> to vector<8x256xf32>
    %261 = arith.mulf %260, %9 : vector<8x256xf32>
    %262 = arith.addf %258, %261 : vector<8x256xf32>
    %263 = vector.extract_strided_slice %255 {offsets = [0, 2], sizes = [8, 1], strides = [1, 1]} : vector<8x15xf32> to vector<8x1xf32>
    %264 = vector.broadcast %263 : vector<8x1xf32> to vector<8x256xf32>
    %265 = arith.mulf %264, %13 : vector<8x256xf32>
    %266 = arith.addf %262, %265 : vector<8x256xf32>
    %267 = vector.extract_strided_slice %255 {offsets = [0, 3], sizes = [8, 1], strides = [1, 1]} : vector<8x15xf32> to vector<8x1xf32>
    %268 = vector.broadcast %267 : vector<8x1xf32> to vector<8x256xf32>
    %269 = arith.mulf %268, %17 : vector<8x256xf32>
    %270 = arith.addf %266, %269 : vector<8x256xf32>
    %271 = vector.extract_strided_slice %255 {offsets = [0, 4], sizes = [8, 1], strides = [1, 1]} : vector<8x15xf32> to vector<8x1xf32>
    %272 = vector.broadcast %271 : vector<8x1xf32> to vector<8x256xf32>
    %273 = arith.mulf %272, %21 : vector<8x256xf32>
    %274 = arith.addf %270, %273 : vector<8x256xf32>
    %275 = vector.extract_strided_slice %255 {offsets = [0, 5], sizes = [8, 1], strides = [1, 1]} : vector<8x15xf32> to vector<8x1xf32>
    %276 = vector.broadcast %275 : vector<8x1xf32> to vector<8x256xf32>
    %277 = arith.mulf %276, %25 : vector<8x256xf32>
    %278 = arith.addf %274, %277 : vector<8x256xf32>
    %279 = vector.extract_strided_slice %255 {offsets = [0, 6], sizes = [8, 1], strides = [1, 1]} : vector<8x15xf32> to vector<8x1xf32>
    %280 = vector.broadcast %279 : vector<8x1xf32> to vector<8x256xf32>
    %281 = arith.mulf %280, %29 : vector<8x256xf32>
    %282 = arith.addf %278, %281 : vector<8x256xf32>
    %283 = vector.extract_strided_slice %255 {offsets = [0, 7], sizes = [8, 1], strides = [1, 1]} : vector<8x15xf32> to vector<8x1xf32>
    %284 = vector.broadcast %283 : vector<8x1xf32> to vector<8x256xf32>
    %285 = arith.mulf %284, %32 : vector<8x256xf32>
    %286 = arith.addf %282, %285 : vector<8x256xf32>
    %287 = vector.extract_strided_slice %255 {offsets = [0, 8], sizes = [8, 1], strides = [1, 1]} : vector<8x15xf32> to vector<8x1xf32>
    %288 = vector.broadcast %287 : vector<8x1xf32> to vector<8x256xf32>
    %289 = arith.mulf %288, %36 : vector<8x256xf32>
    %290 = arith.addf %286, %289 : vector<8x256xf32>
    %291 = vector.extract_strided_slice %255 {offsets = [0, 9], sizes = [8, 1], strides = [1, 1]} : vector<8x15xf32> to vector<8x1xf32>
    %292 = vector.broadcast %291 : vector<8x1xf32> to vector<8x256xf32>
    %293 = arith.mulf %292, %40 : vector<8x256xf32>
    %294 = arith.addf %290, %293 : vector<8x256xf32>
    %295 = vector.extract_strided_slice %255 {offsets = [0, 10], sizes = [8, 1], strides = [1, 1]} : vector<8x15xf32> to vector<8x1xf32>
    %296 = vector.broadcast %295 : vector<8x1xf32> to vector<8x256xf32>
    %297 = arith.mulf %296, %44 : vector<8x256xf32>
    %298 = arith.addf %294, %297 : vector<8x256xf32>
    %299 = vector.extract_strided_slice %255 {offsets = [0, 11], sizes = [8, 1], strides = [1, 1]} : vector<8x15xf32> to vector<8x1xf32>
    %300 = vector.broadcast %299 : vector<8x1xf32> to vector<8x256xf32>
    %301 = arith.mulf %300, %48 : vector<8x256xf32>
    %302 = arith.addf %298, %301 : vector<8x256xf32>
    %303 = vector.extract_strided_slice %255 {offsets = [0, 12], sizes = [8, 1], strides = [1, 1]} : vector<8x15xf32> to vector<8x1xf32>
    %304 = vector.broadcast %303 : vector<8x1xf32> to vector<8x256xf32>
    %305 = arith.mulf %304, %52 : vector<8x256xf32>
    %306 = arith.addf %302, %305 : vector<8x256xf32>
    %307 = vector.extract_strided_slice %255 {offsets = [0, 13], sizes = [8, 1], strides = [1, 1]} : vector<8x15xf32> to vector<8x1xf32>
    %308 = vector.broadcast %307 : vector<8x1xf32> to vector<8x256xf32>
    %309 = arith.mulf %308, %56 : vector<8x256xf32>
    %310 = arith.addf %306, %309 : vector<8x256xf32>
    %311 = vector.extract_strided_slice %255 {offsets = [0, 14], sizes = [8, 1], strides = [1, 1]} : vector<8x15xf32> to vector<8x1xf32>
    %312 = vector.broadcast %311 : vector<8x1xf32> to vector<8x256xf32>
    %313 = arith.mulf %312, %60 : vector<8x256xf32>
    %314 = arith.addf %310, %313 : vector<8x256xf32>
    %c64_i32 = arith.constant 64 : i32
    %315 = tpu.dynamic_rotate %314 by %c64_i32 dim 1 : vector<8x256xf32>, i32 -> vector<8x256xf32>
    %c18 = arith.constant 18 : index
    %c0_28 = arith.constant 0 : index
    %316 = vector.load %arg2[%c18, %c0_28] : memref<30x256xf32, #tpu.memory_space<vmem>>, vector<1x256xf32>
    %317 = vector.broadcast %316 : vector<1x256xf32> to vector<8x256xf32>
    %318 = arith.mulf %315, %317 : vector<8x256xf32>
    %319 = arith.addf %254, %318 : vector<8x256xf32>
    %c32 = arith.constant 32 : index
    %c0_29 = arith.constant 0 : index
    %320 = vector.load %arg3[%c32, %c0_29] : memref<120x15xf32, #tpu.memory_space<vmem>>, vector<8x15xf32>
    %321 = vector.extract_strided_slice %320 {offsets = [0, 0], sizes = [8, 1], strides = [1, 1]} : vector<8x15xf32> to vector<8x1xf32>
    %322 = vector.broadcast %321 : vector<8x1xf32> to vector<8x256xf32>
    %323 = arith.mulf %322, %5 : vector<8x256xf32>
    %324 = vector.extract_strided_slice %320 {offsets = [0, 1], sizes = [8, 1], strides = [1, 1]} : vector<8x15xf32> to vector<8x1xf32>
    %325 = vector.broadcast %324 : vector<8x1xf32> to vector<8x256xf32>
    %326 = arith.mulf %325, %9 : vector<8x256xf32>
    %327 = arith.addf %323, %326 : vector<8x256xf32>
    %328 = vector.extract_strided_slice %320 {offsets = [0, 2], sizes = [8, 1], strides = [1, 1]} : vector<8x15xf32> to vector<8x1xf32>
    %329 = vector.broadcast %328 : vector<8x1xf32> to vector<8x256xf32>
    %330 = arith.mulf %329, %13 : vector<8x256xf32>
    %331 = arith.addf %327, %330 : vector<8x256xf32>
    %332 = vector.extract_strided_slice %320 {offsets = [0, 3], sizes = [8, 1], strides = [1, 1]} : vector<8x15xf32> to vector<8x1xf32>
    %333 = vector.broadcast %332 : vector<8x1xf32> to vector<8x256xf32>
    %334 = arith.mulf %333, %17 : vector<8x256xf32>
    %335 = arith.addf %331, %334 : vector<8x256xf32>
    %336 = vector.extract_strided_slice %320 {offsets = [0, 4], sizes = [8, 1], strides = [1, 1]} : vector<8x15xf32> to vector<8x1xf32>
    %337 = vector.broadcast %336 : vector<8x1xf32> to vector<8x256xf32>
    %338 = arith.mulf %337, %21 : vector<8x256xf32>
    %339 = arith.addf %335, %338 : vector<8x256xf32>
    %340 = vector.extract_strided_slice %320 {offsets = [0, 5], sizes = [8, 1], strides = [1, 1]} : vector<8x15xf32> to vector<8x1xf32>
    %341 = vector.broadcast %340 : vector<8x1xf32> to vector<8x256xf32>
    %342 = arith.mulf %341, %25 : vector<8x256xf32>
    %343 = arith.addf %339, %342 : vector<8x256xf32>
    %344 = vector.extract_strided_slice %320 {offsets = [0, 6], sizes = [8, 1], strides = [1, 1]} : vector<8x15xf32> to vector<8x1xf32>
    %345 = vector.broadcast %344 : vector<8x1xf32> to vector<8x256xf32>
    %346 = arith.mulf %345, %29 : vector<8x256xf32>
    %347 = arith.addf %343, %346 : vector<8x256xf32>
    %348 = vector.extract_strided_slice %320 {offsets = [0, 7], sizes = [8, 1], strides = [1, 1]} : vector<8x15xf32> to vector<8x1xf32>
    %349 = vector.broadcast %348 : vector<8x1xf32> to vector<8x256xf32>
    %350 = arith.mulf %349, %32 : vector<8x256xf32>
    %351 = arith.addf %347, %350 : vector<8x256xf32>
    %352 = vector.extract_strided_slice %320 {offsets = [0, 8], sizes = [8, 1], strides = [1, 1]} : vector<8x15xf32> to vector<8x1xf32>
    %353 = vector.broadcast %352 : vector<8x1xf32> to vector<8x256xf32>
    %354 = arith.mulf %353, %36 : vector<8x256xf32>
    %355 = arith.addf %351, %354 : vector<8x256xf32>
    %356 = vector.extract_strided_slice %320 {offsets = [0, 9], sizes = [8, 1], strides = [1, 1]} : vector<8x15xf32> to vector<8x1xf32>
    %357 = vector.broadcast %356 : vector<8x1xf32> to vector<8x256xf32>
    %358 = arith.mulf %357, %40 : vector<8x256xf32>
    %359 = arith.addf %355, %358 : vector<8x256xf32>
    %360 = vector.extract_strided_slice %320 {offsets = [0, 10], sizes = [8, 1], strides = [1, 1]} : vector<8x15xf32> to vector<8x1xf32>
    %361 = vector.broadcast %360 : vector<8x1xf32> to vector<8x256xf32>
    %362 = arith.mulf %361, %44 : vector<8x256xf32>
    %363 = arith.addf %359, %362 : vector<8x256xf32>
    %364 = vector.extract_strided_slice %320 {offsets = [0, 11], sizes = [8, 1], strides = [1, 1]} : vector<8x15xf32> to vector<8x1xf32>
    %365 = vector.broadcast %364 : vector<8x1xf32> to vector<8x256xf32>
    %366 = arith.mulf %365, %48 : vector<8x256xf32>
    %367 = arith.addf %363, %366 : vector<8x256xf32>
    %368 = vector.extract_strided_slice %320 {offsets = [0, 12], sizes = [8, 1], strides = [1, 1]} : vector<8x15xf32> to vector<8x1xf32>
    %369 = vector.broadcast %368 : vector<8x1xf32> to vector<8x256xf32>
    %370 = arith.mulf %369, %52 : vector<8x256xf32>
    %371 = arith.addf %367, %370 : vector<8x256xf32>
    %372 = vector.extract_strided_slice %320 {offsets = [0, 13], sizes = [8, 1], strides = [1, 1]} : vector<8x15xf32> to vector<8x1xf32>
    %373 = vector.broadcast %372 : vector<8x1xf32> to vector<8x256xf32>
    %374 = arith.mulf %373, %56 : vector<8x256xf32>
    %375 = arith.addf %371, %374 : vector<8x256xf32>
    %376 = vector.extract_strided_slice %320 {offsets = [0, 14], sizes = [8, 1], strides = [1, 1]} : vector<8x15xf32> to vector<8x1xf32>
    %377 = vector.broadcast %376 : vector<8x1xf32> to vector<8x256xf32>
    %378 = arith.mulf %377, %60 : vector<8x256xf32>
    %379 = arith.addf %375, %378 : vector<8x256xf32>
    %c48_i32 = arith.constant 48 : i32
    %380 = tpu.dynamic_rotate %379 by %c48_i32 dim 1 : vector<8x256xf32>, i32 -> vector<8x256xf32>
    %c19 = arith.constant 19 : index
    %c0_30 = arith.constant 0 : index
    %381 = vector.load %arg2[%c19, %c0_30] : memref<30x256xf32, #tpu.memory_space<vmem>>, vector<1x256xf32>
    %382 = vector.broadcast %381 : vector<1x256xf32> to vector<8x256xf32>
    %383 = arith.mulf %380, %382 : vector<8x256xf32>
    %384 = arith.addf %319, %383 : vector<8x256xf32>
    %c40 = arith.constant 40 : index
    %c0_31 = arith.constant 0 : index
    %385 = vector.load %arg3[%c40, %c0_31] : memref<120x15xf32, #tpu.memory_space<vmem>>, vector<8x15xf32>
    %386 = vector.extract_strided_slice %385 {offsets = [0, 0], sizes = [8, 1], strides = [1, 1]} : vector<8x15xf32> to vector<8x1xf32>
    %387 = vector.broadcast %386 : vector<8x1xf32> to vector<8x256xf32>
    %388 = arith.mulf %387, %5 : vector<8x256xf32>
    %389 = vector.extract_strided_slice %385 {offsets = [0, 1], sizes = [8, 1], strides = [1, 1]} : vector<8x15xf32> to vector<8x1xf32>
    %390 = vector.broadcast %389 : vector<8x1xf32> to vector<8x256xf32>
    %391 = arith.mulf %390, %9 : vector<8x256xf32>
    %392 = arith.addf %388, %391 : vector<8x256xf32>
    %393 = vector.extract_strided_slice %385 {offsets = [0, 2], sizes = [8, 1], strides = [1, 1]} : vector<8x15xf32> to vector<8x1xf32>
    %394 = vector.broadcast %393 : vector<8x1xf32> to vector<8x256xf32>
    %395 = arith.mulf %394, %13 : vector<8x256xf32>
    %396 = arith.addf %392, %395 : vector<8x256xf32>
    %397 = vector.extract_strided_slice %385 {offsets = [0, 3], sizes = [8, 1], strides = [1, 1]} : vector<8x15xf32> to vector<8x1xf32>
    %398 = vector.broadcast %397 : vector<8x1xf32> to vector<8x256xf32>
    %399 = arith.mulf %398, %17 : vector<8x256xf32>
    %400 = arith.addf %396, %399 : vector<8x256xf32>
    %401 = vector.extract_strided_slice %385 {offsets = [0, 4], sizes = [8, 1], strides = [1, 1]} : vector<8x15xf32> to vector<8x1xf32>
    %402 = vector.broadcast %401 : vector<8x1xf32> to vector<8x256xf32>
    %403 = arith.mulf %402, %21 : vector<8x256xf32>
    %404 = arith.addf %400, %403 : vector<8x256xf32>
    %405 = vector.extract_strided_slice %385 {offsets = [0, 5], sizes = [8, 1], strides = [1, 1]} : vector<8x15xf32> to vector<8x1xf32>
    %406 = vector.broadcast %405 : vector<8x1xf32> to vector<8x256xf32>
    %407 = arith.mulf %406, %25 : vector<8x256xf32>
    %408 = arith.addf %404, %407 : vector<8x256xf32>
    %409 = vector.extract_strided_slice %385 {offsets = [0, 6], sizes = [8, 1], strides = [1, 1]} : vector<8x15xf32> to vector<8x1xf32>
    %410 = vector.broadcast %409 : vector<8x1xf32> to vector<8x256xf32>
    %411 = arith.mulf %410, %29 : vector<8x256xf32>
    %412 = arith.addf %408, %411 : vector<8x256xf32>
    %413 = vector.extract_strided_slice %385 {offsets = [0, 7], sizes = [8, 1], strides = [1, 1]} : vector<8x15xf32> to vector<8x1xf32>
    %414 = vector.broadcast %413 : vector<8x1xf32> to vector<8x256xf32>
    %415 = arith.mulf %414, %32 : vector<8x256xf32>
    %416 = arith.addf %412, %415 : vector<8x256xf32>
    %417 = vector.extract_strided_slice %385 {offsets = [0, 8], sizes = [8, 1], strides = [1, 1]} : vector<8x15xf32> to vector<8x1xf32>
    %418 = vector.broadcast %417 : vector<8x1xf32> to vector<8x256xf32>
    %419 = arith.mulf %418, %36 : vector<8x256xf32>
    %420 = arith.addf %416, %419 : vector<8x256xf32>
    %421 = vector.extract_strided_slice %385 {offsets = [0, 9], sizes = [8, 1], strides = [1, 1]} : vector<8x15xf32> to vector<8x1xf32>
    %422 = vector.broadcast %421 : vector<8x1xf32> to vector<8x256xf32>
    %423 = arith.mulf %422, %40 : vector<8x256xf32>
    %424 = arith.addf %420, %423 : vector<8x256xf32>
    %425 = vector.extract_strided_slice %385 {offsets = [0, 10], sizes = [8, 1], strides = [1, 1]} : vector<8x15xf32> to vector<8x1xf32>
    %426 = vector.broadcast %425 : vector<8x1xf32> to vector<8x256xf32>
    %427 = arith.mulf %426, %44 : vector<8x256xf32>
    %428 = arith.addf %424, %427 : vector<8x256xf32>
    %429 = vector.extract_strided_slice %385 {offsets = [0, 11], sizes = [8, 1], strides = [1, 1]} : vector<8x15xf32> to vector<8x1xf32>
    %430 = vector.broadcast %429 : vector<8x1xf32> to vector<8x256xf32>
    %431 = arith.mulf %430, %48 : vector<8x256xf32>
    %432 = arith.addf %428, %431 : vector<8x256xf32>
    %433 = vector.extract_strided_slice %385 {offsets = [0, 12], sizes = [8, 1], strides = [1, 1]} : vector<8x15xf32> to vector<8x1xf32>
    %434 = vector.broadcast %433 : vector<8x1xf32> to vector<8x256xf32>
    %435 = arith.mulf %434, %52 : vector<8x256xf32>
    %436 = arith.addf %432, %435 : vector<8x256xf32>
    %437 = vector.extract_strided_slice %385 {offsets = [0, 13], sizes = [8, 1], strides = [1, 1]} : vector<8x15xf32> to vector<8x1xf32>
    %438 = vector.broadcast %437 : vector<8x1xf32> to vector<8x256xf32>
    %439 = arith.mulf %438, %56 : vector<8x256xf32>
    %440 = arith.addf %436, %439 : vector<8x256xf32>
    %441 = vector.extract_strided_slice %385 {offsets = [0, 14], sizes = [8, 1], strides = [1, 1]} : vector<8x15xf32> to vector<8x1xf32>
    %442 = vector.broadcast %441 : vector<8x1xf32> to vector<8x256xf32>
    %443 = arith.mulf %442, %60 : vector<8x256xf32>
    %444 = arith.addf %440, %443 : vector<8x256xf32>
    %c32_i32 = arith.constant 32 : i32
    %445 = tpu.dynamic_rotate %444 by %c32_i32 dim 1 : vector<8x256xf32>, i32 -> vector<8x256xf32>
    %c20 = arith.constant 20 : index
    %c0_32 = arith.constant 0 : index
    %446 = vector.load %arg2[%c20, %c0_32] : memref<30x256xf32, #tpu.memory_space<vmem>>, vector<1x256xf32>
    %447 = vector.broadcast %446 : vector<1x256xf32> to vector<8x256xf32>
    %448 = arith.mulf %445, %447 : vector<8x256xf32>
    %449 = arith.addf %384, %448 : vector<8x256xf32>
    %c48 = arith.constant 48 : index
    %c0_33 = arith.constant 0 : index
    %450 = vector.load %arg3[%c48, %c0_33] : memref<120x15xf32, #tpu.memory_space<vmem>>, vector<8x15xf32>
    %451 = vector.extract_strided_slice %450 {offsets = [0, 0], sizes = [8, 1], strides = [1, 1]} : vector<8x15xf32> to vector<8x1xf32>
    %452 = vector.broadcast %451 : vector<8x1xf32> to vector<8x256xf32>
    %453 = arith.mulf %452, %5 : vector<8x256xf32>
    %454 = vector.extract_strided_slice %450 {offsets = [0, 1], sizes = [8, 1], strides = [1, 1]} : vector<8x15xf32> to vector<8x1xf32>
    %455 = vector.broadcast %454 : vector<8x1xf32> to vector<8x256xf32>
    %456 = arith.mulf %455, %9 : vector<8x256xf32>
    %457 = arith.addf %453, %456 : vector<8x256xf32>
    %458 = vector.extract_strided_slice %450 {offsets = [0, 2], sizes = [8, 1], strides = [1, 1]} : vector<8x15xf32> to vector<8x1xf32>
    %459 = vector.broadcast %458 : vector<8x1xf32> to vector<8x256xf32>
    %460 = arith.mulf %459, %13 : vector<8x256xf32>
    %461 = arith.addf %457, %460 : vector<8x256xf32>
    %462 = vector.extract_strided_slice %450 {offsets = [0, 3], sizes = [8, 1], strides = [1, 1]} : vector<8x15xf32> to vector<8x1xf32>
    %463 = vector.broadcast %462 : vector<8x1xf32> to vector<8x256xf32>
    %464 = arith.mulf %463, %17 : vector<8x256xf32>
    %465 = arith.addf %461, %464 : vector<8x256xf32>
    %466 = vector.extract_strided_slice %450 {offsets = [0, 4], sizes = [8, 1], strides = [1, 1]} : vector<8x15xf32> to vector<8x1xf32>
    %467 = vector.broadcast %466 : vector<8x1xf32> to vector<8x256xf32>
    %468 = arith.mulf %467, %21 : vector<8x256xf32>
    %469 = arith.addf %465, %468 : vector<8x256xf32>
    %470 = vector.extract_strided_slice %450 {offsets = [0, 5], sizes = [8, 1], strides = [1, 1]} : vector<8x15xf32> to vector<8x1xf32>
    %471 = vector.broadcast %470 : vector<8x1xf32> to vector<8x256xf32>
    %472 = arith.mulf %471, %25 : vector<8x256xf32>
    %473 = arith.addf %469, %472 : vector<8x256xf32>
    %474 = vector.extract_strided_slice %450 {offsets = [0, 6], sizes = [8, 1], strides = [1, 1]} : vector<8x15xf32> to vector<8x1xf32>
    %475 = vector.broadcast %474 : vector<8x1xf32> to vector<8x256xf32>
    %476 = arith.mulf %475, %29 : vector<8x256xf32>
    %477 = arith.addf %473, %476 : vector<8x256xf32>
    %478 = vector.extract_strided_slice %450 {offsets = [0, 7], sizes = [8, 1], strides = [1, 1]} : vector<8x15xf32> to vector<8x1xf32>
    %479 = vector.broadcast %478 : vector<8x1xf32> to vector<8x256xf32>
    %480 = arith.mulf %479, %32 : vector<8x256xf32>
    %481 = arith.addf %477, %480 : vector<8x256xf32>
    %482 = vector.extract_strided_slice %450 {offsets = [0, 8], sizes = [8, 1], strides = [1, 1]} : vector<8x15xf32> to vector<8x1xf32>
    %483 = vector.broadcast %482 : vector<8x1xf32> to vector<8x256xf32>
    %484 = arith.mulf %483, %36 : vector<8x256xf32>
    %485 = arith.addf %481, %484 : vector<8x256xf32>
    %486 = vector.extract_strided_slice %450 {offsets = [0, 9], sizes = [8, 1], strides = [1, 1]} : vector<8x15xf32> to vector<8x1xf32>
    %487 = vector.broadcast %486 : vector<8x1xf32> to vector<8x256xf32>
    %488 = arith.mulf %487, %40 : vector<8x256xf32>
    %489 = arith.addf %485, %488 : vector<8x256xf32>
    %490 = vector.extract_strided_slice %450 {offsets = [0, 10], sizes = [8, 1], strides = [1, 1]} : vector<8x15xf32> to vector<8x1xf32>
    %491 = vector.broadcast %490 : vector<8x1xf32> to vector<8x256xf32>
    %492 = arith.mulf %491, %44 : vector<8x256xf32>
    %493 = arith.addf %489, %492 : vector<8x256xf32>
    %494 = vector.extract_strided_slice %450 {offsets = [0, 11], sizes = [8, 1], strides = [1, 1]} : vector<8x15xf32> to vector<8x1xf32>
    %495 = vector.broadcast %494 : vector<8x1xf32> to vector<8x256xf32>
    %496 = arith.mulf %495, %48 : vector<8x256xf32>
    %497 = arith.addf %493, %496 : vector<8x256xf32>
    %498 = vector.extract_strided_slice %450 {offsets = [0, 12], sizes = [8, 1], strides = [1, 1]} : vector<8x15xf32> to vector<8x1xf32>
    %499 = vector.broadcast %498 : vector<8x1xf32> to vector<8x256xf32>
    %500 = arith.mulf %499, %52 : vector<8x256xf32>
    %501 = arith.addf %497, %500 : vector<8x256xf32>
    %502 = vector.extract_strided_slice %450 {offsets = [0, 13], sizes = [8, 1], strides = [1, 1]} : vector<8x15xf32> to vector<8x1xf32>
    %503 = vector.broadcast %502 : vector<8x1xf32> to vector<8x256xf32>
    %504 = arith.mulf %503, %56 : vector<8x256xf32>
    %505 = arith.addf %501, %504 : vector<8x256xf32>
    %506 = vector.extract_strided_slice %450 {offsets = [0, 14], sizes = [8, 1], strides = [1, 1]} : vector<8x15xf32> to vector<8x1xf32>
    %507 = vector.broadcast %506 : vector<8x1xf32> to vector<8x256xf32>
    %508 = arith.mulf %507, %60 : vector<8x256xf32>
    %509 = arith.addf %505, %508 : vector<8x256xf32>
    %c16_i32 = arith.constant 16 : i32
    %510 = tpu.dynamic_rotate %509 by %c16_i32 dim 1 : vector<8x256xf32>, i32 -> vector<8x256xf32>
    %c21 = arith.constant 21 : index
    %c0_34 = arith.constant 0 : index
    %511 = vector.load %arg2[%c21, %c0_34] : memref<30x256xf32, #tpu.memory_space<vmem>>, vector<1x256xf32>
    %512 = vector.broadcast %511 : vector<1x256xf32> to vector<8x256xf32>
    %513 = arith.mulf %510, %512 : vector<8x256xf32>
    %514 = arith.addf %449, %513 : vector<8x256xf32>
    %c56 = arith.constant 56 : index
    %c0_35 = arith.constant 0 : index
    %515 = vector.load %arg3[%c56, %c0_35] : memref<120x15xf32, #tpu.memory_space<vmem>>, vector<8x15xf32>
    %516 = vector.extract_strided_slice %515 {offsets = [0, 0], sizes = [8, 1], strides = [1, 1]} : vector<8x15xf32> to vector<8x1xf32>
    %517 = vector.broadcast %516 : vector<8x1xf32> to vector<8x256xf32>
    %518 = arith.mulf %517, %5 : vector<8x256xf32>
    %519 = vector.extract_strided_slice %515 {offsets = [0, 1], sizes = [8, 1], strides = [1, 1]} : vector<8x15xf32> to vector<8x1xf32>
    %520 = vector.broadcast %519 : vector<8x1xf32> to vector<8x256xf32>
    %521 = arith.mulf %520, %9 : vector<8x256xf32>
    %522 = arith.addf %518, %521 : vector<8x256xf32>
    %523 = vector.extract_strided_slice %515 {offsets = [0, 2], sizes = [8, 1], strides = [1, 1]} : vector<8x15xf32> to vector<8x1xf32>
    %524 = vector.broadcast %523 : vector<8x1xf32> to vector<8x256xf32>
    %525 = arith.mulf %524, %13 : vector<8x256xf32>
    %526 = arith.addf %522, %525 : vector<8x256xf32>
    %527 = vector.extract_strided_slice %515 {offsets = [0, 3], sizes = [8, 1], strides = [1, 1]} : vector<8x15xf32> to vector<8x1xf32>
    %528 = vector.broadcast %527 : vector<8x1xf32> to vector<8x256xf32>
    %529 = arith.mulf %528, %17 : vector<8x256xf32>
    %530 = arith.addf %526, %529 : vector<8x256xf32>
    %531 = vector.extract_strided_slice %515 {offsets = [0, 4], sizes = [8, 1], strides = [1, 1]} : vector<8x15xf32> to vector<8x1xf32>
    %532 = vector.broadcast %531 : vector<8x1xf32> to vector<8x256xf32>
    %533 = arith.mulf %532, %21 : vector<8x256xf32>
    %534 = arith.addf %530, %533 : vector<8x256xf32>
    %535 = vector.extract_strided_slice %515 {offsets = [0, 5], sizes = [8, 1], strides = [1, 1]} : vector<8x15xf32> to vector<8x1xf32>
    %536 = vector.broadcast %535 : vector<8x1xf32> to vector<8x256xf32>
    %537 = arith.mulf %536, %25 : vector<8x256xf32>
    %538 = arith.addf %534, %537 : vector<8x256xf32>
    %539 = vector.extract_strided_slice %515 {offsets = [0, 6], sizes = [8, 1], strides = [1, 1]} : vector<8x15xf32> to vector<8x1xf32>
    %540 = vector.broadcast %539 : vector<8x1xf32> to vector<8x256xf32>
    %541 = arith.mulf %540, %29 : vector<8x256xf32>
    %542 = arith.addf %538, %541 : vector<8x256xf32>
    %543 = vector.extract_strided_slice %515 {offsets = [0, 7], sizes = [8, 1], strides = [1, 1]} : vector<8x15xf32> to vector<8x1xf32>
    %544 = vector.broadcast %543 : vector<8x1xf32> to vector<8x256xf32>
    %545 = arith.mulf %544, %32 : vector<8x256xf32>
    %546 = arith.addf %542, %545 : vector<8x256xf32>
    %547 = vector.extract_strided_slice %515 {offsets = [0, 8], sizes = [8, 1], strides = [1, 1]} : vector<8x15xf32> to vector<8x1xf32>
    %548 = vector.broadcast %547 : vector<8x1xf32> to vector<8x256xf32>
    %549 = arith.mulf %548, %36 : vector<8x256xf32>
    %550 = arith.addf %546, %549 : vector<8x256xf32>
    %551 = vector.extract_strided_slice %515 {offsets = [0, 9], sizes = [8, 1], strides = [1, 1]} : vector<8x15xf32> to vector<8x1xf32>
    %552 = vector.broadcast %551 : vector<8x1xf32> to vector<8x256xf32>
    %553 = arith.mulf %552, %40 : vector<8x256xf32>
    %554 = arith.addf %550, %553 : vector<8x256xf32>
    %555 = vector.extract_strided_slice %515 {offsets = [0, 10], sizes = [8, 1], strides = [1, 1]} : vector<8x15xf32> to vector<8x1xf32>
    %556 = vector.broadcast %555 : vector<8x1xf32> to vector<8x256xf32>
    %557 = arith.mulf %556, %44 : vector<8x256xf32>
    %558 = arith.addf %554, %557 : vector<8x256xf32>
    %559 = vector.extract_strided_slice %515 {offsets = [0, 11], sizes = [8, 1], strides = [1, 1]} : vector<8x15xf32> to vector<8x1xf32>
    %560 = vector.broadcast %559 : vector<8x1xf32> to vector<8x256xf32>
    %561 = arith.mulf %560, %48 : vector<8x256xf32>
    %562 = arith.addf %558, %561 : vector<8x256xf32>
    %563 = vector.extract_strided_slice %515 {offsets = [0, 12], sizes = [8, 1], strides = [1, 1]} : vector<8x15xf32> to vector<8x1xf32>
    %564 = vector.broadcast %563 : vector<8x1xf32> to vector<8x256xf32>
    %565 = arith.mulf %564, %52 : vector<8x256xf32>
    %566 = arith.addf %562, %565 : vector<8x256xf32>
    %567 = vector.extract_strided_slice %515 {offsets = [0, 13], sizes = [8, 1], strides = [1, 1]} : vector<8x15xf32> to vector<8x1xf32>
    %568 = vector.broadcast %567 : vector<8x1xf32> to vector<8x256xf32>
    %569 = arith.mulf %568, %56 : vector<8x256xf32>
    %570 = arith.addf %566, %569 : vector<8x256xf32>
    %571 = vector.extract_strided_slice %515 {offsets = [0, 14], sizes = [8, 1], strides = [1, 1]} : vector<8x15xf32> to vector<8x1xf32>
    %572 = vector.broadcast %571 : vector<8x1xf32> to vector<8x256xf32>
    %573 = arith.mulf %572, %60 : vector<8x256xf32>
    %574 = arith.addf %570, %573 : vector<8x256xf32>
    %c22 = arith.constant 22 : index
    %c0_36 = arith.constant 0 : index
    %575 = vector.load %arg2[%c22, %c0_36] : memref<30x256xf32, #tpu.memory_space<vmem>>, vector<1x256xf32>
    %576 = vector.broadcast %575 : vector<1x256xf32> to vector<8x256xf32>
    %577 = arith.mulf %574, %576 : vector<8x256xf32>
    %578 = arith.addf %514, %577 : vector<8x256xf32>
    %c64 = arith.constant 64 : index
    %c0_37 = arith.constant 0 : index
    %579 = vector.load %arg3[%c64, %c0_37] : memref<120x15xf32, #tpu.memory_space<vmem>>, vector<8x15xf32>
    %580 = vector.extract_strided_slice %579 {offsets = [0, 0], sizes = [8, 1], strides = [1, 1]} : vector<8x15xf32> to vector<8x1xf32>
    %581 = vector.broadcast %580 : vector<8x1xf32> to vector<8x256xf32>
    %582 = arith.mulf %581, %5 : vector<8x256xf32>
    %583 = vector.extract_strided_slice %579 {offsets = [0, 1], sizes = [8, 1], strides = [1, 1]} : vector<8x15xf32> to vector<8x1xf32>
    %584 = vector.broadcast %583 : vector<8x1xf32> to vector<8x256xf32>
    %585 = arith.mulf %584, %9 : vector<8x256xf32>
    %586 = arith.addf %582, %585 : vector<8x256xf32>
    %587 = vector.extract_strided_slice %579 {offsets = [0, 2], sizes = [8, 1], strides = [1, 1]} : vector<8x15xf32> to vector<8x1xf32>
    %588 = vector.broadcast %587 : vector<8x1xf32> to vector<8x256xf32>
    %589 = arith.mulf %588, %13 : vector<8x256xf32>
    %590 = arith.addf %586, %589 : vector<8x256xf32>
    %591 = vector.extract_strided_slice %579 {offsets = [0, 3], sizes = [8, 1], strides = [1, 1]} : vector<8x15xf32> to vector<8x1xf32>
    %592 = vector.broadcast %591 : vector<8x1xf32> to vector<8x256xf32>
    %593 = arith.mulf %592, %17 : vector<8x256xf32>
    %594 = arith.addf %590, %593 : vector<8x256xf32>
    %595 = vector.extract_strided_slice %579 {offsets = [0, 4], sizes = [8, 1], strides = [1, 1]} : vector<8x15xf32> to vector<8x1xf32>
    %596 = vector.broadcast %595 : vector<8x1xf32> to vector<8x256xf32>
    %597 = arith.mulf %596, %21 : vector<8x256xf32>
    %598 = arith.addf %594, %597 : vector<8x256xf32>
    %599 = vector.extract_strided_slice %579 {offsets = [0, 5], sizes = [8, 1], strides = [1, 1]} : vector<8x15xf32> to vector<8x1xf32>
    %600 = vector.broadcast %599 : vector<8x1xf32> to vector<8x256xf32>
    %601 = arith.mulf %600, %25 : vector<8x256xf32>
    %602 = arith.addf %598, %601 : vector<8x256xf32>
    %603 = vector.extract_strided_slice %579 {offsets = [0, 6], sizes = [8, 1], strides = [1, 1]} : vector<8x15xf32> to vector<8x1xf32>
    %604 = vector.broadcast %603 : vector<8x1xf32> to vector<8x256xf32>
    %605 = arith.mulf %604, %29 : vector<8x256xf32>
    %606 = arith.addf %602, %605 : vector<8x256xf32>
    %607 = vector.extract_strided_slice %579 {offsets = [0, 7], sizes = [8, 1], strides = [1, 1]} : vector<8x15xf32> to vector<8x1xf32>
    %608 = vector.broadcast %607 : vector<8x1xf32> to vector<8x256xf32>
    %609 = arith.mulf %608, %32 : vector<8x256xf32>
    %610 = arith.addf %606, %609 : vector<8x256xf32>
    %611 = vector.extract_strided_slice %579 {offsets = [0, 8], sizes = [8, 1], strides = [1, 1]} : vector<8x15xf32> to vector<8x1xf32>
    %612 = vector.broadcast %611 : vector<8x1xf32> to vector<8x256xf32>
    %613 = arith.mulf %612, %36 : vector<8x256xf32>
    %614 = arith.addf %610, %613 : vector<8x256xf32>
    %615 = vector.extract_strided_slice %579 {offsets = [0, 9], sizes = [8, 1], strides = [1, 1]} : vector<8x15xf32> to vector<8x1xf32>
    %616 = vector.broadcast %615 : vector<8x1xf32> to vector<8x256xf32>
    %617 = arith.mulf %616, %40 : vector<8x256xf32>
    %618 = arith.addf %614, %617 : vector<8x256xf32>
    %619 = vector.extract_strided_slice %579 {offsets = [0, 10], sizes = [8, 1], strides = [1, 1]} : vector<8x15xf32> to vector<8x1xf32>
    %620 = vector.broadcast %619 : vector<8x1xf32> to vector<8x256xf32>
    %621 = arith.mulf %620, %44 : vector<8x256xf32>
    %622 = arith.addf %618, %621 : vector<8x256xf32>
    %623 = vector.extract_strided_slice %579 {offsets = [0, 11], sizes = [8, 1], strides = [1, 1]} : vector<8x15xf32> to vector<8x1xf32>
    %624 = vector.broadcast %623 : vector<8x1xf32> to vector<8x256xf32>
    %625 = arith.mulf %624, %48 : vector<8x256xf32>
    %626 = arith.addf %622, %625 : vector<8x256xf32>
    %627 = vector.extract_strided_slice %579 {offsets = [0, 12], sizes = [8, 1], strides = [1, 1]} : vector<8x15xf32> to vector<8x1xf32>
    %628 = vector.broadcast %627 : vector<8x1xf32> to vector<8x256xf32>
    %629 = arith.mulf %628, %52 : vector<8x256xf32>
    %630 = arith.addf %626, %629 : vector<8x256xf32>
    %631 = vector.extract_strided_slice %579 {offsets = [0, 13], sizes = [8, 1], strides = [1, 1]} : vector<8x15xf32> to vector<8x1xf32>
    %632 = vector.broadcast %631 : vector<8x1xf32> to vector<8x256xf32>
    %633 = arith.mulf %632, %56 : vector<8x256xf32>
    %634 = arith.addf %630, %633 : vector<8x256xf32>
    %635 = vector.extract_strided_slice %579 {offsets = [0, 14], sizes = [8, 1], strides = [1, 1]} : vector<8x15xf32> to vector<8x1xf32>
    %636 = vector.broadcast %635 : vector<8x1xf32> to vector<8x256xf32>
    %637 = arith.mulf %636, %60 : vector<8x256xf32>
    %638 = arith.addf %634, %637 : vector<8x256xf32>
    %c240_i32 = arith.constant 240 : i32
    %639 = tpu.dynamic_rotate %638 by %c240_i32 dim 1 : vector<8x256xf32>, i32 -> vector<8x256xf32>
    %c23 = arith.constant 23 : index
    %c0_38 = arith.constant 0 : index
    %640 = vector.load %arg2[%c23, %c0_38] : memref<30x256xf32, #tpu.memory_space<vmem>>, vector<1x256xf32>
    %641 = vector.broadcast %640 : vector<1x256xf32> to vector<8x256xf32>
    %642 = arith.mulf %639, %641 : vector<8x256xf32>
    %643 = arith.addf %578, %642 : vector<8x256xf32>
    %c72 = arith.constant 72 : index
    %c0_39 = arith.constant 0 : index
    %644 = vector.load %arg3[%c72, %c0_39] : memref<120x15xf32, #tpu.memory_space<vmem>>, vector<8x15xf32>
    %645 = vector.extract_strided_slice %644 {offsets = [0, 0], sizes = [8, 1], strides = [1, 1]} : vector<8x15xf32> to vector<8x1xf32>
    %646 = vector.broadcast %645 : vector<8x1xf32> to vector<8x256xf32>
    %647 = arith.mulf %646, %5 : vector<8x256xf32>
    %648 = vector.extract_strided_slice %644 {offsets = [0, 1], sizes = [8, 1], strides = [1, 1]} : vector<8x15xf32> to vector<8x1xf32>
    %649 = vector.broadcast %648 : vector<8x1xf32> to vector<8x256xf32>
    %650 = arith.mulf %649, %9 : vector<8x256xf32>
    %651 = arith.addf %647, %650 : vector<8x256xf32>
    %652 = vector.extract_strided_slice %644 {offsets = [0, 2], sizes = [8, 1], strides = [1, 1]} : vector<8x15xf32> to vector<8x1xf32>
    %653 = vector.broadcast %652 : vector<8x1xf32> to vector<8x256xf32>
    %654 = arith.mulf %653, %13 : vector<8x256xf32>
    %655 = arith.addf %651, %654 : vector<8x256xf32>
    %656 = vector.extract_strided_slice %644 {offsets = [0, 3], sizes = [8, 1], strides = [1, 1]} : vector<8x15xf32> to vector<8x1xf32>
    %657 = vector.broadcast %656 : vector<8x1xf32> to vector<8x256xf32>
    %658 = arith.mulf %657, %17 : vector<8x256xf32>
    %659 = arith.addf %655, %658 : vector<8x256xf32>
    %660 = vector.extract_strided_slice %644 {offsets = [0, 4], sizes = [8, 1], strides = [1, 1]} : vector<8x15xf32> to vector<8x1xf32>
    %661 = vector.broadcast %660 : vector<8x1xf32> to vector<8x256xf32>
    %662 = arith.mulf %661, %21 : vector<8x256xf32>
    %663 = arith.addf %659, %662 : vector<8x256xf32>
    %664 = vector.extract_strided_slice %644 {offsets = [0, 5], sizes = [8, 1], strides = [1, 1]} : vector<8x15xf32> to vector<8x1xf32>
    %665 = vector.broadcast %664 : vector<8x1xf32> to vector<8x256xf32>
    %666 = arith.mulf %665, %25 : vector<8x256xf32>
    %667 = arith.addf %663, %666 : vector<8x256xf32>
    %668 = vector.extract_strided_slice %644 {offsets = [0, 6], sizes = [8, 1], strides = [1, 1]} : vector<8x15xf32> to vector<8x1xf32>
    %669 = vector.broadcast %668 : vector<8x1xf32> to vector<8x256xf32>
    %670 = arith.mulf %669, %29 : vector<8x256xf32>
    %671 = arith.addf %667, %670 : vector<8x256xf32>
    %672 = vector.extract_strided_slice %644 {offsets = [0, 7], sizes = [8, 1], strides = [1, 1]} : vector<8x15xf32> to vector<8x1xf32>
    %673 = vector.broadcast %672 : vector<8x1xf32> to vector<8x256xf32>
    %674 = arith.mulf %673, %32 : vector<8x256xf32>
    %675 = arith.addf %671, %674 : vector<8x256xf32>
    %676 = vector.extract_strided_slice %644 {offsets = [0, 8], sizes = [8, 1], strides = [1, 1]} : vector<8x15xf32> to vector<8x1xf32>
    %677 = vector.broadcast %676 : vector<8x1xf32> to vector<8x256xf32>
    %678 = arith.mulf %677, %36 : vector<8x256xf32>
    %679 = arith.addf %675, %678 : vector<8x256xf32>
    %680 = vector.extract_strided_slice %644 {offsets = [0, 9], sizes = [8, 1], strides = [1, 1]} : vector<8x15xf32> to vector<8x1xf32>
    %681 = vector.broadcast %680 : vector<8x1xf32> to vector<8x256xf32>
    %682 = arith.mulf %681, %40 : vector<8x256xf32>
    %683 = arith.addf %679, %682 : vector<8x256xf32>
    %684 = vector.extract_strided_slice %644 {offsets = [0, 10], sizes = [8, 1], strides = [1, 1]} : vector<8x15xf32> to vector<8x1xf32>
    %685 = vector.broadcast %684 : vector<8x1xf32> to vector<8x256xf32>
    %686 = arith.mulf %685, %44 : vector<8x256xf32>
    %687 = arith.addf %683, %686 : vector<8x256xf32>
    %688 = vector.extract_strided_slice %644 {offsets = [0, 11], sizes = [8, 1], strides = [1, 1]} : vector<8x15xf32> to vector<8x1xf32>
    %689 = vector.broadcast %688 : vector<8x1xf32> to vector<8x256xf32>
    %690 = arith.mulf %689, %48 : vector<8x256xf32>
    %691 = arith.addf %687, %690 : vector<8x256xf32>
    %692 = vector.extract_strided_slice %644 {offsets = [0, 12], sizes = [8, 1], strides = [1, 1]} : vector<8x15xf32> to vector<8x1xf32>
    %693 = vector.broadcast %692 : vector<8x1xf32> to vector<8x256xf32>
    %694 = arith.mulf %693, %52 : vector<8x256xf32>
    %695 = arith.addf %691, %694 : vector<8x256xf32>
    %696 = vector.extract_strided_slice %644 {offsets = [0, 13], sizes = [8, 1], strides = [1, 1]} : vector<8x15xf32> to vector<8x1xf32>
    %697 = vector.broadcast %696 : vector<8x1xf32> to vector<8x256xf32>
    %698 = arith.mulf %697, %56 : vector<8x256xf32>
    %699 = arith.addf %695, %698 : vector<8x256xf32>
    %700 = vector.extract_strided_slice %644 {offsets = [0, 14], sizes = [8, 1], strides = [1, 1]} : vector<8x15xf32> to vector<8x1xf32>
    %701 = vector.broadcast %700 : vector<8x1xf32> to vector<8x256xf32>
    %702 = arith.mulf %701, %60 : vector<8x256xf32>
    %703 = arith.addf %699, %702 : vector<8x256xf32>
    %c224_i32 = arith.constant 224 : i32
    %704 = tpu.dynamic_rotate %703 by %c224_i32 dim 1 : vector<8x256xf32>, i32 -> vector<8x256xf32>
    %c24_40 = arith.constant 24 : index
    %c0_41 = arith.constant 0 : index
    %705 = vector.load %arg2[%c24_40, %c0_41] : memref<30x256xf32, #tpu.memory_space<vmem>>, vector<1x256xf32>
    %706 = vector.broadcast %705 : vector<1x256xf32> to vector<8x256xf32>
    %707 = arith.mulf %704, %706 : vector<8x256xf32>
    %708 = arith.addf %643, %707 : vector<8x256xf32>
    %c80 = arith.constant 80 : index
    %c0_42 = arith.constant 0 : index
    %709 = vector.load %arg3[%c80, %c0_42] : memref<120x15xf32, #tpu.memory_space<vmem>>, vector<8x15xf32>
    %710 = vector.extract_strided_slice %709 {offsets = [0, 0], sizes = [8, 1], strides = [1, 1]} : vector<8x15xf32> to vector<8x1xf32>
    %711 = vector.broadcast %710 : vector<8x1xf32> to vector<8x256xf32>
    %712 = arith.mulf %711, %5 : vector<8x256xf32>
    %713 = vector.extract_strided_slice %709 {offsets = [0, 1], sizes = [8, 1], strides = [1, 1]} : vector<8x15xf32> to vector<8x1xf32>
    %714 = vector.broadcast %713 : vector<8x1xf32> to vector<8x256xf32>
    %715 = arith.mulf %714, %9 : vector<8x256xf32>
    %716 = arith.addf %712, %715 : vector<8x256xf32>
    %717 = vector.extract_strided_slice %709 {offsets = [0, 2], sizes = [8, 1], strides = [1, 1]} : vector<8x15xf32> to vector<8x1xf32>
    %718 = vector.broadcast %717 : vector<8x1xf32> to vector<8x256xf32>
    %719 = arith.mulf %718, %13 : vector<8x256xf32>
    %720 = arith.addf %716, %719 : vector<8x256xf32>
    %721 = vector.extract_strided_slice %709 {offsets = [0, 3], sizes = [8, 1], strides = [1, 1]} : vector<8x15xf32> to vector<8x1xf32>
    %722 = vector.broadcast %721 : vector<8x1xf32> to vector<8x256xf32>
    %723 = arith.mulf %722, %17 : vector<8x256xf32>
    %724 = arith.addf %720, %723 : vector<8x256xf32>
    %725 = vector.extract_strided_slice %709 {offsets = [0, 4], sizes = [8, 1], strides = [1, 1]} : vector<8x15xf32> to vector<8x1xf32>
    %726 = vector.broadcast %725 : vector<8x1xf32> to vector<8x256xf32>
    %727 = arith.mulf %726, %21 : vector<8x256xf32>
    %728 = arith.addf %724, %727 : vector<8x256xf32>
    %729 = vector.extract_strided_slice %709 {offsets = [0, 5], sizes = [8, 1], strides = [1, 1]} : vector<8x15xf32> to vector<8x1xf32>
    %730 = vector.broadcast %729 : vector<8x1xf32> to vector<8x256xf32>
    %731 = arith.mulf %730, %25 : vector<8x256xf32>
    %732 = arith.addf %728, %731 : vector<8x256xf32>
    %733 = vector.extract_strided_slice %709 {offsets = [0, 6], sizes = [8, 1], strides = [1, 1]} : vector<8x15xf32> to vector<8x1xf32>
    %734 = vector.broadcast %733 : vector<8x1xf32> to vector<8x256xf32>
    %735 = arith.mulf %734, %29 : vector<8x256xf32>
    %736 = arith.addf %732, %735 : vector<8x256xf32>
    %737 = vector.extract_strided_slice %709 {offsets = [0, 7], sizes = [8, 1], strides = [1, 1]} : vector<8x15xf32> to vector<8x1xf32>
    %738 = vector.broadcast %737 : vector<8x1xf32> to vector<8x256xf32>
    %739 = arith.mulf %738, %32 : vector<8x256xf32>
    %740 = arith.addf %736, %739 : vector<8x256xf32>
    %741 = vector.extract_strided_slice %709 {offsets = [0, 8], sizes = [8, 1], strides = [1, 1]} : vector<8x15xf32> to vector<8x1xf32>
    %742 = vector.broadcast %741 : vector<8x1xf32> to vector<8x256xf32>
    %743 = arith.mulf %742, %36 : vector<8x256xf32>
    %744 = arith.addf %740, %743 : vector<8x256xf32>
    %745 = vector.extract_strided_slice %709 {offsets = [0, 9], sizes = [8, 1], strides = [1, 1]} : vector<8x15xf32> to vector<8x1xf32>
    %746 = vector.broadcast %745 : vector<8x1xf32> to vector<8x256xf32>
    %747 = arith.mulf %746, %40 : vector<8x256xf32>
    %748 = arith.addf %744, %747 : vector<8x256xf32>
    %749 = vector.extract_strided_slice %709 {offsets = [0, 10], sizes = [8, 1], strides = [1, 1]} : vector<8x15xf32> to vector<8x1xf32>
    %750 = vector.broadcast %749 : vector<8x1xf32> to vector<8x256xf32>
    %751 = arith.mulf %750, %44 : vector<8x256xf32>
    %752 = arith.addf %748, %751 : vector<8x256xf32>
    %753 = vector.extract_strided_slice %709 {offsets = [0, 11], sizes = [8, 1], strides = [1, 1]} : vector<8x15xf32> to vector<8x1xf32>
    %754 = vector.broadcast %753 : vector<8x1xf32> to vector<8x256xf32>
    %755 = arith.mulf %754, %48 : vector<8x256xf32>
    %756 = arith.addf %752, %755 : vector<8x256xf32>
    %757 = vector.extract_strided_slice %709 {offsets = [0, 12], sizes = [8, 1], strides = [1, 1]} : vector<8x15xf32> to vector<8x1xf32>
    %758 = vector.broadcast %757 : vector<8x1xf32> to vector<8x256xf32>
    %759 = arith.mulf %758, %52 : vector<8x256xf32>
    %760 = arith.addf %756, %759 : vector<8x256xf32>
    %761 = vector.extract_strided_slice %709 {offsets = [0, 13], sizes = [8, 1], strides = [1, 1]} : vector<8x15xf32> to vector<8x1xf32>
    %762 = vector.broadcast %761 : vector<8x1xf32> to vector<8x256xf32>
    %763 = arith.mulf %762, %56 : vector<8x256xf32>
    %764 = arith.addf %760, %763 : vector<8x256xf32>
    %765 = vector.extract_strided_slice %709 {offsets = [0, 14], sizes = [8, 1], strides = [1, 1]} : vector<8x15xf32> to vector<8x1xf32>
    %766 = vector.broadcast %765 : vector<8x1xf32> to vector<8x256xf32>
    %767 = arith.mulf %766, %60 : vector<8x256xf32>
    %768 = arith.addf %764, %767 : vector<8x256xf32>
    %c208_i32 = arith.constant 208 : i32
    %769 = tpu.dynamic_rotate %768 by %c208_i32 dim 1 : vector<8x256xf32>, i32 -> vector<8x256xf32>
    %c25 = arith.constant 25 : index
    %c0_43 = arith.constant 0 : index
    %770 = vector.load %arg2[%c25, %c0_43] : memref<30x256xf32, #tpu.memory_space<vmem>>, vector<1x256xf32>
    %771 = vector.broadcast %770 : vector<1x256xf32> to vector<8x256xf32>
    %772 = arith.mulf %769, %771 : vector<8x256xf32>
    %773 = arith.addf %708, %772 : vector<8x256xf32>
    %c88 = arith.constant 88 : index
    %c0_44 = arith.constant 0 : index
    %774 = vector.load %arg3[%c88, %c0_44] : memref<120x15xf32, #tpu.memory_space<vmem>>, vector<8x15xf32>
    %775 = vector.extract_strided_slice %774 {offsets = [0, 0], sizes = [8, 1], strides = [1, 1]} : vector<8x15xf32> to vector<8x1xf32>
    %776 = vector.broadcast %775 : vector<8x1xf32> to vector<8x256xf32>
    %777 = arith.mulf %776, %5 : vector<8x256xf32>
    %778 = vector.extract_strided_slice %774 {offsets = [0, 1], sizes = [8, 1], strides = [1, 1]} : vector<8x15xf32> to vector<8x1xf32>
    %779 = vector.broadcast %778 : vector<8x1xf32> to vector<8x256xf32>
    %780 = arith.mulf %779, %9 : vector<8x256xf32>
    %781 = arith.addf %777, %780 : vector<8x256xf32>
    %782 = vector.extract_strided_slice %774 {offsets = [0, 2], sizes = [8, 1], strides = [1, 1]} : vector<8x15xf32> to vector<8x1xf32>
    %783 = vector.broadcast %782 : vector<8x1xf32> to vector<8x256xf32>
    %784 = arith.mulf %783, %13 : vector<8x256xf32>
    %785 = arith.addf %781, %784 : vector<8x256xf32>
    %786 = vector.extract_strided_slice %774 {offsets = [0, 3], sizes = [8, 1], strides = [1, 1]} : vector<8x15xf32> to vector<8x1xf32>
    %787 = vector.broadcast %786 : vector<8x1xf32> to vector<8x256xf32>
    %788 = arith.mulf %787, %17 : vector<8x256xf32>
    %789 = arith.addf %785, %788 : vector<8x256xf32>
    %790 = vector.extract_strided_slice %774 {offsets = [0, 4], sizes = [8, 1], strides = [1, 1]} : vector<8x15xf32> to vector<8x1xf32>
    %791 = vector.broadcast %790 : vector<8x1xf32> to vector<8x256xf32>
    %792 = arith.mulf %791, %21 : vector<8x256xf32>
    %793 = arith.addf %789, %792 : vector<8x256xf32>
    %794 = vector.extract_strided_slice %774 {offsets = [0, 5], sizes = [8, 1], strides = [1, 1]} : vector<8x15xf32> to vector<8x1xf32>
    %795 = vector.broadcast %794 : vector<8x1xf32> to vector<8x256xf32>
    %796 = arith.mulf %795, %25 : vector<8x256xf32>
    %797 = arith.addf %793, %796 : vector<8x256xf32>
    %798 = vector.extract_strided_slice %774 {offsets = [0, 6], sizes = [8, 1], strides = [1, 1]} : vector<8x15xf32> to vector<8x1xf32>
    %799 = vector.broadcast %798 : vector<8x1xf32> to vector<8x256xf32>
    %800 = arith.mulf %799, %29 : vector<8x256xf32>
    %801 = arith.addf %797, %800 : vector<8x256xf32>
    %802 = vector.extract_strided_slice %774 {offsets = [0, 7], sizes = [8, 1], strides = [1, 1]} : vector<8x15xf32> to vector<8x1xf32>
    %803 = vector.broadcast %802 : vector<8x1xf32> to vector<8x256xf32>
    %804 = arith.mulf %803, %32 : vector<8x256xf32>
    %805 = arith.addf %801, %804 : vector<8x256xf32>
    %806 = vector.extract_strided_slice %774 {offsets = [0, 8], sizes = [8, 1], strides = [1, 1]} : vector<8x15xf32> to vector<8x1xf32>
    %807 = vector.broadcast %806 : vector<8x1xf32> to vector<8x256xf32>
    %808 = arith.mulf %807, %36 : vector<8x256xf32>
    %809 = arith.addf %805, %808 : vector<8x256xf32>
    %810 = vector.extract_strided_slice %774 {offsets = [0, 9], sizes = [8, 1], strides = [1, 1]} : vector<8x15xf32> to vector<8x1xf32>
    %811 = vector.broadcast %810 : vector<8x1xf32> to vector<8x256xf32>
    %812 = arith.mulf %811, %40 : vector<8x256xf32>
    %813 = arith.addf %809, %812 : vector<8x256xf32>
    %814 = vector.extract_strided_slice %774 {offsets = [0, 10], sizes = [8, 1], strides = [1, 1]} : vector<8x15xf32> to vector<8x1xf32>
    %815 = vector.broadcast %814 : vector<8x1xf32> to vector<8x256xf32>
    %816 = arith.mulf %815, %44 : vector<8x256xf32>
    %817 = arith.addf %813, %816 : vector<8x256xf32>
    %818 = vector.extract_strided_slice %774 {offsets = [0, 11], sizes = [8, 1], strides = [1, 1]} : vector<8x15xf32> to vector<8x1xf32>
    %819 = vector.broadcast %818 : vector<8x1xf32> to vector<8x256xf32>
    %820 = arith.mulf %819, %48 : vector<8x256xf32>
    %821 = arith.addf %817, %820 : vector<8x256xf32>
    %822 = vector.extract_strided_slice %774 {offsets = [0, 12], sizes = [8, 1], strides = [1, 1]} : vector<8x15xf32> to vector<8x1xf32>
    %823 = vector.broadcast %822 : vector<8x1xf32> to vector<8x256xf32>
    %824 = arith.mulf %823, %52 : vector<8x256xf32>
    %825 = arith.addf %821, %824 : vector<8x256xf32>
    %826 = vector.extract_strided_slice %774 {offsets = [0, 13], sizes = [8, 1], strides = [1, 1]} : vector<8x15xf32> to vector<8x1xf32>
    %827 = vector.broadcast %826 : vector<8x1xf32> to vector<8x256xf32>
    %828 = arith.mulf %827, %56 : vector<8x256xf32>
    %829 = arith.addf %825, %828 : vector<8x256xf32>
    %830 = vector.extract_strided_slice %774 {offsets = [0, 14], sizes = [8, 1], strides = [1, 1]} : vector<8x15xf32> to vector<8x1xf32>
    %831 = vector.broadcast %830 : vector<8x1xf32> to vector<8x256xf32>
    %832 = arith.mulf %831, %60 : vector<8x256xf32>
    %833 = arith.addf %829, %832 : vector<8x256xf32>
    %c192_i32 = arith.constant 192 : i32
    %834 = tpu.dynamic_rotate %833 by %c192_i32 dim 1 : vector<8x256xf32>, i32 -> vector<8x256xf32>
    %c26 = arith.constant 26 : index
    %c0_45 = arith.constant 0 : index
    %835 = vector.load %arg2[%c26, %c0_45] : memref<30x256xf32, #tpu.memory_space<vmem>>, vector<1x256xf32>
    %836 = vector.broadcast %835 : vector<1x256xf32> to vector<8x256xf32>
    %837 = arith.mulf %834, %836 : vector<8x256xf32>
    %838 = arith.addf %773, %837 : vector<8x256xf32>
    %c96 = arith.constant 96 : index
    %c0_46 = arith.constant 0 : index
    %839 = vector.load %arg3[%c96, %c0_46] : memref<120x15xf32, #tpu.memory_space<vmem>>, vector<8x15xf32>
    %840 = vector.extract_strided_slice %839 {offsets = [0, 0], sizes = [8, 1], strides = [1, 1]} : vector<8x15xf32> to vector<8x1xf32>
    %841 = vector.broadcast %840 : vector<8x1xf32> to vector<8x256xf32>
    %842 = arith.mulf %841, %5 : vector<8x256xf32>
    %843 = vector.extract_strided_slice %839 {offsets = [0, 1], sizes = [8, 1], strides = [1, 1]} : vector<8x15xf32> to vector<8x1xf32>
    %844 = vector.broadcast %843 : vector<8x1xf32> to vector<8x256xf32>
    %845 = arith.mulf %844, %9 : vector<8x256xf32>
    %846 = arith.addf %842, %845 : vector<8x256xf32>
    %847 = vector.extract_strided_slice %839 {offsets = [0, 2], sizes = [8, 1], strides = [1, 1]} : vector<8x15xf32> to vector<8x1xf32>
    %848 = vector.broadcast %847 : vector<8x1xf32> to vector<8x256xf32>
    %849 = arith.mulf %848, %13 : vector<8x256xf32>
    %850 = arith.addf %846, %849 : vector<8x256xf32>
    %851 = vector.extract_strided_slice %839 {offsets = [0, 3], sizes = [8, 1], strides = [1, 1]} : vector<8x15xf32> to vector<8x1xf32>
    %852 = vector.broadcast %851 : vector<8x1xf32> to vector<8x256xf32>
    %853 = arith.mulf %852, %17 : vector<8x256xf32>
    %854 = arith.addf %850, %853 : vector<8x256xf32>
    %855 = vector.extract_strided_slice %839 {offsets = [0, 4], sizes = [8, 1], strides = [1, 1]} : vector<8x15xf32> to vector<8x1xf32>
    %856 = vector.broadcast %855 : vector<8x1xf32> to vector<8x256xf32>
    %857 = arith.mulf %856, %21 : vector<8x256xf32>
    %858 = arith.addf %854, %857 : vector<8x256xf32>
    %859 = vector.extract_strided_slice %839 {offsets = [0, 5], sizes = [8, 1], strides = [1, 1]} : vector<8x15xf32> to vector<8x1xf32>
    %860 = vector.broadcast %859 : vector<8x1xf32> to vector<8x256xf32>
    %861 = arith.mulf %860, %25 : vector<8x256xf32>
    %862 = arith.addf %858, %861 : vector<8x256xf32>
    %863 = vector.extract_strided_slice %839 {offsets = [0, 6], sizes = [8, 1], strides = [1, 1]} : vector<8x15xf32> to vector<8x1xf32>
    %864 = vector.broadcast %863 : vector<8x1xf32> to vector<8x256xf32>
    %865 = arith.mulf %864, %29 : vector<8x256xf32>
    %866 = arith.addf %862, %865 : vector<8x256xf32>
    %867 = vector.extract_strided_slice %839 {offsets = [0, 7], sizes = [8, 1], strides = [1, 1]} : vector<8x15xf32> to vector<8x1xf32>
    %868 = vector.broadcast %867 : vector<8x1xf32> to vector<8x256xf32>
    %869 = arith.mulf %868, %32 : vector<8x256xf32>
    %870 = arith.addf %866, %869 : vector<8x256xf32>
    %871 = vector.extract_strided_slice %839 {offsets = [0, 8], sizes = [8, 1], strides = [1, 1]} : vector<8x15xf32> to vector<8x1xf32>
    %872 = vector.broadcast %871 : vector<8x1xf32> to vector<8x256xf32>
    %873 = arith.mulf %872, %36 : vector<8x256xf32>
    %874 = arith.addf %870, %873 : vector<8x256xf32>
    %875 = vector.extract_strided_slice %839 {offsets = [0, 9], sizes = [8, 1], strides = [1, 1]} : vector<8x15xf32> to vector<8x1xf32>
    %876 = vector.broadcast %875 : vector<8x1xf32> to vector<8x256xf32>
    %877 = arith.mulf %876, %40 : vector<8x256xf32>
    %878 = arith.addf %874, %877 : vector<8x256xf32>
    %879 = vector.extract_strided_slice %839 {offsets = [0, 10], sizes = [8, 1], strides = [1, 1]} : vector<8x15xf32> to vector<8x1xf32>
    %880 = vector.broadcast %879 : vector<8x1xf32> to vector<8x256xf32>
    %881 = arith.mulf %880, %44 : vector<8x256xf32>
    %882 = arith.addf %878, %881 : vector<8x256xf32>
    %883 = vector.extract_strided_slice %839 {offsets = [0, 11], sizes = [8, 1], strides = [1, 1]} : vector<8x15xf32> to vector<8x1xf32>
    %884 = vector.broadcast %883 : vector<8x1xf32> to vector<8x256xf32>
    %885 = arith.mulf %884, %48 : vector<8x256xf32>
    %886 = arith.addf %882, %885 : vector<8x256xf32>
    %887 = vector.extract_strided_slice %839 {offsets = [0, 12], sizes = [8, 1], strides = [1, 1]} : vector<8x15xf32> to vector<8x1xf32>
    %888 = vector.broadcast %887 : vector<8x1xf32> to vector<8x256xf32>
    %889 = arith.mulf %888, %52 : vector<8x256xf32>
    %890 = arith.addf %886, %889 : vector<8x256xf32>
    %891 = vector.extract_strided_slice %839 {offsets = [0, 13], sizes = [8, 1], strides = [1, 1]} : vector<8x15xf32> to vector<8x1xf32>
    %892 = vector.broadcast %891 : vector<8x1xf32> to vector<8x256xf32>
    %893 = arith.mulf %892, %56 : vector<8x256xf32>
    %894 = arith.addf %890, %893 : vector<8x256xf32>
    %895 = vector.extract_strided_slice %839 {offsets = [0, 14], sizes = [8, 1], strides = [1, 1]} : vector<8x15xf32> to vector<8x1xf32>
    %896 = vector.broadcast %895 : vector<8x1xf32> to vector<8x256xf32>
    %897 = arith.mulf %896, %60 : vector<8x256xf32>
    %898 = arith.addf %894, %897 : vector<8x256xf32>
    %c176_i32 = arith.constant 176 : i32
    %899 = tpu.dynamic_rotate %898 by %c176_i32 dim 1 : vector<8x256xf32>, i32 -> vector<8x256xf32>
    %c27 = arith.constant 27 : index
    %c0_47 = arith.constant 0 : index
    %900 = vector.load %arg2[%c27, %c0_47] : memref<30x256xf32, #tpu.memory_space<vmem>>, vector<1x256xf32>
    %901 = vector.broadcast %900 : vector<1x256xf32> to vector<8x256xf32>
    %902 = arith.mulf %899, %901 : vector<8x256xf32>
    %903 = arith.addf %838, %902 : vector<8x256xf32>
    %c104 = arith.constant 104 : index
    %c0_48 = arith.constant 0 : index
    %904 = vector.load %arg3[%c104, %c0_48] : memref<120x15xf32, #tpu.memory_space<vmem>>, vector<8x15xf32>
    %905 = vector.extract_strided_slice %904 {offsets = [0, 0], sizes = [8, 1], strides = [1, 1]} : vector<8x15xf32> to vector<8x1xf32>
    %906 = vector.broadcast %905 : vector<8x1xf32> to vector<8x256xf32>
    %907 = arith.mulf %906, %5 : vector<8x256xf32>
    %908 = vector.extract_strided_slice %904 {offsets = [0, 1], sizes = [8, 1], strides = [1, 1]} : vector<8x15xf32> to vector<8x1xf32>
    %909 = vector.broadcast %908 : vector<8x1xf32> to vector<8x256xf32>
    %910 = arith.mulf %909, %9 : vector<8x256xf32>
    %911 = arith.addf %907, %910 : vector<8x256xf32>
    %912 = vector.extract_strided_slice %904 {offsets = [0, 2], sizes = [8, 1], strides = [1, 1]} : vector<8x15xf32> to vector<8x1xf32>
    %913 = vector.broadcast %912 : vector<8x1xf32> to vector<8x256xf32>
    %914 = arith.mulf %913, %13 : vector<8x256xf32>
    %915 = arith.addf %911, %914 : vector<8x256xf32>
    %916 = vector.extract_strided_slice %904 {offsets = [0, 3], sizes = [8, 1], strides = [1, 1]} : vector<8x15xf32> to vector<8x1xf32>
    %917 = vector.broadcast %916 : vector<8x1xf32> to vector<8x256xf32>
    %918 = arith.mulf %917, %17 : vector<8x256xf32>
    %919 = arith.addf %915, %918 : vector<8x256xf32>
    %920 = vector.extract_strided_slice %904 {offsets = [0, 4], sizes = [8, 1], strides = [1, 1]} : vector<8x15xf32> to vector<8x1xf32>
    %921 = vector.broadcast %920 : vector<8x1xf32> to vector<8x256xf32>
    %922 = arith.mulf %921, %21 : vector<8x256xf32>
    %923 = arith.addf %919, %922 : vector<8x256xf32>
    %924 = vector.extract_strided_slice %904 {offsets = [0, 5], sizes = [8, 1], strides = [1, 1]} : vector<8x15xf32> to vector<8x1xf32>
    %925 = vector.broadcast %924 : vector<8x1xf32> to vector<8x256xf32>
    %926 = arith.mulf %925, %25 : vector<8x256xf32>
    %927 = arith.addf %923, %926 : vector<8x256xf32>
    %928 = vector.extract_strided_slice %904 {offsets = [0, 6], sizes = [8, 1], strides = [1, 1]} : vector<8x15xf32> to vector<8x1xf32>
    %929 = vector.broadcast %928 : vector<8x1xf32> to vector<8x256xf32>
    %930 = arith.mulf %929, %29 : vector<8x256xf32>
    %931 = arith.addf %927, %930 : vector<8x256xf32>
    %932 = vector.extract_strided_slice %904 {offsets = [0, 7], sizes = [8, 1], strides = [1, 1]} : vector<8x15xf32> to vector<8x1xf32>
    %933 = vector.broadcast %932 : vector<8x1xf32> to vector<8x256xf32>
    %934 = arith.mulf %933, %32 : vector<8x256xf32>
    %935 = arith.addf %931, %934 : vector<8x256xf32>
    %936 = vector.extract_strided_slice %904 {offsets = [0, 8], sizes = [8, 1], strides = [1, 1]} : vector<8x15xf32> to vector<8x1xf32>
    %937 = vector.broadcast %936 : vector<8x1xf32> to vector<8x256xf32>
    %938 = arith.mulf %937, %36 : vector<8x256xf32>
    %939 = arith.addf %935, %938 : vector<8x256xf32>
    %940 = vector.extract_strided_slice %904 {offsets = [0, 9], sizes = [8, 1], strides = [1, 1]} : vector<8x15xf32> to vector<8x1xf32>
    %941 = vector.broadcast %940 : vector<8x1xf32> to vector<8x256xf32>
    %942 = arith.mulf %941, %40 : vector<8x256xf32>
    %943 = arith.addf %939, %942 : vector<8x256xf32>
    %944 = vector.extract_strided_slice %904 {offsets = [0, 10], sizes = [8, 1], strides = [1, 1]} : vector<8x15xf32> to vector<8x1xf32>
    %945 = vector.broadcast %944 : vector<8x1xf32> to vector<8x256xf32>
    %946 = arith.mulf %945, %44 : vector<8x256xf32>
    %947 = arith.addf %943, %946 : vector<8x256xf32>
    %948 = vector.extract_strided_slice %904 {offsets = [0, 11], sizes = [8, 1], strides = [1, 1]} : vector<8x15xf32> to vector<8x1xf32>
    %949 = vector.broadcast %948 : vector<8x1xf32> to vector<8x256xf32>
    %950 = arith.mulf %949, %48 : vector<8x256xf32>
    %951 = arith.addf %947, %950 : vector<8x256xf32>
    %952 = vector.extract_strided_slice %904 {offsets = [0, 12], sizes = [8, 1], strides = [1, 1]} : vector<8x15xf32> to vector<8x1xf32>
    %953 = vector.broadcast %952 : vector<8x1xf32> to vector<8x256xf32>
    %954 = arith.mulf %953, %52 : vector<8x256xf32>
    %955 = arith.addf %951, %954 : vector<8x256xf32>
    %956 = vector.extract_strided_slice %904 {offsets = [0, 13], sizes = [8, 1], strides = [1, 1]} : vector<8x15xf32> to vector<8x1xf32>
    %957 = vector.broadcast %956 : vector<8x1xf32> to vector<8x256xf32>
    %958 = arith.mulf %957, %56 : vector<8x256xf32>
    %959 = arith.addf %955, %958 : vector<8x256xf32>
    %960 = vector.extract_strided_slice %904 {offsets = [0, 14], sizes = [8, 1], strides = [1, 1]} : vector<8x15xf32> to vector<8x1xf32>
    %961 = vector.broadcast %960 : vector<8x1xf32> to vector<8x256xf32>
    %962 = arith.mulf %961, %60 : vector<8x256xf32>
    %963 = arith.addf %959, %962 : vector<8x256xf32>
    %c160_i32 = arith.constant 160 : i32
    %964 = tpu.dynamic_rotate %963 by %c160_i32 dim 1 : vector<8x256xf32>, i32 -> vector<8x256xf32>
    %c28 = arith.constant 28 : index
    %c0_49 = arith.constant 0 : index
    %965 = vector.load %arg2[%c28, %c0_49] : memref<30x256xf32, #tpu.memory_space<vmem>>, vector<1x256xf32>
    %966 = vector.broadcast %965 : vector<1x256xf32> to vector<8x256xf32>
    %967 = arith.mulf %964, %966 : vector<8x256xf32>
    %968 = arith.addf %903, %967 : vector<8x256xf32>
    %c112 = arith.constant 112 : index
    %c0_50 = arith.constant 0 : index
    %969 = vector.load %arg3[%c112, %c0_50] : memref<120x15xf32, #tpu.memory_space<vmem>>, vector<8x15xf32>
    %970 = vector.extract_strided_slice %969 {offsets = [0, 0], sizes = [8, 1], strides = [1, 1]} : vector<8x15xf32> to vector<8x1xf32>
    %971 = vector.broadcast %970 : vector<8x1xf32> to vector<8x256xf32>
    %972 = arith.mulf %971, %5 : vector<8x256xf32>
    %973 = vector.extract_strided_slice %969 {offsets = [0, 1], sizes = [8, 1], strides = [1, 1]} : vector<8x15xf32> to vector<8x1xf32>
    %974 = vector.broadcast %973 : vector<8x1xf32> to vector<8x256xf32>
    %975 = arith.mulf %974, %9 : vector<8x256xf32>
    %976 = arith.addf %972, %975 : vector<8x256xf32>
    %977 = vector.extract_strided_slice %969 {offsets = [0, 2], sizes = [8, 1], strides = [1, 1]} : vector<8x15xf32> to vector<8x1xf32>
    %978 = vector.broadcast %977 : vector<8x1xf32> to vector<8x256xf32>
    %979 = arith.mulf %978, %13 : vector<8x256xf32>
    %980 = arith.addf %976, %979 : vector<8x256xf32>
    %981 = vector.extract_strided_slice %969 {offsets = [0, 3], sizes = [8, 1], strides = [1, 1]} : vector<8x15xf32> to vector<8x1xf32>
    %982 = vector.broadcast %981 : vector<8x1xf32> to vector<8x256xf32>
    %983 = arith.mulf %982, %17 : vector<8x256xf32>
    %984 = arith.addf %980, %983 : vector<8x256xf32>
    %985 = vector.extract_strided_slice %969 {offsets = [0, 4], sizes = [8, 1], strides = [1, 1]} : vector<8x15xf32> to vector<8x1xf32>
    %986 = vector.broadcast %985 : vector<8x1xf32> to vector<8x256xf32>
    %987 = arith.mulf %986, %21 : vector<8x256xf32>
    %988 = arith.addf %984, %987 : vector<8x256xf32>
    %989 = vector.extract_strided_slice %969 {offsets = [0, 5], sizes = [8, 1], strides = [1, 1]} : vector<8x15xf32> to vector<8x1xf32>
    %990 = vector.broadcast %989 : vector<8x1xf32> to vector<8x256xf32>
    %991 = arith.mulf %990, %25 : vector<8x256xf32>
    %992 = arith.addf %988, %991 : vector<8x256xf32>
    %993 = vector.extract_strided_slice %969 {offsets = [0, 6], sizes = [8, 1], strides = [1, 1]} : vector<8x15xf32> to vector<8x1xf32>
    %994 = vector.broadcast %993 : vector<8x1xf32> to vector<8x256xf32>
    %995 = arith.mulf %994, %29 : vector<8x256xf32>
    %996 = arith.addf %992, %995 : vector<8x256xf32>
    %997 = vector.extract_strided_slice %969 {offsets = [0, 7], sizes = [8, 1], strides = [1, 1]} : vector<8x15xf32> to vector<8x1xf32>
    %998 = vector.broadcast %997 : vector<8x1xf32> to vector<8x256xf32>
    %999 = arith.mulf %998, %32 : vector<8x256xf32>
    %1000 = arith.addf %996, %999 : vector<8x256xf32>
    %1001 = vector.extract_strided_slice %969 {offsets = [0, 8], sizes = [8, 1], strides = [1, 1]} : vector<8x15xf32> to vector<8x1xf32>
    %1002 = vector.broadcast %1001 : vector<8x1xf32> to vector<8x256xf32>
    %1003 = arith.mulf %1002, %36 : vector<8x256xf32>
    %1004 = arith.addf %1000, %1003 : vector<8x256xf32>
    %1005 = vector.extract_strided_slice %969 {offsets = [0, 9], sizes = [8, 1], strides = [1, 1]} : vector<8x15xf32> to vector<8x1xf32>
    %1006 = vector.broadcast %1005 : vector<8x1xf32> to vector<8x256xf32>
    %1007 = arith.mulf %1006, %40 : vector<8x256xf32>
    %1008 = arith.addf %1004, %1007 : vector<8x256xf32>
    %1009 = vector.extract_strided_slice %969 {offsets = [0, 10], sizes = [8, 1], strides = [1, 1]} : vector<8x15xf32> to vector<8x1xf32>
    %1010 = vector.broadcast %1009 : vector<8x1xf32> to vector<8x256xf32>
    %1011 = arith.mulf %1010, %44 : vector<8x256xf32>
    %1012 = arith.addf %1008, %1011 : vector<8x256xf32>
    %1013 = vector.extract_strided_slice %969 {offsets = [0, 11], sizes = [8, 1], strides = [1, 1]} : vector<8x15xf32> to vector<8x1xf32>
    %1014 = vector.broadcast %1013 : vector<8x1xf32> to vector<8x256xf32>
    %1015 = arith.mulf %1014, %48 : vector<8x256xf32>
    %1016 = arith.addf %1012, %1015 : vector<8x256xf32>
    %1017 = vector.extract_strided_slice %969 {offsets = [0, 12], sizes = [8, 1], strides = [1, 1]} : vector<8x15xf32> to vector<8x1xf32>
    %1018 = vector.broadcast %1017 : vector<8x1xf32> to vector<8x256xf32>
    %1019 = arith.mulf %1018, %52 : vector<8x256xf32>
    %1020 = arith.addf %1016, %1019 : vector<8x256xf32>
    %1021 = vector.extract_strided_slice %969 {offsets = [0, 13], sizes = [8, 1], strides = [1, 1]} : vector<8x15xf32> to vector<8x1xf32>
    %1022 = vector.broadcast %1021 : vector<8x1xf32> to vector<8x256xf32>
    %1023 = arith.mulf %1022, %56 : vector<8x256xf32>
    %1024 = arith.addf %1020, %1023 : vector<8x256xf32>
    %1025 = vector.extract_strided_slice %969 {offsets = [0, 14], sizes = [8, 1], strides = [1, 1]} : vector<8x15xf32> to vector<8x1xf32>
    %1026 = vector.broadcast %1025 : vector<8x1xf32> to vector<8x256xf32>
    %1027 = arith.mulf %1026, %60 : vector<8x256xf32>
    %1028 = arith.addf %1024, %1027 : vector<8x256xf32>
    %c144_i32 = arith.constant 144 : i32
    %1029 = tpu.dynamic_rotate %1028 by %c144_i32 dim 1 : vector<8x256xf32>, i32 -> vector<8x256xf32>
    %c29 = arith.constant 29 : index
    %c0_51 = arith.constant 0 : index
    %1030 = vector.load %arg2[%c29, %c0_51] : memref<30x256xf32, #tpu.memory_space<vmem>>, vector<1x256xf32>
    %1031 = vector.broadcast %1030 : vector<1x256xf32> to vector<8x256xf32>
    %1032 = arith.mulf %1029, %1031 : vector<8x256xf32>
    %1033 = arith.addf %968, %1032 : vector<8x256xf32>
    %c0_52 = arith.constant 0 : index
    %c0_53 = arith.constant 0 : index
    %1034 = vector.load %arg4[%c0_52, %c0_53] : memref<8x1xf32, #tpu.memory_space<vmem>>, vector<8x1xf32>
    %1035 = vector.broadcast %1034 : vector<8x1xf32> to vector<8x256xf32>
    %1036 = arith.mulf %1033, %1035 : vector<8x256xf32>
    %c0_54 = arith.constant 0 : index
    %c0_55 = arith.constant 0 : index
    %1037 = vector.load %arg5[%c0_54, %c0_55] : memref<8x1xf32, #tpu.memory_space<vmem>>, vector<8x1xf32>
    %1038 = vector.broadcast %1037 : vector<8x1xf32> to vector<8x256xf32>
    %1039 = arith.addf %1036, %1038 : vector<8x256xf32>
    %c1_i32_56 = arith.constant 1 : i32
    %1040 = tpu.dynamic_rotate %1039 by %c1_i32_56 dim 1 : vector<8x256xf32>, i32 -> vector<8x256xf32>
    %c6_57 = arith.constant 6 : index
    %c0_58 = arith.constant 0 : index
    %1041 = vector.load %arg2[%c6_57, %c0_58] : memref<30x256xf32, #tpu.memory_space<vmem>>, vector<1x256xf32>
    %1042 = vector.broadcast %1041 : vector<1x256xf32> to vector<8x256xf32>
    %1043 = arith.mulf %1040, %1042 : vector<8x256xf32>
    %c255_i32_59 = arith.constant 255 : i32
    %1044 = tpu.dynamic_rotate %1039 by %c255_i32_59 dim 1 : vector<8x256xf32>, i32 -> vector<8x256xf32>
    %c8_60 = arith.constant 8 : index
    %c0_61 = arith.constant 0 : index
    %1045 = vector.load %arg2[%c8_60, %c0_61] : memref<30x256xf32, #tpu.memory_space<vmem>>, vector<1x256xf32>
    %1046 = vector.broadcast %1045 : vector<1x256xf32> to vector<8x256xf32>
    %1047 = arith.mulf %1044, %1046 : vector<8x256xf32>
    %1048 = arith.addf %1039, %1043 : vector<8x256xf32>
    %1049 = arith.addf %1048, %1047 : vector<8x256xf32>
    %c16_i32_62 = arith.constant 16 : i32
    %1050 = tpu.dynamic_rotate %1049 by %c16_i32_62 dim 1 : vector<8x256xf32>, i32 -> vector<8x256xf32>
    %c21_63 = arith.constant 21 : index
    %c0_64 = arith.constant 0 : index
    %1051 = vector.load %arg2[%c21_63, %c0_64] : memref<30x256xf32, #tpu.memory_space<vmem>>, vector<1x256xf32>
    %1052 = vector.broadcast %1051 : vector<1x256xf32> to vector<8x256xf32>
    %1053 = arith.mulf %1050, %1052 : vector<8x256xf32>
    %c240_i32_65 = arith.constant 240 : i32
    %1054 = tpu.dynamic_rotate %1049 by %c240_i32_65 dim 1 : vector<8x256xf32>, i32 -> vector<8x256xf32>
    %c23_66 = arith.constant 23 : index
    %c0_67 = arith.constant 0 : index
    %1055 = vector.load %arg2[%c23_66, %c0_67] : memref<30x256xf32, #tpu.memory_space<vmem>>, vector<1x256xf32>
    %1056 = vector.broadcast %1055 : vector<1x256xf32> to vector<8x256xf32>
    %1057 = arith.mulf %1054, %1056 : vector<8x256xf32>
    %1058 = arith.addf %1049, %1053 : vector<8x256xf32>
    %1059 = arith.addf %1058, %1057 : vector<8x256xf32>
    %cst = arith.constant 0.111111112 : f32
    %1060 = vector.broadcast %cst : f32 to vector<8x256xf32>
    %1061 = arith.mulf %1059, %1060 : vector<8x256xf32>
    %1062 = arith.subf %1039, %1061 : vector<8x256xf32>
    %c0_68 = arith.constant 0 : index
    %c0_69 = arith.constant 0 : index
    %1063 = vector.load %arg6[%c0_68, %c0_69] : memref<8x8xf32, #tpu.memory_space<vmem>>, vector<8x8xf32>
    %cst_70 = arith.constant dense<0.000000e+00> : vector<8x256xf32>
    %1064 = tpu.matmul %1063, %1062, %cst_70 {dimension_numbers = #tpu.dot_dimension_numbers<[1], [0], [0], [1], [0, 0, 1, 1], [], []>} : vector<8x8xf32>, vector<8x256xf32>, vector<8x256xf32> -> vector<8x256xf32>
    %c0_71 = arith.constant 0 : index
    %c0_72 = arith.constant 0 : index
    %1065 = vector.load %arg7[%c0_71, %c0_72] : memref<8x1xf32, #tpu.memory_space<vmem>>, vector<8x1xf32>
    %1066 = vector.broadcast %1065 : vector<8x1xf32> to vector<8x256xf32>
    %1067 = arith.mulf %1064, %1066 : vector<8x256xf32>
    %c0_73 = arith.constant 0 : index
    %c0_74 = arith.constant 0 : index
    %1068 = vector.load %arg8[%c0_73, %c0_74] : memref<8x1xf32, #tpu.memory_space<vmem>>, vector<8x1xf32>
    %1069 = vector.broadcast %1068 : vector<8x1xf32> to vector<8x256xf32>
    %1070 = arith.addf %1067, %1069 : vector<8x256xf32>
    %1071 = arith.negf %1070 : vector<8x256xf32>
    %1072 = math.exp %1071 : vector<8x256xf32>
    %cst_75 = arith.constant 1.000000e+00 : f32
    %1073 = vector.broadcast %cst_75 : f32 to vector<8x256xf32>
    %1074 = arith.addf %1073, %1072 : vector<8x256xf32>
    %1075 = arith.divf %1073, %1074 : vector<8x256xf32>
    %c0_76 = arith.constant 0 : index
    %c0_77 = arith.constant 0 : index
    %c0_78 = arith.constant 0 : index
    %1076 = vector.load %arg1[%c0_76, %c0_77, %c0_78] : memref<1x8x256xf32, #tpu.memory_space<vmem>>, vector<1x8x256xf32>
    %1077 = vector.shape_cast %1076 : vector<1x8x256xf32> to vector<8x256xf32>
    %1078 = arith.mulf %1075, %1077 : vector<8x256xf32>
    %c0_79 = arith.constant 0 : index
    %c0_80 = arith.constant 0 : index
    %c0_81 = arith.constant 0 : index
    %1079 = vector.load %arg9[%c0_79, %c0_80, %c0_81] : memref<1x8x256xf32, #tpu.memory_space<vmem>>, vector<1x8x256xf32>
    %1080 = vector.shape_cast %1079 : vector<1x8x256xf32> to vector<8x256xf32>
    %1081 = vector.shape_cast %1078 : vector<8x256xf32> to vector<1x8x256xf32>
    tpu.vector_store %arg9[%c0_79, %c0_80, %c0_81], %1081 {strides = array<i32>} : memref<1x8x256xf32, #tpu.memory_space<vmem>>, vector<1x8x256xf32>,
    return
  }
  func.func @transform_0(%arg0: i32) -> (i32, i32, i32) {
    %c0_i32 = arith.constant 0 : i32
    %c0_i32_0 = arith.constant 0 : i32
    %c0_i32_1 = arith.constant 0 : i32
    return %arg0, %c0_i32, %c0_i32_0 : i32, i32, i32
  }
  func.func @transform_1(%arg0: i32) -> (i32, i32) {
    %c0_i32 = arith.constant 0 : i32
    %c0_i32_0 = arith.constant 0 : i32
    %c0_i32_1 = arith.constant 0 : i32
    return %c0_i32, %c0_i32_0 : i32, i32
  }
  func.func @transform_2(%arg0: i32) -> (i32, i32) {
    %c0_i32 = arith.constant 0 : i32
    %c0_i32_0 = arith.constant 0 : i32
    %c0_i32_1 = arith.constant 0 : i32
    return %c0_i32, %c0_i32_0 : i32, i32
  }
  func.func @transform_3(%arg0: i32) -> (i32, i32) {
    %c0_i32 = arith.constant 0 : i32
    %c0_i32_0 = arith.constant 0 : i32
    %c0_i32_1 = arith.constant 0 : i32
    return %c0_i32, %c0_i32_0 : i32, i32
  }
  func.func @transform_4(%arg0: i32) -> (i32, i32) {
    %c0_i32 = arith.constant 0 : i32
    %c0_i32_0 = arith.constant 0 : i32
    %c0_i32_1 = arith.constant 0 : i32
    return %c0_i32, %c0_i32_0 : i32, i32
  }
  func.func @transform_5(%arg0: i32) -> (i32, i32) {
    %c0_i32 = arith.constant 0 : i32
    %c0_i32_0 = arith.constant 0 : i32
    %c0_i32_1 = arith.constant 0 : i32
    return %c0_i32, %c0_i32_0 : i32, i32
  }
  func.func @transform_6(%arg0: i32) -> (i32, i32) {
    %c0_i32 = arith.constant 0 : i32
    %c0_i32_0 = arith.constant 0 : i32
    %c0_i32_1 = arith.constant 0 : i32
    return %c0_i32, %c0_i32_0 : i32, i32
  }
  func.func @transform_7(%arg0: i32) -> (i32, i32) {
    %c0_i32 = arith.constant 0 : i32
    %c0_i32_0 = arith.constant 0 : i32
    %c0_i32_1 = arith.constant 0 : i32
    return %c0_i32, %c0_i32_0 : i32, i32
  }
  func.func @transform_8(%arg0: i32) -> (i32, i32, i32) {
    %c0_i32 = arith.constant 0 : i32
    %c0_i32_0 = arith.constant 0 : i32
    %c0_i32_1 = arith.constant 0 : i32
    return %arg0, %c0_i32, %c0_i32_0 : i32, i32, i32
  }
}

</mosaic_0001>

<llo_original>
// kernel: tpu_custom_call.1
$region0: #{tpu_custom_call.1}
  #allocation0 [shape = 'u32[]', space=smem, size = 0x4, offset = 0x4, fixed_abs, tag = 'smem constant byte address 0x4 - core index']
  #allocation1 [shape = 'u32[144,128]{1,0:T(1,128)}', space=vmem, size = 0x12000, scoped, tag = 'internal scratch']
  %s0 = inlined_call_operand.vmem [shape: f32[1,8,256], index: 0, kind: input, shape index: {}]
  %s1 = inlined_call_operand.vmem [shape: f32[30,256], index: 1, kind: input, shape index: {}]
  %s2 = inlined_call_operand.vmem [shape: f32[120,15], index: 2, kind: input, shape index: {}]
  %s3 = inlined_call_operand.vmem [shape: f32[8,1], index: 3, kind: input, shape index: {}]
  %s4 = inlined_call_operand.vmem [shape: f32[8,1], index: 4, kind: input, shape index: {}]
  %s5 = inlined_call_operand.vmem [shape: f32[8,8], index: 5, kind: input, shape index: {}]
  %s6 = inlined_call_operand.vmem [shape: f32[8,1], index: 6, kind: input, shape index: {}]
  %s7 = inlined_call_operand.vmem [shape: f32[8,1], index: 7, kind: input, shape index: {}]
  %s8 = inlined_call_operand.hbm [shape: f32[1,8,256], index: 8, kind: output, shape index: {}]
  %s9 = sld [smem:[#allocation0]]
  $region42: #{tpu_custom_call.1} parent=0
    _
  %s11 = ssub.s32 1, %s9
  %s12 = scalar_select 0, %s11, %s9
  $region1: #{tpu_custom_call.1} parent=0
    #allocation2 [shape = 'u8[8192]{0}', space=vmem, size = 0x2000, scoped, tag = 'output window, operand 0, single buffered']
    #allocation3 [shape = 's32[1]{0}', space=sflag, size = 0x4, scoped, tag = 'scoped memory for tpu_custom_call.1']
    %13 = vsyncpa [#allocation3], 0
    // Predicated region
    $region2: #{tpu_custom_call.1} parent=1 // pred_check
      _
    $region3: #{tpu_custom_call.1} parent=1 // pred_check_branch
      %15 = sbr.rel (0) target = $region5
    $region4: #{tpu_custom_call.1} parent=1 // pred_region
      _
    $region5: #{tpu_custom_call.1} parent=1 // pred_fallthru
      _
    // Predicated region
    $region6: #{tpu_custom_call.1} parent=1 // pred_check
      _
    $region7: #{tpu_custom_call.1} parent=1 // pred_check_branch
      %17 = sbr.rel (0) target = $region9
    $region8: #{tpu_custom_call.1} parent=1 // pred_region
      _
    $region9: #{tpu_custom_call.1} parent=1 // pred_fallthru
      _
    // Predicated region
    $region10: #{tpu_custom_call.1} parent=1 // pred_check
      _
    $region11: #{tpu_custom_call.1} parent=1 // pred_check_branch
      %19 = sbr.rel (0) target = $region13
    $region12: #{tpu_custom_call.1} parent=1 // pred_region
      _
    $region13: #{tpu_custom_call.1} parent=1 // pred_fallthru
      _
    // Predicated region
    $region14: #{tpu_custom_call.1} parent=1 // pred_check
      _
    $region15: #{tpu_custom_call.1} parent=1 // pred_check_branch
      %21 = sbr.rel (0) target = $region17
    $region16: #{tpu_custom_call.1} parent=1 // pred_region
      _
    $region17: #{tpu_custom_call.1} parent=1 // pred_fallthru
      _
    // Predicated region
    $region18: #{tpu_custom_call.1} parent=1 // pred_check
      _
    $region19: #{tpu_custom_call.1} parent=1 // pred_check_branch
      %23 = sbr.rel (0) target = $region21
    $region20: #{tpu_custom_call.1} parent=1 // pred_region
      _
    $region21: #{tpu_custom_call.1} parent=1 // pred_fallthru
      _
    // Predicated region
    $region22: #{tpu_custom_call.1} parent=1 // pred_check
      _
    $region23: #{tpu_custom_call.1} parent=1 // pred_check_branch
      %25 = sbr.rel (0) target = $region25
    $region24: #{tpu_custom_call.1} parent=1 // pred_region
      _
    $region25: #{tpu_custom_call.1} parent=1 // pred_fallthru
      _
    // Predicated region
    $region26: #{tpu_custom_call.1} parent=1 // pred_check
      _
    $region27: #{tpu_custom_call.1} parent=1 // pred_check_branch
      %27 = sbr.rel (0) target = $region29
    $region28: #{tpu_custom_call.1} parent=1 // pred_region
      _
    $region29: #{tpu_custom_call.1} parent=1 // pred_fallthru
      _
    // Predicated region
    $region30: #{tpu_custom_call.1} parent=1 // pred_check
      _
    $region31: #{tpu_custom_call.1} parent=1 // pred_check_branch
      %29 = sbr.rel (0) target = $region33
    $region32: #{tpu_custom_call.1} parent=1 // pred_region
      _
    $region33: #{tpu_custom_call.1} parent=1 // pred_fallthru
      _
    %v30 = vld [vmem:[%s0] sm:$0xff]
    %v31 = vld [vmem:[%s0 + $0x8] sm:$0xff]
    %32 = vrot.lane.b32.xlu0 %v30, 7
    %v33 = vpop.permute.xlu0 %32
    %34 = vrot.lane.b32.xlu0 %v31, 7
    %v35 = vpop.permute.xlu0 %34
    %v36 = vlaneseq
    %v37 = vand.u32 %v36, 127
    %vm38 = vcmp.lt.s32.totalorder %v37, 7
    %v39 = vsel %vm38, %v33, %v35
    %v40 = vsel %vm38, %v35, %v33
    %v41 = vld [vmem:[%s1] ss:$8 sm:$0x3]
    %v43 = vlaneseq
    %v44 = vshrl.u32 %v43, 7
    %v45 = vsub.s32 0, %v44
    %v46 = vrot.slane %v41, %v45
    %v47 = vlaneseq
    %v48 = vshrl.u32 %v47, 7
    %v49 = vsub.s32 1, %v48
    %v50 = vrot.slane %v41, %v49
    %v53 = vmul.f32 %v40, %v46
    %v54 = vmul.f32 %v39, %v50
    %55 = vrot.lane.b32.xlu0 %v30, 6
    %v56 = vpop.permute.xlu0 %55
    %57 = vrot.lane.b32.xlu0 %v31, 6
    %v58 = vpop.permute.xlu0 %57
    %vm59 = vcmp.lt.s32.totalorder %v37, 6
    %v60 = vsel %vm59, %v56, %v58
    %v61 = vsel %vm59, %v58, %v56
    %s62 = scalar_lea.vmem %s1, 1
    %v63 = vld [vmem:[%s62] ss:$8 sm:$0x3]
    %v65 = vlaneseq
    %v66 = vshrl.u32 %v65, 7
    %v67 = vsub.s32 0, %v66
    %v68 = vrot.slane %v63, %v67
    %v69 = vlaneseq
    %v70 = vshrl.u32 %v69, 7
    %v71 = vsub.s32 1, %v70
    %v72 = vrot.slane %v63, %v71
    %v75 = vmul.f32 %v61, %v68
    %v76 = vmul.f32 %v60, %v72
    %77 = vrot.lane.b32.xlu0 %v30, 5
    %v78 = vpop.permute.xlu0 %77
    %79 = vrot.lane.b32.xlu0 %v31, 5
    %v80 = vpop.permute.xlu0 %79
    %vm81 = vcmp.lt.s32.totalorder %v37, 5
    %v82 = vsel %vm81, %v78, %v80
    %v83 = vsel %vm81, %v80, %v78
    %s84 = scalar_lea.vmem %s1, 2
    %v85 = vld [vmem:[%s84] ss:$8 sm:$0x3]
    %v87 = vlaneseq
    %v88 = vshrl.u32 %v87, 7
    %v89 = vsub.s32 0, %v88
    %v90 = vrot.slane %v85, %v89
    %v91 = vlaneseq
    %v92 = vshrl.u32 %v91, 7
    %v93 = vsub.s32 1, %v92
    %v94 = vrot.slane %v85, %v93
    %v97 = vmul.f32 %v83, %v90
    %v98 = vmul.f32 %v82, %v94
    %99 = vrot.lane.b32.xlu0 %v30, 4
    %v100 = vpop.permute.xlu0 %99
    %101 = vrot.lane.b32.xlu0 %v31, 4
    %v102 = vpop.permute.xlu0 %101
    %vm103 = vcmp.lt.s32.totalorder %v37, 4
    %v104 = vsel %vm103, %v100, %v102
    %v105 = vsel %vm103, %v102, %v100
    %s106 = scalar_lea.vmem %s1, 3
    %v107 = vld [vmem:[%s106] ss:$8 sm:$0x3]
    %v109 = vlaneseq
    %v110 = vshrl.u32 %v109, 7
    %v111 = vsub.s32 0, %v110
    %v112 = vrot.slane %v107, %v111
    %v113 = vlaneseq
    %v114 = vshrl.u32 %v113, 7
    %v115 = vsub.s32 1, %v114
    %v116 = vrot.slane %v107, %v115
    %v119 = vmul.f32 %v105, %v112
    %v120 = vmul.f32 %v104, %v116
    %121 = vrot.lane.b32.xlu0 %v30, 3
    %v122 = vpop.permute.xlu0 %121
    %123 = vrot.lane.b32.xlu0 %v31, 3
    %v124 = vpop.permute.xlu0 %123
    %vm125 = vcmp.lt.s32.totalorder %v37, 3
    %v126 = vsel %vm125, %v122, %v124
    %v127 = vsel %vm125, %v124, %v122
    %s128 = scalar_lea.vmem %s1, 4
    %v129 = vld [vmem:[%s128] ss:$8 sm:$0x3]
    %v131 = vlaneseq
    %v132 = vshrl.u32 %v131, 7
    %v133 = vsub.s32 0, %v132
    %v134 = vrot.slane %v129, %v133
    %v135 = vlaneseq
    %v136 = vshrl.u32 %v135, 7
    %v137 = vsub.s32 1, %v136
    %v138 = vrot.slane %v129, %v137
    %v141 = vmul.f32 %v127, %v134
    %v142 = vmul.f32 %v126, %v138
    %143 = vrot.lane.b32.xlu0 %v30, 2
    %v144 = vpop.permute.xlu0 %143
    %145 = vrot.lane.b32.xlu0 %v31, 2
    %v146 = vpop.permute.xlu0 %145
    %vm147 = vcmp.lt.s32.totalorder %v37, 2
    %v148 = vsel %vm147, %v144, %v146
    %v149 = vsel %vm147, %v146, %v144
    %s150 = scalar_lea.vmem %s1, 5
    %v151 = vld [vmem:[%s150] ss:$8 sm:$0x3]
    %v153 = vlaneseq
    %v154 = vshrl.u32 %v153, 7
    %v155 = vsub.s32 0, %v154
    %v156 = vrot.slane %v151, %v155
    %v157 = vlaneseq
    %v158 = vshrl.u32 %v157, 7
    %v159 = vsub.s32 1, %v158
    %v160 = vrot.slane %v151, %v159
    %v163 = vmul.f32 %v149, %v156
    %v164 = vmul.f32 %v148, %v160
    %165 = vrot.lane.b32.xlu0 %v30, 1
    %v166 = vpop.permute.xlu0 %165
    %167 = vrot.lane.b32.xlu0 %v31, 1
    %v168 = vpop.permute.xlu0 %167
    %vm169 = vcmp.lt.s32.totalorder %v37, 1
    %v170 = vsel %vm169, %v166, %v168
    %v171 = vsel %vm169, %v168, %v166
    %s172 = scalar_lea.vmem %s1, 6
    %v173 = vld [vmem:[%s172] ss:$8 sm:$0x3]
    %v175 = vlaneseq
    %v176 = vshrl.u32 %v175, 7
    %v177 = vsub.s32 0, %v176
    %v178 = vrot.slane %v173, %v177
    %v179 = vlaneseq
    %v180 = vshrl.u32 %v179, 7
    %v181 = vsub.s32 1, %v180
    %v182 = vrot.slane %v173, %v181
    %v185 = vmul.f32 %v171, %v178
    %v186 = vmul.f32 %v170, %v182
    %s187 = scalar_lea.vmem %s1, 7
    %v188 = vld [vmem:[%s187] ss:$8 sm:$0x3]
    %v190 = vlaneseq
    %v191 = vshrl.u32 %v190, 7
    %v192 = vsub.s32 0, %v191
    %v193 = vrot.slane %v188, %v192
    %v194 = vlaneseq
    %v195 = vshrl.u32 %v194, 7
    %v196 = vsub.s32 1, %v195
    %v197 = vrot.slane %v188, %v196
    %v200 = vmul.f32 %v30, %v193
    %v201 = vmul.f32 %v31, %v197
    %202 = vrot.lane.b32.xlu0 %v30, 127
    %v203 = vpop.permute.xlu0 %202
    %204 = vrot.lane.b32.xlu0 %v31, 127
    %v205 = vpop.permute.xlu0 %204
    %vm206 = vcmp.lt.s32.totalorder %v37, 127
    %v207 = vsel %vm206, %v203, %v205
    %v208 = vsel %vm206, %v205, %v203
    %s209 = scalar_lea.vmem %s1, 16
    %v210 = vld [vmem:[%s209] ss:$8 sm:$0x3]
    %v212 = vlaneseq
    %v213 = vshrl.u32 %v212, 7
    %v214 = vsub.s32 0, %v213
    %v215 = vrot.slane %v210, %v214
    %v216 = vlaneseq
    %v217 = vshrl.u32 %v216, 7
    %v218 = vsub.s32 1, %v217
    %v219 = vrot.slane %v210, %v218
    %v222 = vmul.f32 %v207, %v215
    %v223 = vmul.f32 %v208, %v219
    %224 = vrot.lane.b32.xlu0 %v30, 126
    %v225 = vpop.permute.xlu0 %224
    %226 = vrot.lane.b32.xlu0 %v31, 126
    %v227 = vpop.permute.xlu0 %226
    %vm228 = vcmp.lt.s32.totalorder %v37, 126
    %v229 = vsel %vm228, %v225, %v227
    %v230 = vsel %vm228, %v227, %v225
    %s231 = scalar_lea.vmem %s1, 17
    %v232 = vld [vmem:[%s231] ss:$8 sm:$0x3]
    %v234 = vlaneseq
    %v235 = vshrl.u32 %v234, 7
    %v236 = vsub.s32 0, %v235
    %v237 = vrot.slane %v232, %v236
    %v238 = vlaneseq
    %v239 = vshrl.u32 %v238, 7
    %v240 = vsub.s32 1, %v239
    %v241 = vrot.slane %v232, %v240
    %v244 = vmul.f32 %v229, %v237
    %v245 = vmul.f32 %v230, %v241
    %246 = vrot.lane.b32.xlu0 %v30, 125
    %v247 = vpop.permute.xlu0 %246
    %248 = vrot.lane.b32.xlu0 %v31, 125
    %v249 = vpop.permute.xlu0 %248
    %vm250 = vcmp.lt.s32.totalorder %v37, 125
    %v251 = vsel %vm250, %v247, %v249
    %v252 = vsel %vm250, %v249, %v247
    %s253 = scalar_lea.vmem %s1, 18
    %v254 = vld [vmem:[%s253] ss:$8 sm:$0x3]
    %v256 = vlaneseq
    %v257 = vshrl.u32 %v256, 7
    %v258 = vsub.s32 0, %v257
    %v259 = vrot.slane %v254, %v258
    %v260 = vlaneseq
    %v261 = vshrl.u32 %v260, 7
    %v262 = vsub.s32 1, %v261
    %v263 = vrot.slane %v254, %v262
    %v266 = vmul.f32 %v251, %v259
    %v267 = vmul.f32 %v252, %v263
    %268 = vrot.lane.b32.xlu0 %v30, 124
    %v269 = vpop.permute.xlu0 %268
    %270 = vrot.lane.b32.xlu0 %v31, 124
    %v271 = vpop.permute.xlu0 %270
    %vm272 = vcmp.lt.s32.totalorder %v37, 124
    %v273 = vsel %vm272, %v269, %v271
    %v274 = vsel %vm272, %v271, %v269
    %s275 = scalar_lea.vmem %s1, 19
    %v276 = vld [vmem:[%s275] ss:$8 sm:$0x3]
    %v278 = vlaneseq
    %v279 = vshrl.u32 %v278, 7
    %v280 = vsub.s32 0, %v279
    %v281 = vrot.slane %v276, %v280
    %v282 = vlaneseq
    %v283 = vshrl.u32 %v282, 7
    %v284 = vsub.s32 1, %v283
    %v285 = vrot.slane %v276, %v284
    %v288 = vmul.f32 %v273, %v281
    %v289 = vmul.f32 %v274, %v285
    %290 = vrot.lane.b32.xlu0 %v30, 123
    %v291 = vpop.permute.xlu0 %290
    %292 = vrot.lane.b32.xlu0 %v31, 123
    %v293 = vpop.permute.xlu0 %292
    %vm294 = vcmp.lt.s32.totalorder %v37, 123
    %v295 = vsel %vm294, %v291, %v293
    %v296 = vsel %vm294, %v293, %v291
    %s297 = scalar_lea.vmem %s1, 20
    %v298 = vld [vmem:[%s297] ss:$8 sm:$0x3]
    %v300 = vlaneseq
    %v301 = vshrl.u32 %v300, 7
    %v302 = vsub.s32 0, %v301
    %v303 = vrot.slane %v298, %v302
    %v304 = vlaneseq
    %v305 = vshrl.u32 %v304, 7
    %v306 = vsub.s32 1, %v305
    %v307 = vrot.slane %v298, %v306
    %v310 = vmul.f32 %v295, %v303
    %v311 = vmul.f32 %v296, %v307
    %312 = vrot.lane.b32.xlu0 %v30, 122
    %v313 = vpop.permute.xlu0 %312
    %314 = vrot.lane.b32.xlu0 %v31, 122
    %v315 = vpop.permute.xlu0 %314
    %vm316 = vcmp.lt.s32.totalorder %v37, 122
    %v317 = vsel %vm316, %v313, %v315
    %v318 = vsel %vm316, %v315, %v313
    %s319 = scalar_lea.vmem %s1, 21
    %v320 = vld [vmem:[%s319] ss:$8 sm:$0x3]
    %v322 = vlaneseq
    %v323 = vshrl.u32 %v322, 7
    %v324 = vsub.s32 0, %v323
    %v325 = vrot.slane %v320, %v324
    %v326 = vlaneseq
    %v327 = vshrl.u32 %v326, 7
    %v328 = vsub.s32 1, %v327
    %v329 = vrot.slane %v320, %v328
    %v332 = vmul.f32 %v317, %v325
    %v333 = vmul.f32 %v318, %v329
    %334 = vrot.lane.b32.xlu0 %v30, 121
    %v335 = vpop.permute.xlu0 %334
    %336 = vrot.lane.b32.xlu0 %v31, 121
    %v337 = vpop.permute.xlu0 %336
    %vm338 = vcmp.lt.s32.totalorder %v37, 121
    %v339 = vsel %vm338, %v335, %v337
    %v340 = vsel %vm338, %v337, %v335
    %s341 = scalar_lea.vmem %s1, 22
    %v342 = vld [vmem:[%s341] ss:$8 sm:$0x3]
    %v344 = vlaneseq
    %v345 = vshrl.u32 %v344, 7
    %v346 = vsub.s32 0, %v345
    %v347 = vrot.slane %v342, %v346
    %v348 = vlaneseq
    %v349 = vshrl.u32 %v348, 7
    %v350 = vsub.s32 1, %v349
    %v351 = vrot.slane %v342, %v350
    %v354 = vmul.f32 %v339, %v347
    %v355 = vmul.f32 %v340, %v351
    %v356 = vld [vmem:[%s2] sm:$0xff]
    %358 = vset.pattern.permute.xlu0 0
    %359 = vperm.xlu0 %358, %v356
    %v360 = vpop.permute.xlu0 %359
    %v362 = vmul.f32 %v360, %v53
    %v363 = vmul.f32 %v360, %v54
    %364 = vset.pattern.permute.xlu0 1
    %365 = vperm.xlu0 %364, %v356
    %v366 = vpop.permute.xlu0 %365
    %v368 = vmul.f32 %v366, %v75
    %v369 = vmul.f32 %v366, %v76
    %v370 = vadd.f32 %v362, %v368
    %v371 = vadd.f32 %v363, %v369
    %372 = vset.pattern.permute.xlu0 2
    %373 = vperm.xlu0 %372, %v356
    %v374 = vpop.permute.xlu0 %373
    %v376 = vmul.f32 %v374, %v97
    %v377 = vmul.f32 %v374, %v98
    %v378 = vadd.f32 %v370, %v376
    %v379 = vadd.f32 %v371, %v377
    %380 = vset.pattern.permute.xlu0 3
    %381 = vperm.xlu0 %380, %v356
    %v382 = vpop.permute.xlu0 %381
    %v384 = vmul.f32 %v382, %v119
    %v385 = vmul.f32 %v382, %v120
    %v386 = vadd.f32 %v378, %v384
    %v387 = vadd.f32 %v379, %v385
    %388 = vset.pattern.permute.xlu0 4
    %389 = vperm.xlu0 %388, %v356
    %v390 = vpop.permute.xlu0 %389
    %v392 = vmul.f32 %v390, %v141
    %v393 = vmul.f32 %v390, %v142
    %v394 = vadd.f32 %v386, %v392
    %v395 = vadd.f32 %v387, %v393
    %396 = vset.pattern.permute.xlu0 5
    %397 = vperm.xlu0 %396, %v356
    %v398 = vpop.permute.xlu0 %397
    %v400 = vmul.f32 %v398, %v163
    %v401 = vmul.f32 %v398, %v164
    %v402 = vadd.f32 %v394, %v400
    %v403 = vadd.f32 %v395, %v401
    %404 = vset.pattern.permute.xlu0 6
    %405 = vperm.xlu0 %404, %v356
    %v406 = vpop.permute.xlu0 %405
    %v408 = vmul.f32 %v406, %v185
    %v409 = vmul.f32 %v406, %v186
    %v410 = vadd.f32 %v402, %v408
    %v411 = vadd.f32 %v403, %v409
    %412 = vset.pattern.permute.xlu0 7
    %413 = vperm.xlu0 %412, %v356
    %v414 = vpop.permute.xlu0 %413
    %v416 = vmul.f32 %v414, %v200
    %v417 = vmul.f32 %v414, %v201
    %v418 = vadd.f32 %v410, %v416
    %v419 = vadd.f32 %v411, %v417
    %420 = vset.pattern.permute.xlu0 8
    %421 = vperm.xlu0 %420, %v356
    %v422 = vpop.permute.xlu0 %421
    %v424 = vmul.f32 %v422, %v222
    %v425 = vmul.f32 %v422, %v223
    %v426 = vadd.f32 %v418, %v424
    %v427 = vadd.f32 %v419, %v425
    %428 = vset.pattern.permute.xlu0 9
    %429 = vperm.xlu0 %428, %v356
    %v430 = vpop.permute.xlu0 %429
    %v432 = vmul.f32 %v430, %v244
    %v433 = vmul.f32 %v430, %v245
    %v434 = vadd.f32 %v426, %v432
    %v435 = vadd.f32 %v427, %v433
    %436 = vset.pattern.permute.xlu0 10
    %437 = vperm.xlu0 %436, %v356
    %v438 = vpop.permute.xlu0 %437
    %v440 = vmul.f32 %v438, %v266
    %v441 = vmul.f32 %v438, %v267
    %v442 = vadd.f32 %v434, %v440
    %v443 = vadd.f32 %v435, %v441
    %444 = vset.pattern.permute.xlu0 11
    %445 = vperm.xlu0 %444, %v356
    %v446 = vpop.permute.xlu0 %445
    %v448 = vmul.f32 %v446, %v288
    %v449 = vmul.f32 %v446, %v289
    %v450 = vadd.f32 %v442, %v448
    %v451 = vadd.f32 %v443, %v449
    %452 = vset.pattern.permute.xlu0 12
    %453 = vperm.xlu0 %452, %v356
    %v454 = vpop.permute.xlu0 %453
    %v456 = vmul.f32 %v454, %v310
    %v457 = vmul.f32 %v454, %v311
    %v458 = vadd.f32 %v450, %v456
    %v459 = vadd.f32 %v451, %v457
    %460 = vset.pattern.permute.xlu0 13
    %461 = vperm.xlu0 %460, %v356
    %v462 = vpop.permute.xlu0 %461
    %v464 = vmul.f32 %v462, %v332
    %v465 = vmul.f32 %v462, %v333
    %v466 = vadd.f32 %v458, %v464
    %v467 = vadd.f32 %v459, %v465
    %468 = vset.pattern.permute.xlu0 14
    %469 = vperm.xlu0 %468, %v356
    %v470 = vpop.permute.xlu0 %469
    %v472 = vmul.f32 %v470, %v354
    %v473 = vmul.f32 %v470, %v355
    %v474 = vadd.f32 %v466, %v472
    %v475 = vadd.f32 %v467, %v473
    %476 = vrot.lane.b32.xlu0 %v474, 112
    %v477 = vpop.permute.xlu0 %476
    %478 = vrot.lane.b32.xlu0 %v475, 112
    %v479 = vpop.permute.xlu0 %478
    %vm480 = vcmp.lt.s32.totalorder %v37, 112
    %v481 = vsel %vm480, %v477, %v479
    %v482 = vsel %vm480, %v479, %v477
    %s483 = scalar_lea.vmem %s1, 23
    %v484 = vld [vmem:[%s483] ss:$8 sm:$0x3]
    %v486 = vlaneseq
    %v487 = vshrl.u32 %v486, 7
    %v488 = vsub.s32 0, %v487
    %v489 = vrot.slane %v484, %v488
    %v490 = vlaneseq
    %v491 = vshrl.u32 %v490, 7
    %v492 = vsub.s32 1, %v491
    %v493 = vrot.slane %v484, %v492
    %v496 = vmul.f32 %v482, %v489
    %v497 = vmul.f32 %v481, %v493
    %v498 = vld [vmem:[%s2 + $0x8] sm:$0xff]
    %500 = vset.pattern.permute.xlu0 0
    %501 = vperm.xlu0 %500, %v498
    %v502 = vpop.permute.xlu0 %501
    %v504 = vmul.f32 %v502, %v53
    %v505 = vmul.f32 %v502, %v54
    %506 = vset.pattern.permute.xlu0 1
    %507 = vperm.xlu0 %506, %v498
    %v508 = vpop.permute.xlu0 %507
    %v510 = vmul.f32 %v508, %v75
    %v511 = vmul.f32 %v508, %v76
    %v512 = vadd.f32 %v504, %v510
    %v513 = vadd.f32 %v505, %v511
    %514 = vset.pattern.permute.xlu0 2
    %515 = vperm.xlu0 %514, %v498
    %v516 = vpop.permute.xlu0 %515
    %v518 = vmul.f32 %v516, %v97
    %v519 = vmul.f32 %v516, %v98
    %v520 = vadd.f32 %v512, %v518
    %v521 = vadd.f32 %v513, %v519
    %522 = vset.pattern.permute.xlu0 3
    %523 = vperm.xlu0 %522, %v498
    %v524 = vpop.permute.xlu0 %523
    %v526 = vmul.f32 %v524, %v119
    %v527 = vmul.f32 %v524, %v120
    %v528 = vadd.f32 %v520, %v526
    %v529 = vadd.f32 %v521, %v527
    %530 = vset.pattern.permute.xlu0 4
    %531 = vperm.xlu0 %530, %v498
    %v532 = vpop.permute.xlu0 %531
    %v534 = vmul.f32 %v532, %v141
    %v535 = vmul.f32 %v532, %v142
    %v536 = vadd.f32 %v528, %v534
    %v537 = vadd.f32 %v529, %v535
    %538 = vset.pattern.permute.xlu0 5
    %539 = vperm.xlu0 %538, %v498
    %v540 = vpop.permute.xlu0 %539
    %v542 = vmul.f32 %v540, %v163
    %v543 = vmul.f32 %v540, %v164
    %v544 = vadd.f32 %v536, %v542
    %v545 = vadd.f32 %v537, %v543
    %546 = vset.pattern.permute.xlu0 6
    %547 = vperm.xlu0 %546, %v498
    %v548 = vpop.permute.xlu0 %547
    %v550 = vmul.f32 %v548, %v185
    %v551 = vmul.f32 %v548, %v186
    %v552 = vadd.f32 %v544, %v550
    %v553 = vadd.f32 %v545, %v551
    %554 = vset.pattern.permute.xlu0 7
    %555 = vperm.xlu0 %554, %v498
    %v556 = vpop.permute.xlu0 %555
    %v558 = vmul.f32 %v556, %v200
    %v559 = vmul.f32 %v556, %v201
    %v560 = vadd.f32 %v552, %v558
    %v561 = vadd.f32 %v553, %v559
    %562 = vset.pattern.permute.xlu0 8
    %563 = vperm.xlu0 %562, %v498
    %v564 = vpop.permute.xlu0 %563
    %v566 = vmul.f32 %v564, %v222
    %v567 = vmul.f32 %v564, %v223
    %v568 = vadd.f32 %v560, %v566
    %v569 = vadd.f32 %v561, %v567
    %570 = vset.pattern.permute.xlu0 9
    %571 = vperm.xlu0 %570, %v498
    %v572 = vpop.permute.xlu0 %571
    %v574 = vmul.f32 %v572, %v244
    %v575 = vmul.f32 %v572, %v245
    %v576 = vadd.f32 %v568, %v574
    %v577 = vadd.f32 %v569, %v575
    %578 = vset.pattern.permute.xlu0 10
    %579 = vperm.xlu0 %578, %v498
    %v580 = vpop.permute.xlu0 %579
    %v582 = vmul.f32 %v580, %v266
    %v583 = vmul.f32 %v580, %v267
    %v584 = vadd.f32 %v576, %v582
    %v585 = vadd.f32 %v577, %v583
    %586 = vset.pattern.permute.xlu0 11
    %587 = vperm.xlu0 %586, %v498
    %v588 = vpop.permute.xlu0 %587
    %v590 = vmul.f32 %v588, %v288
    %v591 = vmul.f32 %v588, %v289
    %v592 = vadd.f32 %v584, %v590
    %v593 = vadd.f32 %v585, %v591
    %594 = vset.pattern.permute.xlu0 12
    %595 = vperm.xlu0 %594, %v498
    %v596 = vpop.permute.xlu0 %595
    %v598 = vmul.f32 %v596, %v310
    %v599 = vmul.f32 %v596, %v311
    %v600 = vadd.f32 %v592, %v598
    %v601 = vadd.f32 %v593, %v599
    %602 = vset.pattern.permute.xlu0 13
    %603 = vperm.xlu0 %602, %v498
    %v604 = vpop.permute.xlu0 %603
    %v606 = vmul.f32 %v604, %v332
    %v607 = vmul.f32 %v604, %v333
    %v608 = vadd.f32 %v600, %v606
    %v609 = vadd.f32 %v601, %v607
    %610 = vset.pattern.permute.xlu0 14
    %611 = vperm.xlu0 %610, %v498
    %v612 = vpop.permute.xlu0 %611
    %v614 = vmul.f32 %v612, %v354
    %v615 = vmul.f32 %v612, %v355
    %v616 = vadd.f32 %v608, %v614
    %v617 = vadd.f32 %v609, %v615
    %618 = vrot.lane.b32.xlu0 %v616, 96
    %v619 = vpop.permute.xlu0 %618
    %620 = vrot.lane.b32.xlu0 %v617, 96
    %v621 = vpop.permute.xlu0 %620
    %vm622 = vcmp.lt.s32.totalorder %v37, 96
    %v623 = vsel %vm622, %v619, %v621
    %v624 = vsel %vm622, %v621, %v619
    %s625 = scalar_lea.vmem %s1, 32
    %v626 = vld [vmem:[%s625] ss:$8 sm:$0x3]
    %v628 = vlaneseq
    %v629 = vshrl.u32 %v628, 7
    %v630 = vsub.s32 0, %v629
    %v631 = vrot.slane %v626, %v630
    %v632 = vlaneseq
    %v633 = vshrl.u32 %v632, 7
    %v634 = vsub.s32 1, %v633
    %v635 = vrot.slane %v626, %v634
    %v638 = vmul.f32 %v624, %v631
    %v639 = vmul.f32 %v623, %v635
    %v640 = vadd.f32 %v496, %v638
    %v641 = vadd.f32 %v497, %v639
    %v642 = vld [vmem:[%s2 + $0x10] sm:$0xff]
    %644 = vset.pattern.permute.xlu0 0
    %645 = vperm.xlu0 %644, %v642
    %v646 = vpop.permute.xlu0 %645
    %v648 = vmul.f32 %v646, %v53
    %v649 = vmul.f32 %v646, %v54
    %650 = vset.pattern.permute.xlu0 1
    %651 = vperm.xlu0 %650, %v642
    %v652 = vpop.permute.xlu0 %651
    %v654 = vmul.f32 %v652, %v75
    %v655 = vmul.f32 %v652, %v76
    %v656 = vadd.f32 %v648, %v654
    %v657 = vadd.f32 %v649, %v655
    %658 = vset.pattern.permute.xlu0 2
    %659 = vperm.xlu0 %658, %v642
    %v660 = vpop.permute.xlu0 %659
    %v662 = vmul.f32 %v660, %v97
    %v663 = vmul.f32 %v660, %v98
    %v664 = vadd.f32 %v656, %v662
    %v665 = vadd.f32 %v657, %v663
    %666 = vset.pattern.permute.xlu0 3
    %667 = vperm.xlu0 %666, %v642
    %v668 = vpop.permute.xlu0 %667
    %v670 = vmul.f32 %v668, %v119
    %v671 = vmul.f32 %v668, %v120
    %v672 = vadd.f32 %v664, %v670
    %v673 = vadd.f32 %v665, %v671
    %674 = vset.pattern.permute.xlu0 4
    %675 = vperm.xlu0 %674, %v642
    %v676 = vpop.permute.xlu0 %675
    %v678 = vmul.f32 %v676, %v141
    %v679 = vmul.f32 %v676, %v142
    %v680 = vadd.f32 %v672, %v678
    %v681 = vadd.f32 %v673, %v679
    %682 = vset.pattern.permute.xlu0 5
    %683 = vperm.xlu0 %682, %v642
    %v684 = vpop.permute.xlu0 %683
    %v686 = vmul.f32 %v684, %v163
    %v687 = vmul.f32 %v684, %v164
    %v688 = vadd.f32 %v680, %v686
    %v689 = vadd.f32 %v681, %v687
    %690 = vset.pattern.permute.xlu0 6
    %691 = vperm.xlu0 %690, %v642
    %v692 = vpop.permute.xlu0 %691
    %v694 = vmul.f32 %v692, %v185
    %v695 = vmul.f32 %v692, %v186
    %v696 = vadd.f32 %v688, %v694
    %v697 = vadd.f32 %v689, %v695
    %698 = vset.pattern.permute.xlu0 7
    %699 = vperm.xlu0 %698, %v642
    %v700 = vpop.permute.xlu0 %699
    %v702 = vmul.f32 %v700, %v200
    %v703 = vmul.f32 %v700, %v201
    %v704 = vadd.f32 %v696, %v702
    %v705 = vadd.f32 %v697, %v703
    %706 = vset.pattern.permute.xlu0 8
    %707 = vperm.xlu0 %706, %v642
    %v708 = vpop.permute.xlu0 %707
    %v710 = vmul.f32 %v708, %v222
    %v711 = vmul.f32 %v708, %v223
    %v712 = vadd.f32 %v704, %v710
    %v713 = vadd.f32 %v705, %v711
    %714 = vset.pattern.permute.xlu0 9
    %715 = vperm.xlu0 %714, %v642
    %v716 = vpop.permute.xlu0 %715
    %v718 = vmul.f32 %v716, %v244
    %v719 = vmul.f32 %v716, %v245
    %v720 = vadd.f32 %v712, %v718
    %v721 = vadd.f32 %v713, %v719
    %722 = vset.pattern.permute.xlu0 10
    %723 = vperm.xlu0 %722, %v642
    %v724 = vpop.permute.xlu0 %723
    %v726 = vmul.f32 %v724, %v266
    %v727 = vmul.f32 %v724, %v267
    %v728 = vadd.f32 %v720, %v726
    %v729 = vadd.f32 %v721, %v727
    %730 = vset.pattern.permute.xlu0 11
    %731 = vperm.xlu0 %730, %v642
    %v732 = vpop.permute.xlu0 %731
    %v734 = vmul.f32 %v732, %v288
    %v735 = vmul.f32 %v732, %v289
    %v736 = vadd.f32 %v728, %v734
    %v737 = vadd.f32 %v729, %v735
    %738 = vset.pattern.permute.xlu0 12
    %739 = vperm.xlu0 %738, %v642
    %v740 = vpop.permute.xlu0 %739
    %v742 = vmul.f32 %v740, %v310
    %v743 = vmul.f32 %v740, %v311
    %v744 = vadd.f32 %v736, %v742
    %v745 = vadd.f32 %v737, %v743
    %746 = vset.pattern.permute.xlu0 13
    %747 = vperm.xlu0 %746, %v642
    %v748 = vpop.permute.xlu0 %747
    %v750 = vmul.f32 %v748, %v332
    %v751 = vmul.f32 %v748, %v333
    %v752 = vadd.f32 %v744, %v750
    %v753 = vadd.f32 %v745, %v751
    %754 = vset.pattern.permute.xlu0 14
    %755 = vperm.xlu0 %754, %v642
    %v756 = vpop.permute.xlu0 %755
    %v758 = vmul.f32 %v756, %v354
    %v759 = vmul.f32 %v756, %v355
    %v760 = vadd.f32 %v752, %v758
    %v761 = vadd.f32 %v753, %v759
    %762 = vrot.lane.b32.xlu0 %v760, 80
    %v763 = vpop.permute.xlu0 %762
    %764 = vrot.lane.b32.xlu0 %v761, 80
    %v765 = vpop.permute.xlu0 %764
    %vm766 = vcmp.lt.s32.totalorder %v37, 80
    %v767 = vsel %vm766, %v763, %v765
    %v768 = vsel %vm766, %v765, %v763
    %s769 = scalar_lea.vmem %s1, 33
    %v770 = vld [vmem:[%s769] ss:$8 sm:$0x3]
    %v772 = vlaneseq
    %v773 = vshrl.u32 %v772, 7
    %v774 = vsub.s32 0, %v773
    %v775 = vrot.slane %v770, %v774
    %v776 = vlaneseq
    %v777 = vshrl.u32 %v776, 7
    %v778 = vsub.s32 1, %v777
    %v779 = vrot.slane %v770, %v778
    %v782 = vmul.f32 %v768, %v775
    %v783 = vmul.f32 %v767, %v779
    %v784 = vadd.f32 %v640, %v782
    %v785 = vadd.f32 %v641, %v783
    %v786 = vld [vmem:[%s2 + $0x18] sm:$0xff]
    %788 = vset.pattern.permute.xlu0 0
    %789 = vperm.xlu0 %788, %v786
    %v790 = vpop.permute.xlu0 %789
    %v792 = vmul.f32 %v790, %v53
    %v793 = vmul.f32 %v790, %v54
    %794 = vset.pattern.permute.xlu0 1
    %795 = vperm.xlu0 %794, %v786
    %v796 = vpop.permute.xlu0 %795
    %v798 = vmul.f32 %v796, %v75
    %v799 = vmul.f32 %v796, %v76
    %v800 = vadd.f32 %v792, %v798
    %v801 = vadd.f32 %v793, %v799
    %802 = vset.pattern.permute.xlu0 2
    %803 = vperm.xlu0 %802, %v786
    %v804 = vpop.permute.xlu0 %803
    %v806 = vmul.f32 %v804, %v97
    %v807 = vmul.f32 %v804, %v98
    %v808 = vadd.f32 %v800, %v806
    %v809 = vadd.f32 %v801, %v807
    %810 = vset.pattern.permute.xlu0 3
    %811 = vperm.xlu0 %810, %v786
    %v812 = vpop.permute.xlu0 %811
    %v814 = vmul.f32 %v812, %v119
    %v815 = vmul.f32 %v812, %v120
    %v816 = vadd.f32 %v808, %v814
    %v817 = vadd.f32 %v809, %v815
    %818 = vset.pattern.permute.xlu0 4
    %819 = vperm.xlu0 %818, %v786
    %v820 = vpop.permute.xlu0 %819
    %v822 = vmul.f32 %v820, %v141
    %v823 = vmul.f32 %v820, %v142
    %v824 = vadd.f32 %v816, %v822
    %v825 = vadd.f32 %v817, %v823
    %826 = vset.pattern.permute.xlu0 5
    %827 = vperm.xlu0 %826, %v786
    %v828 = vpop.permute.xlu0 %827
    %v830 = vmul.f32 %v828, %v163
    %v831 = vmul.f32 %v828, %v164
    %v832 = vadd.f32 %v824, %v830
    %v833 = vadd.f32 %v825, %v831
    %834 = vset.pattern.permute.xlu0 6
    %835 = vperm.xlu0 %834, %v786
    %v836 = vpop.permute.xlu0 %835
    %v838 = vmul.f32 %v836, %v185
    %v839 = vmul.f32 %v836, %v186
    %v840 = vadd.f32 %v832, %v838
    %v841 = vadd.f32 %v833, %v839
    %842 = vset.pattern.permute.xlu0 7
    %843 = vperm.xlu0 %842, %v786
    %v844 = vpop.permute.xlu0 %843
    %v846 = vmul.f32 %v844, %v200
    %v847 = vmul.f32 %v844, %v201
    %v848 = vadd.f32 %v840, %v846
    %v849 = vadd.f32 %v841, %v847
    %850 = vset.pattern.permute.xlu0 8
    %851 = vperm.xlu0 %850, %v786
    %v852 = vpop.permute.xlu0 %851
    %v854 = vmul.f32 %v852, %v222
    %v855 = vmul.f32 %v852, %v223
    %v856 = vadd.f32 %v848, %v854
    %v857 = vadd.f32 %v849, %v855
    %858 = vset.pattern.permute.xlu0 9
    %859 = vperm.xlu0 %858, %v786
    %v860 = vpop.permute.xlu0 %859
    %v862 = vmul.f32 %v860, %v244
    %v863 = vmul.f32 %v860, %v245
    %v864 = vadd.f32 %v856, %v862
    %v865 = vadd.f32 %v857, %v863
    %866 = vset.pattern.permute.xlu0 10
    %867 = vperm.xlu0 %866, %v786
    %v868 = vpop.permute.xlu0 %867
    %v870 = vmul.f32 %v868, %v266
    %v871 = vmul.f32 %v868, %v267
    %v872 = vadd.f32 %v864, %v870
    %v873 = vadd.f32 %v865, %v871
    %874 = vset.pattern.permute.xlu0 11
    %875 = vperm.xlu0 %874, %v786
    %v876 = vpop.permute.xlu0 %875
    %v878 = vmul.f32 %v876, %v288
    %v879 = vmul.f32 %v876, %v289
    %v880 = vadd.f32 %v872, %v878
    %v881 = vadd.f32 %v873, %v879
    %882 = vset.pattern.permute.xlu0 12
    %883 = vperm.xlu0 %882, %v786
    %v884 = vpop.permute.xlu0 %883
    %v886 = vmul.f32 %v884, %v310
    %v887 = vmul.f32 %v884, %v311
    %v888 = vadd.f32 %v880, %v886
    %v889 = vadd.f32 %v881, %v887
    %890 = vset.pattern.permute.xlu0 13
    %891 = vperm.xlu0 %890, %v786
    %v892 = vpop.permute.xlu0 %891
    %v894 = vmul.f32 %v892, %v332
    %v895 = vmul.f32 %v892, %v333
    %v896 = vadd.f32 %v888, %v894
    %v897 = vadd.f32 %v889, %v895
    %898 = vset.pattern.permute.xlu0 14
    %899 = vperm.xlu0 %898, %v786
    %v900 = vpop.permute.xlu0 %899
    %v902 = vmul.f32 %v900, %v354
    %v903 = vmul.f32 %v900, %v355
    %v904 = vadd.f32 %v896, %v902
    %v905 = vadd.f32 %v897, %v903
    %906 = vrot.lane.b32.xlu0 %v904, 64
    %v907 = vpop.permute.xlu0 %906
    %908 = vrot.lane.b32.xlu0 %v905, 64
    %v909 = vpop.permute.xlu0 %908
    %vm910 = vcmp.lt.s32.totalorder %v37, 64
    %v911 = vsel %vm910, %v907, %v909
    %v912 = vsel %vm910, %v909, %v907
    %s913 = scalar_lea.vmem %s1, 34
    %v914 = vld [vmem:[%s913] ss:$8 sm:$0x3]
    %v916 = vlaneseq
    %v917 = vshrl.u32 %v916, 7
    %v918 = vsub.s32 0, %v917
    %v919 = vrot.slane %v914, %v918
    %v920 = vlaneseq
    %v921 = vshrl.u32 %v920, 7
    %v922 = vsub.s32 1, %v921
    %v923 = vrot.slane %v914, %v922
    %v926 = vmul.f32 %v912, %v919
    %v927 = vmul.f32 %v911, %v923
    %v928 = vadd.f32 %v784, %v926
    %v929 = vadd.f32 %v785, %v927
    %v930 = vld [vmem:[%s2 + $0x20] sm:$0xff]
    %932 = vset.pattern.permute.xlu0 0
    %933 = vperm.xlu0 %932, %v930
    %v934 = vpop.permute.xlu0 %933
    %v936 = vmul.f32 %v934, %v53
    %v937 = vmul.f32 %v934, %v54
    %938 = vset.pattern.permute.xlu0 1
    %939 = vperm.xlu0 %938, %v930
    %v940 = vpop.permute.xlu0 %939
    %v942 = vmul.f32 %v940, %v75
    %v943 = vmul.f32 %v940, %v76
    %v944 = vadd.f32 %v936, %v942
    %v945 = vadd.f32 %v937, %v943
    %946 = vset.pattern.permute.xlu0 2
    %947 = vperm.xlu0 %946, %v930
    %v948 = vpop.permute.xlu0 %947
    %v950 = vmul.f32 %v948, %v97
    %v951 = vmul.f32 %v948, %v98
    %v952 = vadd.f32 %v944, %v950
    %v953 = vadd.f32 %v945, %v951
    %954 = vset.pattern.permute.xlu0 3
    %955 = vperm.xlu0 %954, %v930
    %v956 = vpop.permute.xlu0 %955
    %v958 = vmul.f32 %v956, %v119
    %v959 = vmul.f32 %v956, %v120
    %v960 = vadd.f32 %v952, %v958
    %v961 = vadd.f32 %v953, %v959
    %962 = vset.pattern.permute.xlu0 4
    %963 = vperm.xlu0 %962, %v930
    %v964 = vpop.permute.xlu0 %963
    %v966 = vmul.f32 %v964, %v141
    %v967 = vmul.f32 %v964, %v142
    %v968 = vadd.f32 %v960, %v966
    %v969 = vadd.f32 %v961, %v967
    %970 = vset.pattern.permute.xlu0 5
    %971 = vperm.xlu0 %970, %v930
    %v972 = vpop.permute.xlu0 %971
    %v974 = vmul.f32 %v972, %v163
    %v975 = vmul.f32 %v972, %v164
    %v976 = vadd.f32 %v968, %v974
    %v977 = vadd.f32 %v969, %v975
    %978 = vset.pattern.permute.xlu0 6
    %979 = vperm.xlu0 %978, %v930
    %v980 = vpop.permute.xlu0 %979
    %v982 = vmul.f32 %v980, %v185
    %v983 = vmul.f32 %v980, %v186
    %v984 = vadd.f32 %v976, %v982
    %v985 = vadd.f32 %v977, %v983
    %986 = vset.pattern.permute.xlu0 7
    %987 = vperm.xlu0 %986, %v930
    %v988 = vpop.permute.xlu0 %987
    %v990 = vmul.f32 %v988, %v200
    %v991 = vmul.f32 %v988, %v201
    %v992 = vadd.f32 %v984, %v990
    %v993 = vadd.f32 %v985, %v991
    %994 = vset.pattern.permute.xlu0 8
    %995 = vperm.xlu0 %994, %v930
    %v996 = vpop.permute.xlu0 %995
    %v998 = vmul.f32 %v996, %v222
    %v999 = vmul.f32 %v996, %v223
    %v1000 = vadd.f32 %v992, %v998
    %v1001 = vadd.f32 %v993, %v999
    %1002 = vset.pattern.permute.xlu0 9
    %1003 = vperm.xlu0 %1002, %v930
    %v1004 = vpop.permute.xlu0 %1003
    %v1006 = vmul.f32 %v1004, %v244
    %v1007 = vmul.f32 %v1004, %v245
    %v1008 = vadd.f32 %v1000, %v1006
    %v1009 = vadd.f32 %v1001, %v1007
    %1010 = vset.pattern.permute.xlu0 10
    %1011 = vperm.xlu0 %1010, %v930
    %v1012 = vpop.permute.xlu0 %1011
    %v1014 = vmul.f32 %v1012, %v266
    %v1015 = vmul.f32 %v1012, %v267
    %v1016 = vadd.f32 %v1008, %v1014
    %v1017 = vadd.f32 %v1009, %v1015
    %1018 = vset.pattern.permute.xlu0 11
    %1019 = vperm.xlu0 %1018, %v930
    %v1020 = vpop.permute.xlu0 %1019
    %v1022 = vmul.f32 %v1020, %v288
    %v1023 = vmul.f32 %v1020, %v289
    %v1024 = vadd.f32 %v1016, %v1022
    %v1025 = vadd.f32 %v1017, %v1023
    %1026 = vset.pattern.permute.xlu0 12
    %1027 = vperm.xlu0 %1026, %v930
    %v1028 = vpop.permute.xlu0 %1027
    %v1030 = vmul.f32 %v1028, %v310
    %v1031 = vmul.f32 %v1028, %v311
    %v1032 = vadd.f32 %v1024, %v1030
    %v1033 = vadd.f32 %v1025, %v1031
    %1034 = vset.pattern.permute.xlu0 13
    %1035 = vperm.xlu0 %1034, %v930
    %v1036 = vpop.permute.xlu0 %1035
    %v1038 = vmul.f32 %v1036, %v332
    %v1039 = vmul.f32 %v1036, %v333
    %v1040 = vadd.f32 %v1032, %v1038
    %v1041 = vadd.f32 %v1033, %v1039
    %1042 = vset.pattern.permute.xlu0 14
    %1043 = vperm.xlu0 %1042, %v930
    %v1044 = vpop.permute.xlu0 %1043
    %v1046 = vmul.f32 %v1044, %v354
    %v1047 = vmul.f32 %v1044, %v355
    %v1048 = vadd.f32 %v1040, %v1046
    %v1049 = vadd.f32 %v1041, %v1047
    %1050 = vrot.lane.b32.xlu0 %v1048, 48
    %v1051 = vpop.permute.xlu0 %1050
    %1052 = vrot.lane.b32.xlu0 %v1049, 48
    %v1053 = vpop.permute.xlu0 %1052
    %vm1054 = vcmp.lt.s32.totalorder %v37, 48
    %v1055 = vsel %vm1054, %v1051, %v1053
    %v1056 = vsel %vm1054, %v1053, %v1051
    %s1057 = scalar_lea.vmem %s1, 35
    %v1058 = vld [vmem:[%s1057] ss:$8 sm:$0x3]
    %v1060 = vlaneseq
    %v1061 = vshrl.u32 %v1060, 7
    %v1062 = vsub.s32 0, %v1061
    %v1063 = vrot.slane %v1058, %v1062
    %v1064 = vlaneseq
    %v1065 = vshrl.u32 %v1064, 7
    %v1066 = vsub.s32 1, %v1065
    %v1067 = vrot.slane %v1058, %v1066
    %v1070 = vmul.f32 %v1056, %v1063
    %v1071 = vmul.f32 %v1055, %v1067
    %v1072 = vadd.f32 %v928, %v1070
    %v1073 = vadd.f32 %v929, %v1071
    %v1074 = vld [vmem:[%s2 + $0x28] sm:$0xff]
    %1076 = vset.pattern.permute.xlu0 0
    %1077 = vperm.xlu0 %1076, %v1074
    %v1078 = vpop.permute.xlu0 %1077
    %v1080 = vmul.f32 %v1078, %v53
    %v1081 = vmul.f32 %v1078, %v54
    %1082 = vset.pattern.permute.xlu0 1
    %1083 = vperm.xlu0 %1082, %v1074
    %v1084 = vpop.permute.xlu0 %1083
    %v1086 = vmul.f32 %v1084, %v75
    %v1087 = vmul.f32 %v1084, %v76
    %v1088 = vadd.f32 %v1080, %v1086
    %v1089 = vadd.f32 %v1081, %v1087
    %1090 = vset.pattern.permute.xlu0 2
    %1091 = vperm.xlu0 %1090, %v1074
    %v1092 = vpop.permute.xlu0 %1091
    %v1094 = vmul.f32 %v1092, %v97
    %v1095 = vmul.f32 %v1092, %v98
    %v1096 = vadd.f32 %v1088, %v1094
    %v1097 = vadd.f32 %v1089, %v1095
    %1098 = vset.pattern.permute.xlu0 3
    %1099 = vperm.xlu0 %1098, %v1074
    %v1100 = vpop.permute.xlu0 %1099
    %v1102 = vmul.f32 %v1100, %v119
    %v1103 = vmul.f32 %v1100, %v120
    %v1104 = vadd.f32 %v1096, %v1102
    %v1105 = vadd.f32 %v1097, %v1103
    %1106 = vset.pattern.permute.xlu0 4
    %1107 = vperm.xlu0 %1106, %v1074
    %v1108 = vpop.permute.xlu0 %1107
    %v1110 = vmul.f32 %v1108, %v141
    %v1111 = vmul.f32 %v1108, %v142
    %v1112 = vadd.f32 %v1104, %v1110
    %v1113 = vadd.f32 %v1105, %v1111
    %1114 = vset.pattern.permute.xlu0 5
    %1115 = vperm.xlu0 %1114, %v1074
    %v1116 = vpop.permute.xlu0 %1115
    %v1118 = vmul.f32 %v1116, %v163
    %v1119 = vmul.f32 %v1116, %v164
    %v1120 = vadd.f32 %v1112, %v1118
    %v1121 = vadd.f32 %v1113, %v1119
    %1122 = vset.pattern.permute.xlu0 6
    %1123 = vperm.xlu0 %1122, %v1074
    %v1124 = vpop.permute.xlu0 %1123
    %v1126 = vmul.f32 %v1124, %v185
    %v1127 = vmul.f32 %v1124, %v186
    %v1128 = vadd.f32 %v1120, %v1126
    %v1129 = vadd.f32 %v1121, %v1127
    %1130 = vset.pattern.permute.xlu0 7
    %1131 = vperm.xlu0 %1130, %v1074
    %v1132 = vpop.permute.xlu0 %1131
    %v1134 = vmul.f32 %v1132, %v200
    %v1135 = vmul.f32 %v1132, %v201
    %v1136 = vadd.f32 %v1128, %v1134
    %v1137 = vadd.f32 %v1129, %v1135
    %1138 = vset.pattern.permute.xlu0 8
    %1139 = vperm.xlu0 %1138, %v1074
    %v1140 = vpop.permute.xlu0 %1139
    %v1142 = vmul.f32 %v1140, %v222
    %v1143 = vmul.f32 %v1140, %v223
    %v1144 = vadd.f32 %v1136, %v1142
    %v1145 = vadd.f32 %v1137, %v1143
    %1146 = vset.pattern.permute.xlu0 9
    %1147 = vperm.xlu0 %1146, %v1074
    %v1148 = vpop.permute.xlu0 %1147
    %v1150 = vmul.f32 %v1148, %v244
    %v1151 = vmul.f32 %v1148, %v245
    %v1152 = vadd.f32 %v1144, %v1150
    %v1153 = vadd.f32 %v1145, %v1151
    %1154 = vset.pattern.permute.xlu0 10
    %1155 = vperm.xlu0 %1154, %v1074
    %v1156 = vpop.permute.xlu0 %1155
    %v1158 = vmul.f32 %v1156, %v266
    %v1159 = vmul.f32 %v1156, %v267
    %v1160 = vadd.f32 %v1152, %v1158
    %v1161 = vadd.f32 %v1153, %v1159
    %1162 = vset.pattern.permute.xlu0 11
    %1163 = vperm.xlu0 %1162, %v1074
    %v1164 = vpop.permute.xlu0 %1163
    %v1166 = vmul.f32 %v1164, %v288
    %v1167 = vmul.f32 %v1164, %v289
    %v1168 = vadd.f32 %v1160, %v1166
    %v1169 = vadd.f32 %v1161, %v1167
    %1170 = vset.pattern.permute.xlu0 12
    %1171 = vperm.xlu0 %1170, %v1074
    %v1172 = vpop.permute.xlu0 %1171
    %v1174 = vmul.f32 %v1172, %v310
    %v1175 = vmul.f32 %v1172, %v311
    %v1176 = vadd.f32 %v1168, %v1174
    %v1177 = vadd.f32 %v1169, %v1175
    %1178 = vset.pattern.permute.xlu0 13
    %1179 = vperm.xlu0 %1178, %v1074
    %v1180 = vpop.permute.xlu0 %1179
    %v1182 = vmul.f32 %v1180, %v332
    %v1183 = vmul.f32 %v1180, %v333
    %v1184 = vadd.f32 %v1176, %v1182
    %v1185 = vadd.f32 %v1177, %v1183
    %1186 = vset.pattern.permute.xlu0 14
    %1187 = vperm.xlu0 %1186, %v1074
    %v1188 = vpop.permute.xlu0 %1187
    %v1190 = vmul.f32 %v1188, %v354
    %v1191 = vmul.f32 %v1188, %v355
    %v1192 = vadd.f32 %v1184, %v1190
    %v1193 = vadd.f32 %v1185, %v1191
    %1194 = vrot.lane.b32.xlu0 %v1192, 32
    %v1195 = vpop.permute.xlu0 %1194
    %1196 = vrot.lane.b32.xlu0 %v1193, 32
    %v1197 = vpop.permute.xlu0 %1196
    %vm1198 = vcmp.lt.s32.totalorder %v37, 32
    %v1199 = vsel %vm1198, %v1195, %v1197
    %v1200 = vsel %vm1198, %v1197, %v1195
    %s1201 = scalar_lea.vmem %s1, 36
    %v1202 = vld [vmem:[%s1201] ss:$8 sm:$0x3]
    %v1204 = vlaneseq
    %v1205 = vshrl.u32 %v1204, 7
    %v1206 = vsub.s32 0, %v1205
    %v1207 = vrot.slane %v1202, %v1206
    %v1208 = vlaneseq
    %v1209 = vshrl.u32 %v1208, 7
    %v1210 = vsub.s32 1, %v1209
    %v1211 = vrot.slane %v1202, %v1210
    %v1214 = vmul.f32 %v1200, %v1207
    %v1215 = vmul.f32 %v1199, %v1211
    %v1216 = vadd.f32 %v1072, %v1214
    %v1217 = vadd.f32 %v1073, %v1215
    %v1218 = vld [vmem:[%s2 + $0x30] sm:$0xff]
    %1220 = vset.pattern.permute.xlu0 0
    %1221 = vperm.xlu0 %1220, %v1218
    %v1222 = vpop.permute.xlu0 %1221
    %v1224 = vmul.f32 %v1222, %v53
    %v1225 = vmul.f32 %v1222, %v54
    %1226 = vset.pattern.permute.xlu0 1
    %1227 = vperm.xlu0 %1226, %v1218
    %v1228 = vpop.permute.xlu0 %1227
    %v1230 = vmul.f32 %v1228, %v75
    %v1231 = vmul.f32 %v1228, %v76
    %v1232 = vadd.f32 %v1224, %v1230
    %v1233 = vadd.f32 %v1225, %v1231
    %1234 = vset.pattern.permute.xlu0 2
    %1235 = vperm.xlu0 %1234, %v1218
    %v1236 = vpop.permute.xlu0 %1235
    %v1238 = vmul.f32 %v1236, %v97
    %v1239 = vmul.f32 %v1236, %v98
    %v1240 = vadd.f32 %v1232, %v1238
    %v1241 = vadd.f32 %v1233, %v1239
    %1242 = vset.pattern.permute.xlu0 3
    %1243 = vperm.xlu0 %1242, %v1218
    %v1244 = vpop.permute.xlu0 %1243
    %v1246 = vmul.f32 %v1244, %v119
    %v1247 = vmul.f32 %v1244, %v120
    %v1248 = vadd.f32 %v1240, %v1246
    %v1249 = vadd.f32 %v1241, %v1247
    %1250 = vset.pattern.permute.xlu0 4
    %1251 = vperm.xlu0 %1250, %v1218
    %v1252 = vpop.permute.xlu0 %1251
    %v1254 = vmul.f32 %v1252, %v141
    %v1255 = vmul.f32 %v1252, %v142
    %v1256 = vadd.f32 %v1248, %v1254
    %v1257 = vadd.f32 %v1249, %v1255
    %1258 = vset.pattern.permute.xlu0 5
    %1259 = vperm.xlu0 %1258, %v1218
    %v1260 = vpop.permute.xlu0 %1259
    %v1262 = vmul.f32 %v1260, %v163
    %v1263 = vmul.f32 %v1260, %v164
    %v1264 = vadd.f32 %v1256, %v1262
    %v1265 = vadd.f32 %v1257, %v1263
    %1266 = vset.pattern.permute.xlu0 6
    %1267 = vperm.xlu0 %1266, %v1218
    %v1268 = vpop.permute.xlu0 %1267
    %v1270 = vmul.f32 %v1268, %v185
    %v1271 = vmul.f32 %v1268, %v186
    %v1272 = vadd.f32 %v1264, %v1270
    %v1273 = vadd.f32 %v1265, %v1271
    %1274 = vset.pattern.permute.xlu0 7
    %1275 = vperm.xlu0 %1274, %v1218
    %v1276 = vpop.permute.xlu0 %1275
    %v1278 = vmul.f32 %v1276, %v200
    %v1279 = vmul.f32 %v1276, %v201
    %v1280 = vadd.f32 %v1272, %v1278
    %v1281 = vadd.f32 %v1273, %v1279
    %1282 = vset.pattern.permute.xlu0 8
    %1283 = vperm.xlu0 %1282, %v1218
    %v1284 = vpop.permute.xlu0 %1283
    %v1286 = vmul.f32 %v1284, %v222
    %v1287 = vmul.f32 %v1284, %v223
    %v1288 = vadd.f32 %v1280, %v1286
    %v1289 = vadd.f32 %v1281, %v1287
    %1290 = vset.pattern.permute.xlu0 9
    %1291 = vperm.xlu0 %1290, %v1218
    %v1292 = vpop.permute.xlu0 %1291
    %v1294 = vmul.f32 %v1292, %v244
    %v1295 = vmul.f32 %v1292, %v245
    %v1296 = vadd.f32 %v1288, %v1294
    %v1297 = vadd.f32 %v1289, %v1295
    %1298 = vset.pattern.permute.xlu0 10
    %1299 = vperm.xlu0 %1298, %v1218
    %v1300 = vpop.permute.xlu0 %1299
    %v1302 = vmul.f32 %v1300, %v266
    %v1303 = vmul.f32 %v1300, %v267
    %v1304 = vadd.f32 %v1296, %v1302
    %v1305 = vadd.f32 %v1297, %v1303
    %1306 = vset.pattern.permute.xlu0 11
    %1307 = vperm.xlu0 %1306, %v1218
    %v1308 = vpop.permute.xlu0 %1307
    %v1310 = vmul.f32 %v1308, %v288
    %v1311 = vmul.f32 %v1308, %v289
    %v1312 = vadd.f32 %v1304, %v1310
    %v1313 = vadd.f32 %v1305, %v1311
    %1314 = vset.pattern.permute.xlu0 12
    %1315 = vperm.xlu0 %1314, %v1218
    %v1316 = vpop.permute.xlu0 %1315
    %v1318 = vmul.f32 %v1316, %v310
    %v1319 = vmul.f32 %v1316, %v311
    %v1320 = vadd.f32 %v1312, %v1318
    %v1321 = vadd.f32 %v1313, %v1319
    %1322 = vset.pattern.permute.xlu0 13
    %1323 = vperm.xlu0 %1322, %v1218
    %v1324 = vpop.permute.xlu0 %1323
    %v1326 = vmul.f32 %v1324, %v332
    %v1327 = vmul.f32 %v1324, %v333
    %v1328 = vadd.f32 %v1320, %v1326
    %v1329 = vadd.f32 %v1321, %v1327
    %1330 = vset.pattern.permute.xlu0 14
    %1331 = vperm.xlu0 %1330, %v1218
    %v1332 = vpop.permute.xlu0 %1331
    %v1334 = vmul.f32 %v1332, %v354
    %v1335 = vmul.f32 %v1332, %v355
    %v1336 = vadd.f32 %v1328, %v1334
    %v1337 = vadd.f32 %v1329, %v1335
    %1338 = vrot.lane.b32.xlu0 %v1336, 16
    %v1339 = vpop.permute.xlu0 %1338
    %1340 = vrot.lane.b32.xlu0 %v1337, 16
    %v1341 = vpop.permute.xlu0 %1340
    %vm1342 = vcmp.lt.s32.totalorder %v37, 16
    %v1343 = vsel %vm1342, %v1339, %v1341
    %v1344 = vsel %vm1342, %v1341, %v1339
    %s1345 = scalar_lea.vmem %s1, 37
    %v1346 = vld [vmem:[%s1345] ss:$8 sm:$0x3]
    %v1348 = vlaneseq
    %v1349 = vshrl.u32 %v1348, 7
    %v1350 = vsub.s32 0, %v1349
    %v1351 = vrot.slane %v1346, %v1350
    %v1352 = vlaneseq
    %v1353 = vshrl.u32 %v1352, 7
    %v1354 = vsub.s32 1, %v1353
    %v1355 = vrot.slane %v1346, %v1354
    %v1358 = vmul.f32 %v1344, %v1351
    %v1359 = vmul.f32 %v1343, %v1355
    %v1360 = vadd.f32 %v1216, %v1358
    %v1361 = vadd.f32 %v1217, %v1359
    %v1362 = vld [vmem:[%s2 + $0x38] sm:$0xff]
    %1364 = vset.pattern.permute.xlu0 0
    %1365 = vperm.xlu0 %1364, %v1362
    %v1366 = vpop.permute.xlu0 %1365
    %v1368 = vmul.f32 %v1366, %v53
    %v1369 = vmul.f32 %v1366, %v54
    %1370 = vset.pattern.permute.xlu0 1
    %1371 = vperm.xlu0 %1370, %v1362
    %v1372 = vpop.permute.xlu0 %1371
    %v1374 = vmul.f32 %v1372, %v75
    %v1375 = vmul.f32 %v1372, %v76
    %v1376 = vadd.f32 %v1368, %v1374
    %v1377 = vadd.f32 %v1369, %v1375
    %1378 = vset.pattern.permute.xlu0 2
    %1379 = vperm.xlu0 %1378, %v1362
    %v1380 = vpop.permute.xlu0 %1379
    %v1382 = vmul.f32 %v1380, %v97
    %v1383 = vmul.f32 %v1380, %v98
    %v1384 = vadd.f32 %v1376, %v1382
    %v1385 = vadd.f32 %v1377, %v1383
    %1386 = vset.pattern.permute.xlu0 3
    %1387 = vperm.xlu0 %1386, %v1362
    %v1388 = vpop.permute.xlu0 %1387
    %v1390 = vmul.f32 %v1388, %v119
    %v1391 = vmul.f32 %v1388, %v120
    %v1392 = vadd.f32 %v1384, %v1390
    %v1393 = vadd.f32 %v1385, %v1391
    %1394 = vset.pattern.permute.xlu0 4
    %1395 = vperm.xlu0 %1394, %v1362
    %v1396 = vpop.permute.xlu0 %1395
    %v1398 = vmul.f32 %v1396, %v141
    %v1399 = vmul.f32 %v1396, %v142
    %v1400 = vadd.f32 %v1392, %v1398
    %v1401 = vadd.f32 %v1393, %v1399
    %1402 = vset.pattern.permute.xlu0 5
    %1403 = vperm.xlu0 %1402, %v1362
    %v1404 = vpop.permute.xlu0 %1403
    %v1406 = vmul.f32 %v1404, %v163
    %v1407 = vmul.f32 %v1404, %v164
    %v1408 = vadd.f32 %v1400, %v1406
    %v1409 = vadd.f32 %v1401, %v1407
    %1410 = vset.pattern.permute.xlu0 6
    %1411 = vperm.xlu0 %1410, %v1362
    %v1412 = vpop.permute.xlu0 %1411
    %v1414 = vmul.f32 %v1412, %v185
    %v1415 = vmul.f32 %v1412, %v186
    %v1416 = vadd.f32 %v1408, %v1414
    %v1417 = vadd.f32 %v1409, %v1415
    %1418 = vset.pattern.permute.xlu0 7
    %1419 = vperm.xlu0 %1418, %v1362
    %v1420 = vpop.permute.xlu0 %1419
    %v1422 = vmul.f32 %v1420, %v200
    %v1423 = vmul.f32 %v1420, %v201
    %v1424 = vadd.f32 %v1416, %v1422
    %v1425 = vadd.f32 %v1417, %v1423
    %1426 = vset.pattern.permute.xlu0 8
    %1427 = vperm.xlu0 %1426, %v1362
    %v1428 = vpop.permute.xlu0 %1427
    %v1430 = vmul.f32 %v1428, %v222
    %v1431 = vmul.f32 %v1428, %v223
    %v1432 = vadd.f32 %v1424, %v1430
    %v1433 = vadd.f32 %v1425, %v1431
    %1434 = vset.pattern.permute.xlu0 9
    %1435 = vperm.xlu0 %1434, %v1362
    %v1436 = vpop.permute.xlu0 %1435
    %v1438 = vmul.f32 %v1436, %v244
    %v1439 = vmul.f32 %v1436, %v245
    %v1440 = vadd.f32 %v1432, %v1438
    %v1441 = vadd.f32 %v1433, %v1439
    %1442 = vset.pattern.permute.xlu0 10
    %1443 = vperm.xlu0 %1442, %v1362
    %v1444 = vpop.permute.xlu0 %1443
    %v1446 = vmul.f32 %v1444, %v266
    %v1447 = vmul.f32 %v1444, %v267
    %v1448 = vadd.f32 %v1440, %v1446
    %v1449 = vadd.f32 %v1441, %v1447
    %1450 = vset.pattern.permute.xlu0 11
    %1451 = vperm.xlu0 %1450, %v1362
    %v1452 = vpop.permute.xlu0 %1451
    %v1454 = vmul.f32 %v1452, %v288
    %v1455 = vmul.f32 %v1452, %v289
    %v1456 = vadd.f32 %v1448, %v1454
    %v1457 = vadd.f32 %v1449, %v1455
    %1458 = vset.pattern.permute.xlu0 12
    %1459 = vperm.xlu0 %1458, %v1362
    %v1460 = vpop.permute.xlu0 %1459
    %v1462 = vmul.f32 %v1460, %v310
    %v1463 = vmul.f32 %v1460, %v311
    %v1464 = vadd.f32 %v1456, %v1462
    %v1465 = vadd.f32 %v1457, %v1463
    %1466 = vset.pattern.permute.xlu0 13
    %1467 = vperm.xlu0 %1466, %v1362
    %v1468 = vpop.permute.xlu0 %1467
    %v1470 = vmul.f32 %v1468, %v332
    %v1471 = vmul.f32 %v1468, %v333
    %v1472 = vadd.f32 %v1464, %v1470
    %v1473 = vadd.f32 %v1465, %v1471
    %1474 = vset.pattern.permute.xlu0 14
    %1475 = vperm.xlu0 %1474, %v1362
    %v1476 = vpop.permute.xlu0 %1475
    %v1478 = vmul.f32 %v1476, %v354
    %v1479 = vmul.f32 %v1476, %v355
    %v1480 = vadd.f32 %v1472, %v1478
    %v1481 = vadd.f32 %v1473, %v1479
    %s1482 = scalar_lea.vmem %s1, 38
    %v1483 = vld [vmem:[%s1482] ss:$8 sm:$0x3]
    %v1485 = vlaneseq
    %v1486 = vshrl.u32 %v1485, 7
    %v1487 = vsub.s32 0, %v1486
    %v1488 = vrot.slane %v1483, %v1487
    %v1489 = vlaneseq
    %v1490 = vshrl.u32 %v1489, 7
    %v1491 = vsub.s32 1, %v1490
    %v1492 = vrot.slane %v1483, %v1491
    %v1495 = vmul.f32 %v1480, %v1488
    %v1496 = vmul.f32 %v1481, %v1492
    %v1497 = vadd.f32 %v1360, %v1495
    %v1498 = vadd.f32 %v1361, %v1496
    %v1499 = vld [vmem:[%s2 + $0x40] sm:$0xff]
    %1501 = vset.pattern.permute.xlu0 0
    %1502 = vperm.xlu0 %1501, %v1499
    %v1503 = vpop.permute.xlu0 %1502
    %v1505 = vmul.f32 %v1503, %v53
    %v1506 = vmul.f32 %v1503, %v54
    %1507 = vset.pattern.permute.xlu0 1
    %1508 = vperm.xlu0 %1507, %v1499
    %v1509 = vpop.permute.xlu0 %1508
    %v1511 = vmul.f32 %v1509, %v75
    %v1512 = vmul.f32 %v1509, %v76
    %v1513 = vadd.f32 %v1505, %v1511
    %v1514 = vadd.f32 %v1506, %v1512
    %1515 = vset.pattern.permute.xlu0 2
    %1516 = vperm.xlu0 %1515, %v1499
    %v1517 = vpop.permute.xlu0 %1516
    %v1519 = vmul.f32 %v1517, %v97
    %v1520 = vmul.f32 %v1517, %v98
    %v1521 = vadd.f32 %v1513, %v1519
    %v1522 = vadd.f32 %v1514, %v1520
    %1523 = vset.pattern.permute.xlu0 3
    %1524 = vperm.xlu0 %1523, %v1499
    %v1525 = vpop.permute.xlu0 %1524
    %v1527 = vmul.f32 %v1525, %v119
    %v1528 = vmul.f32 %v1525, %v120
    %v1529 = vadd.f32 %v1521, %v1527
    %v1530 = vadd.f32 %v1522, %v1528
    %1531 = vset.pattern.permute.xlu0 4
    %1532 = vperm.xlu0 %1531, %v1499
    %v1533 = vpop.permute.xlu0 %1532
    %v1535 = vmul.f32 %v1533, %v141
    %v1536 = vmul.f32 %v1533, %v142
    %v1537 = vadd.f32 %v1529, %v1535
    %v1538 = vadd.f32 %v1530, %v1536
    %1539 = vset.pattern.permute.xlu0 5
    %1540 = vperm.xlu0 %1539, %v1499
    %v1541 = vpop.permute.xlu0 %1540
    %v1543 = vmul.f32 %v1541, %v163
    %v1544 = vmul.f32 %v1541, %v164
    %v1545 = vadd.f32 %v1537, %v1543
    %v1546 = vadd.f32 %v1538, %v1544
    %1547 = vset.pattern.permute.xlu0 6
    %1548 = vperm.xlu0 %1547, %v1499
    %v1549 = vpop.permute.xlu0 %1548
    %v1551 = vmul.f32 %v1549, %v185
    %v1552 = vmul.f32 %v1549, %v186
    %v1553 = vadd.f32 %v1545, %v1551
    %v1554 = vadd.f32 %v1546, %v1552
    %1555 = vset.pattern.permute.xlu0 7
    %1556 = vperm.xlu0 %1555, %v1499
    %v1557 = vpop.permute.xlu0 %1556
    %v1559 = vmul.f32 %v1557, %v200
    %v1560 = vmul.f32 %v1557, %v201
    %v1561 = vadd.f32 %v1553, %v1559
    %v1562 = vadd.f32 %v1554, %v1560
    %1563 = vset.pattern.permute.xlu0 8
    %1564 = vperm.xlu0 %1563, %v1499
    %v1565 = vpop.permute.xlu0 %1564
    %v1567 = vmul.f32 %v1565, %v222
    %v1568 = vmul.f32 %v1565, %v223
    %v1569 = vadd.f32 %v1561, %v1567
    %v1570 = vadd.f32 %v1562, %v1568
    %1571 = vset.pattern.permute.xlu0 9
    %1572 = vperm.xlu0 %1571, %v1499
    %v1573 = vpop.permute.xlu0 %1572
    %v1575 = vmul.f32 %v1573, %v244
    %v1576 = vmul.f32 %v1573, %v245
    %v1577 = vadd.f32 %v1569, %v1575
    %v1578 = vadd.f32 %v1570, %v1576
    %1579 = vset.pattern.permute.xlu0 10
    %1580 = vperm.xlu0 %1579, %v1499
    %v1581 = vpop.permute.xlu0 %1580
    %v1583 = vmul.f32 %v1581, %v266
    %v1584 = vmul.f32 %v1581, %v267
    %v1585 = vadd.f32 %v1577, %v1583
    %v1586 = vadd.f32 %v1578, %v1584
    %1587 = vset.pattern.permute.xlu0 11
    %1588 = vperm.xlu0 %1587, %v1499
    %v1589 = vpop.permute.xlu0 %1588
    %v1591 = vmul.f32 %v1589, %v288
    %v1592 = vmul.f32 %v1589, %v289
    %v1593 = vadd.f32 %v1585, %v1591
    %v1594 = vadd.f32 %v1586, %v1592
    %1595 = vset.pattern.permute.xlu0 12
    %1596 = vperm.xlu0 %1595, %v1499
    %v1597 = vpop.permute.xlu0 %1596
    %v1599 = vmul.f32 %v1597, %v310
    %v1600 = vmul.f32 %v1597, %v311
    %v1601 = vadd.f32 %v1593, %v1599
    %v1602 = vadd.f32 %v1594, %v1600
    %1603 = vset.pattern.permute.xlu0 13
    %1604 = vperm.xlu0 %1603, %v1499
    %v1605 = vpop.permute.xlu0 %1604
    %v1607 = vmul.f32 %v1605, %v332
    %v1608 = vmul.f32 %v1605, %v333
    %v1609 = vadd.f32 %v1601, %v1607
    %v1610 = vadd.f32 %v1602, %v1608
    %1611 = vset.pattern.permute.xlu0 14
    %1612 = vperm.xlu0 %1611, %v1499
    %v1613 = vpop.permute.xlu0 %1612
    %v1615 = vmul.f32 %v1613, %v354
    %v1616 = vmul.f32 %v1613, %v355
    %v1617 = vadd.f32 %v1609, %v1615
    %v1618 = vadd.f32 %v1610, %v1616
    %1619 = vrot.lane.b32.xlu0 %v1617, 112
    %v1620 = vpop.permute.xlu0 %1619
    %1621 = vrot.lane.b32.xlu0 %v1618, 112
    %v1622 = vpop.permute.xlu0 %1621
    %v1623 = vsel %vm480, %v1620, %v1622
    %v1624 = vsel %vm480, %v1622, %v1620
    %s1625 = scalar_lea.vmem %s1, 39
    %v1626 = vld [vmem:[%s1625] ss:$8 sm:$0x3]
    %v1628 = vlaneseq
    %v1629 = vshrl.u32 %v1628, 7
    %v1630 = vsub.s32 0, %v1629
    %v1631 = vrot.slane %v1626, %v1630
    %v1632 = vlaneseq
    %v1633 = vshrl.u32 %v1632, 7
    %v1634 = vsub.s32 1, %v1633
    %v1635 = vrot.slane %v1626, %v1634
    %v1638 = vmul.f32 %v1623, %v1631
    %v1639 = vmul.f32 %v1624, %v1635
    %v1640 = vadd.f32 %v1497, %v1638
    %v1641 = vadd.f32 %v1498, %v1639
    %v1642 = vld [vmem:[%s2 + $0x48] sm:$0xff]
    %1644 = vset.pattern.permute.xlu0 0
    %1645 = vperm.xlu0 %1644, %v1642
    %v1646 = vpop.permute.xlu0 %1645
    %v1648 = vmul.f32 %v1646, %v53
    %v1649 = vmul.f32 %v1646, %v54
    %1650 = vset.pattern.permute.xlu0 1
    %1651 = vperm.xlu0 %1650, %v1642
    %v1652 = vpop.permute.xlu0 %1651
    %v1654 = vmul.f32 %v1652, %v75
    %v1655 = vmul.f32 %v1652, %v76
    %v1656 = vadd.f32 %v1648, %v1654
    %v1657 = vadd.f32 %v1649, %v1655
    %1658 = vset.pattern.permute.xlu0 2
    %1659 = vperm.xlu0 %1658, %v1642
    %v1660 = vpop.permute.xlu0 %1659
    %v1662 = vmul.f32 %v1660, %v97
    %v1663 = vmul.f32 %v1660, %v98
    %v1664 = vadd.f32 %v1656, %v1662
    %v1665 = vadd.f32 %v1657, %v1663
    %1666 = vset.pattern.permute.xlu0 3
    %1667 = vperm.xlu0 %1666, %v1642
    %v1668 = vpop.permute.xlu0 %1667
    %v1670 = vmul.f32 %v1668, %v119
    %v1671 = vmul.f32 %v1668, %v120
    %v1672 = vadd.f32 %v1664, %v1670
    %v1673 = vadd.f32 %v1665, %v1671
    %1674 = vset.pattern.permute.xlu0 4
    %1675 = vperm.xlu0 %1674, %v1642
    %v1676 = vpop.permute.xlu0 %1675
    %v1678 = vmul.f32 %v1676, %v141
    %v1679 = vmul.f32 %v1676, %v142
    %v1680 = vadd.f32 %v1672, %v1678
    %v1681 = vadd.f32 %v1673, %v1679
    %1682 = vset.pattern.permute.xlu0 5
    %1683 = vperm.xlu0 %1682, %v1642
    %v1684 = vpop.permute.xlu0 %1683
    %v1686 = vmul.f32 %v1684, %v163
    %v1687 = vmul.f32 %v1684, %v164
    %v1688 = vadd.f32 %v1680, %v1686
    %v1689 = vadd.f32 %v1681, %v1687
    %1690 = vset.pattern.permute.xlu0 6
    %1691 = vperm.xlu0 %1690, %v1642
    %v1692 = vpop.permute.xlu0 %1691
    %v1694 = vmul.f32 %v1692, %v185
    %v1695 = vmul.f32 %v1692, %v186
    %v1696 = vadd.f32 %v1688, %v1694
    %v1697 = vadd.f32 %v1689, %v1695
    %1698 = vset.pattern.permute.xlu0 7
    %1699 = vperm.xlu0 %1698, %v1642
    %v1700 = vpop.permute.xlu0 %1699
    %v1702 = vmul.f32 %v1700, %v200
    %v1703 = vmul.f32 %v1700, %v201
    %v1704 = vadd.f32 %v1696, %v1702
    %v1705 = vadd.f32 %v1697, %v1703
    %1706 = vset.pattern.permute.xlu0 8
    %1707 = vperm.xlu0 %1706, %v1642
    %v1708 = vpop.permute.xlu0 %1707
    %v1710 = vmul.f32 %v1708, %v222
    %v1711 = vmul.f32 %v1708, %v223
    %v1712 = vadd.f32 %v1704, %v1710
    %v1713 = vadd.f32 %v1705, %v1711
    %1714 = vset.pattern.permute.xlu0 9
    %1715 = vperm.xlu0 %1714, %v1642
    %v1716 = vpop.permute.xlu0 %1715
    %v1718 = vmul.f32 %v1716, %v244
    %v1719 = vmul.f32 %v1716, %v245
    %v1720 = vadd.f32 %v1712, %v1718
    %v1721 = vadd.f32 %v1713, %v1719
    %1722 = vset.pattern.permute.xlu0 10
    %1723 = vperm.xlu0 %1722, %v1642
    %v1724 = vpop.permute.xlu0 %1723
    %v1726 = vmul.f32 %v1724, %v266
    %v1727 = vmul.f32 %v1724, %v267
    %v1728 = vadd.f32 %v1720, %v1726
    %v1729 = vadd.f32 %v1721, %v1727
    %1730 = vset.pattern.permute.xlu0 11
    %1731 = vperm.xlu0 %1730, %v1642
    %v1732 = vpop.permute.xlu0 %1731
    %v1734 = vmul.f32 %v1732, %v288
    %v1735 = vmul.f32 %v1732, %v289
    %v1736 = vadd.f32 %v1728, %v1734
    %v1737 = vadd.f32 %v1729, %v1735
    %1738 = vset.pattern.permute.xlu0 12
    %1739 = vperm.xlu0 %1738, %v1642
    %v1740 = vpop.permute.xlu0 %1739
    %v1742 = vmul.f32 %v1740, %v310
    %v1743 = vmul.f32 %v1740, %v311
    %v1744 = vadd.f32 %v1736, %v1742
    %v1745 = vadd.f32 %v1737, %v1743
    %1746 = vset.pattern.permute.xlu0 13
    %1747 = vperm.xlu0 %1746, %v1642
    %v1748 = vpop.permute.xlu0 %1747
    %v1750 = vmul.f32 %v1748, %v332
    %v1751 = vmul.f32 %v1748, %v333
    %v1752 = vadd.f32 %v1744, %v1750
    %v1753 = vadd.f32 %v1745, %v1751
    %1754 = vset.pattern.permute.xlu0 14
    %1755 = vperm.xlu0 %1754, %v1642
    %v1756 = vpop.permute.xlu0 %1755
    %v1758 = vmul.f32 %v1756, %v354
    %v1759 = vmul.f32 %v1756, %v355
    %v1760 = vadd.f32 %v1752, %v1758
    %v1761 = vadd.f32 %v1753, %v1759
    %1762 = vrot.lane.b32.xlu0 %v1760, 96
    %v1763 = vpop.permute.xlu0 %1762
    %1764 = vrot.lane.b32.xlu0 %v1761, 96
    %v1765 = vpop.permute.xlu0 %1764
    %v1766 = vsel %vm622, %v1763, %v1765
    %v1767 = vsel %vm622, %v1765, %v1763
    %s1768 = scalar_lea.vmem %s1, 48
    %v1769 = vld [vmem:[%s1768] ss:$8 sm:$0x3]
    %v1771 = vlaneseq
    %v1772 = vshrl.u32 %v1771, 7
    %v1773 = vsub.s32 0, %v1772
    %v1774 = vrot.slane %v1769, %v1773
    %v1775 = vlaneseq
    %v1776 = vshrl.u32 %v1775, 7
    %v1777 = vsub.s32 1, %v1776
    %v1778 = vrot.slane %v1769, %v1777
    %v1781 = vmul.f32 %v1766, %v1774
    %v1782 = vmul.f32 %v1767, %v1778
    %v1783 = vadd.f32 %v1640, %v1781
    %v1784 = vadd.f32 %v1641, %v1782
    %v1785 = vld [vmem:[%s2 + $0x50] sm:$0xff]
    %1787 = vset.pattern.permute.xlu0 0
    %1788 = vperm.xlu0 %1787, %v1785
    %v1789 = vpop.permute.xlu0 %1788
    %v1791 = vmul.f32 %v1789, %v53
    %v1792 = vmul.f32 %v1789, %v54
    %1793 = vset.pattern.permute.xlu0 1
    %1794 = vperm.xlu0 %1793, %v1785
    %v1795 = vpop.permute.xlu0 %1794
    %v1797 = vmul.f32 %v1795, %v75
    %v1798 = vmul.f32 %v1795, %v76
    %v1799 = vadd.f32 %v1791, %v1797
    %v1800 = vadd.f32 %v1792, %v1798
    %1801 = vset.pattern.permute.xlu0 2
    %1802 = vperm.xlu0 %1801, %v1785
    %v1803 = vpop.permute.xlu0 %1802
    %v1805 = vmul.f32 %v1803, %v97
    %v1806 = vmul.f32 %v1803, %v98
    %v1807 = vadd.f32 %v1799, %v1805
    %v1808 = vadd.f32 %v1800, %v1806
    %1809 = vset.pattern.permute.xlu0 3
    %1810 = vperm.xlu0 %1809, %v1785
    %v1811 = vpop.permute.xlu0 %1810
    %v1813 = vmul.f32 %v1811, %v119
    %v1814 = vmul.f32 %v1811, %v120
    %v1815 = vadd.f32 %v1807, %v1813
    %v1816 = vadd.f32 %v1808, %v1814
    %1817 = vset.pattern.permute.xlu0 4
    %1818 = vperm.xlu0 %1817, %v1785
    %v1819 = vpop.permute.xlu0 %1818
    %v1821 = vmul.f32 %v1819, %v141
    %v1822 = vmul.f32 %v1819, %v142
    %v1823 = vadd.f32 %v1815, %v1821
    %v1824 = vadd.f32 %v1816, %v1822
    %1825 = vset.pattern.permute.xlu0 5
    %1826 = vperm.xlu0 %1825, %v1785
    %v1827 = vpop.permute.xlu0 %1826
    %v1829 = vmul.f32 %v1827, %v163
    %v1830 = vmul.f32 %v1827, %v164
    %v1831 = vadd.f32 %v1823, %v1829
    %v1832 = vadd.f32 %v1824, %v1830
    %1833 = vset.pattern.permute.xlu0 6
    %1834 = vperm.xlu0 %1833, %v1785
    %v1835 = vpop.permute.xlu0 %1834
    %v1837 = vmul.f32 %v1835, %v185
    %v1838 = vmul.f32 %v1835, %v186
    %v1839 = vadd.f32 %v1831, %v1837
    %v1840 = vadd.f32 %v1832, %v1838
    %1841 = vset.pattern.permute.xlu0 7
    %1842 = vperm.xlu0 %1841, %v1785
    %v1843 = vpop.permute.xlu0 %1842
    %v1845 = vmul.f32 %v1843, %v200
    %v1846 = vmul.f32 %v1843, %v201
    %v1847 = vadd.f32 %v1839, %v1845
    %v1848 = vadd.f32 %v1840, %v1846
    %1849 = vset.pattern.permute.xlu0 8
    %1850 = vperm.xlu0 %1849, %v1785
    %v1851 = vpop.permute.xlu0 %1850
    %v1853 = vmul.f32 %v1851, %v222
    %v1854 = vmul.f32 %v1851, %v223
    %v1855 = vadd.f32 %v1847, %v1853
    %v1856 = vadd.f32 %v1848, %v1854
    %1857 = vset.pattern.permute.xlu0 9
    %1858 = vperm.xlu0 %1857, %v1785
    %v1859 = vpop.permute.xlu0 %1858
    %v1861 = vmul.f32 %v1859, %v244
    %v1862 = vmul.f32 %v1859, %v245
    %v1863 = vadd.f32 %v1855, %v1861
    %v1864 = vadd.f32 %v1856, %v1862
    %1865 = vset.pattern.permute.xlu0 10
    %1866 = vperm.xlu0 %1865, %v1785
    %v1867 = vpop.permute.xlu0 %1866
    %v1869 = vmul.f32 %v1867, %v266
    %v1870 = vmul.f32 %v1867, %v267
    %v1871 = vadd.f32 %v1863, %v1869
    %v1872 = vadd.f32 %v1864, %v1870
    %1873 = vset.pattern.permute.xlu0 11
    %1874 = vperm.xlu0 %1873, %v1785
    %v1875 = vpop.permute.xlu0 %1874
    %v1877 = vmul.f32 %v1875, %v288
    %v1878 = vmul.f32 %v1875, %v289
    %v1879 = vadd.f32 %v1871, %v1877
    %v1880 = vadd.f32 %v1872, %v1878
    %1881 = vset.pattern.permute.xlu0 12
    %1882 = vperm.xlu0 %1881, %v1785
    %v1883 = vpop.permute.xlu0 %1882
    %v1885 = vmul.f32 %v1883, %v310
    %v1886 = vmul.f32 %v1883, %v311
    %v1887 = vadd.f32 %v1879, %v1885
    %v1888 = vadd.f32 %v1880, %v1886
    %1889 = vset.pattern.permute.xlu0 13
    %1890 = vperm.xlu0 %1889, %v1785
    %v1891 = vpop.permute.xlu0 %1890
    %v1893 = vmul.f32 %v1891, %v332
    %v1894 = vmul.f32 %v1891, %v333
    %v1895 = vadd.f32 %v1887, %v1893
    %v1896 = vadd.f32 %v1888, %v1894
    %1897 = vset.pattern.permute.xlu0 14
    %1898 = vperm.xlu0 %1897, %v1785
    %v1899 = vpop.permute.xlu0 %1898
    %v1901 = vmul.f32 %v1899, %v354
    %v1902 = vmul.f32 %v1899, %v355
    %v1903 = vadd.f32 %v1895, %v1901
    %v1904 = vadd.f32 %v1896, %v1902
    %1905 = vrot.lane.b32.xlu0 %v1903, 80
    %v1906 = vpop.permute.xlu0 %1905
    %1907 = vrot.lane.b32.xlu0 %v1904, 80
    %v1908 = vpop.permute.xlu0 %1907
    %v1909 = vsel %vm766, %v1906, %v1908
    %v1910 = vsel %vm766, %v1908, %v1906
    %s1911 = scalar_lea.vmem %s1, 49
    %v1912 = vld [vmem:[%s1911] ss:$8 sm:$0x3]
    %v1914 = vlaneseq
    %v1915 = vshrl.u32 %v1914, 7
    %v1916 = vsub.s32 0, %v1915
    %v1917 = vrot.slane %v1912, %v1916
    %v1918 = vlaneseq
    %v1919 = vshrl.u32 %v1918, 7
    %v1920 = vsub.s32 1, %v1919
    %v1921 = vrot.slane %v1912, %v1920
    %v1924 = vmul.f32 %v1909, %v1917
    %v1925 = vmul.f32 %v1910, %v1921
    %v1926 = vadd.f32 %v1783, %v1924
    %v1927 = vadd.f32 %v1784, %v1925
    %v1928 = vld [vmem:[%s2 + $0x58] sm:$0xff]
    %1930 = vset.pattern.permute.xlu0 0
    %1931 = vperm.xlu0 %1930, %v1928
    %v1932 = vpop.permute.xlu0 %1931
    %v1934 = vmul.f32 %v1932, %v53
    %v1935 = vmul.f32 %v1932, %v54
    %1936 = vset.pattern.permute.xlu0 1
    %1937 = vperm.xlu0 %1936, %v1928
    %v1938 = vpop.permute.xlu0 %1937
    %v1940 = vmul.f32 %v1938, %v75
    %v1941 = vmul.f32 %v1938, %v76
    %v1942 = vadd.f32 %v1934, %v1940
    %v1943 = vadd.f32 %v1935, %v1941
    %1944 = vset.pattern.permute.xlu0 2
    %1945 = vperm.xlu0 %1944, %v1928
    %v1946 = vpop.permute.xlu0 %1945
    %v1948 = vmul.f32 %v1946, %v97
    %v1949 = vmul.f32 %v1946, %v98
    %v1950 = vadd.f32 %v1942, %v1948
    %v1951 = vadd.f32 %v1943, %v1949
    %1952 = vset.pattern.permute.xlu0 3
    %1953 = vperm.xlu0 %1952, %v1928
    %v1954 = vpop.permute.xlu0 %1953
    %v1956 = vmul.f32 %v1954, %v119
    %v1957 = vmul.f32 %v1954, %v120
    %v1958 = vadd.f32 %v1950, %v1956
    %v1959 = vadd.f32 %v1951, %v1957
    %1960 = vset.pattern.permute.xlu0 4
    %1961 = vperm.xlu0 %1960, %v1928
    %v1962 = vpop.permute.xlu0 %1961
    %v1964 = vmul.f32 %v1962, %v141
    %v1965 = vmul.f32 %v1962, %v142
    %v1966 = vadd.f32 %v1958, %v1964
    %v1967 = vadd.f32 %v1959, %v1965
    %1968 = vset.pattern.permute.xlu0 5
    %1969 = vperm.xlu0 %1968, %v1928
    %v1970 = vpop.permute.xlu0 %1969
    %v1972 = vmul.f32 %v1970, %v163
    %v1973 = vmul.f32 %v1970, %v164
    %v1974 = vadd.f32 %v1966, %v1972
    %v1975 = vadd.f32 %v1967, %v1973
    %1976 = vset.pattern.permute.xlu0 6
    %1977 = vperm.xlu0 %1976, %v1928
    %v1978 = vpop.permute.xlu0 %1977
    %v1980 = vmul.f32 %v1978, %v185
    %v1981 = vmul.f32 %v1978, %v186
    %v1982 = vadd.f32 %v1974, %v1980
    %v1983 = vadd.f32 %v1975, %v1981
    %1984 = vset.pattern.permute.xlu0 7
    %1985 = vperm.xlu0 %1984, %v1928
    %v1986 = vpop.permute.xlu0 %1985
    %v1988 = vmul.f32 %v1986, %v200
    %v1989 = vmul.f32 %v1986, %v201
    %v1990 = vadd.f32 %v1982, %v1988
    %v1991 = vadd.f32 %v1983, %v1989
    %1992 = vset.pattern.permute.xlu0 8
    %1993 = vperm.xlu0 %1992, %v1928
    %v1994 = vpop.permute.xlu0 %1993
    %v1996 = vmul.f32 %v1994, %v222
    %v1997 = vmul.f32 %v1994, %v223
    %v1998 = vadd.f32 %v1990, %v1996
    %v1999 = vadd.f32 %v1991, %v1997
    %2000 = vset.pattern.permute.xlu0 9
    %2001 = vperm.xlu0 %2000, %v1928
    %v2002 = vpop.permute.xlu0 %2001
    %v2004 = vmul.f32 %v2002, %v244
    %v2005 = vmul.f32 %v2002, %v245
    %v2006 = vadd.f32 %v1998, %v2004
    %v2007 = vadd.f32 %v1999, %v2005
    %2008 = vset.pattern.permute.xlu0 10
    %2009 = vperm.xlu0 %2008, %v1928
    %v2010 = vpop.permute.xlu0 %2009
    %v2012 = vmul.f32 %v2010, %v266
    %v2013 = vmul.f32 %v2010, %v267
    %v2014 = vadd.f32 %v2006, %v2012
    %v2015 = vadd.f32 %v2007, %v2013
    %2016 = vset.pattern.permute.xlu0 11
    %2017 = vperm.xlu0 %2016, %v1928
    %v2018 = vpop.permute.xlu0 %2017
    %v2020 = vmul.f32 %v2018, %v288
    %v2021 = vmul.f32 %v2018, %v289
    %v2022 = vadd.f32 %v2014, %v2020
    %v2023 = vadd.f32 %v2015, %v2021
    %2024 = vset.pattern.permute.xlu0 12
    %2025 = vperm.xlu0 %2024, %v1928
    %v2026 = vpop.permute.xlu0 %2025
    %v2028 = vmul.f32 %v2026, %v310
    %v2029 = vmul.f32 %v2026, %v311
    %v2030 = vadd.f32 %v2022, %v2028
    %v2031 = vadd.f32 %v2023, %v2029
    %2032 = vset.pattern.permute.xlu0 13
    %2033 = vperm.xlu0 %2032, %v1928
    %v2034 = vpop.permute.xlu0 %2033
    %v2036 = vmul.f32 %v2034, %v332
    %v2037 = vmul.f32 %v2034, %v333
    %v2038 = vadd.f32 %v2030, %v2036
    %v2039 = vadd.f32 %v2031, %v2037
    %2040 = vset.pattern.permute.xlu0 14
    %2041 = vperm.xlu0 %2040, %v1928
    %v2042 = vpop.permute.xlu0 %2041
    %v2044 = vmul.f32 %v2042, %v354
    %v2045 = vmul.f32 %v2042, %v355
    %v2046 = vadd.f32 %v2038, %v2044
    %v2047 = vadd.f32 %v2039, %v2045
    %2048 = vrot.lane.b32.xlu0 %v2046, 64
    %v2049 = vpop.permute.xlu0 %2048
    %2050 = vrot.lane.b32.xlu0 %v2047, 64
    %v2051 = vpop.permute.xlu0 %2050
    %v2052 = vsel %vm910, %v2049, %v2051
    %v2053 = vsel %vm910, %v2051, %v2049
    %s2054 = scalar_lea.vmem %s1, 50
    %v2055 = vld [vmem:[%s2054] ss:$8 sm:$0x3]
    %v2057 = vlaneseq
    %v2058 = vshrl.u32 %v2057, 7
    %v2059 = vsub.s32 0, %v2058
    %v2060 = vrot.slane %v2055, %v2059
    %v2061 = vlaneseq
    %v2062 = vshrl.u32 %v2061, 7
    %v2063 = vsub.s32 1, %v2062
    %v2064 = vrot.slane %v2055, %v2063
    %v2067 = vmul.f32 %v2052, %v2060
    %v2068 = vmul.f32 %v2053, %v2064
    %v2069 = vadd.f32 %v1926, %v2067
    %v2070 = vadd.f32 %v1927, %v2068
    %v2071 = vld [vmem:[%s2 + $0x60] sm:$0xff]
    %2073 = vset.pattern.permute.xlu0 0
    %2074 = vperm.xlu0 %2073, %v2071
    %v2075 = vpop.permute.xlu0 %2074
    %v2077 = vmul.f32 %v2075, %v53
    %v2078 = vmul.f32 %v2075, %v54
    %2079 = vset.pattern.permute.xlu0 1
    %2080 = vperm.xlu0 %2079, %v2071
    %v2081 = vpop.permute.xlu0 %2080
    %v2083 = vmul.f32 %v2081, %v75
    %v2084 = vmul.f32 %v2081, %v76
    %v2085 = vadd.f32 %v2077, %v2083
    %v2086 = vadd.f32 %v2078, %v2084
    %2087 = vset.pattern.permute.xlu0 2
    %2088 = vperm.xlu0 %2087, %v2071
    %v2089 = vpop.permute.xlu0 %2088
    %v2091 = vmul.f32 %v2089, %v97
    %v2092 = vmul.f32 %v2089, %v98
    %v2093 = vadd.f32 %v2085, %v2091
    %v2094 = vadd.f32 %v2086, %v2092
    %2095 = vset.pattern.permute.xlu0 3
    %2096 = vperm.xlu0 %2095, %v2071
    %v2097 = vpop.permute.xlu0 %2096
    %v2099 = vmul.f32 %v2097, %v119
    %v2100 = vmul.f32 %v2097, %v120
    %v2101 = vadd.f32 %v2093, %v2099
    %v2102 = vadd.f32 %v2094, %v2100
    %2103 = vset.pattern.permute.xlu0 4
    %2104 = vperm.xlu0 %2103, %v2071
    %v2105 = vpop.permute.xlu0 %2104
    %v2107 = vmul.f32 %v2105, %v141
    %v2108 = vmul.f32 %v2105, %v142
    %v2109 = vadd.f32 %v2101, %v2107
    %v2110 = vadd.f32 %v2102, %v2108
    %2111 = vset.pattern.permute.xlu0 5
    %2112 = vperm.xlu0 %2111, %v2071
    %v2113 = vpop.permute.xlu0 %2112
    %v2115 = vmul.f32 %v2113, %v163
    %v2116 = vmul.f32 %v2113, %v164
    %v2117 = vadd.f32 %v2109, %v2115
    %v2118 = vadd.f32 %v2110, %v2116
    %2119 = vset.pattern.permute.xlu0 6
    %2120 = vperm.xlu0 %2119, %v2071
    %v2121 = vpop.permute.xlu0 %2120
    %v2123 = vmul.f32 %v2121, %v185
    %v2124 = vmul.f32 %v2121, %v186
    %v2125 = vadd.f32 %v2117, %v2123
    %v2126 = vadd.f32 %v2118, %v2124
    %2127 = vset.pattern.permute.xlu0 7
    %2128 = vperm.xlu0 %2127, %v2071
    %v2129 = vpop.permute.xlu0 %2128
    %v2131 = vmul.f32 %v2129, %v200
    %v2132 = vmul.f32 %v2129, %v201
    %v2133 = vadd.f32 %v2125, %v2131
    %v2134 = vadd.f32 %v2126, %v2132
    %2135 = vset.pattern.permute.xlu0 8
    %2136 = vperm.xlu0 %2135, %v2071
    %v2137 = vpop.permute.xlu0 %2136
    %v2139 = vmul.f32 %v2137, %v222
    %v2140 = vmul.f32 %v2137, %v223
    %v2141 = vadd.f32 %v2133, %v2139
    %v2142 = vadd.f32 %v2134, %v2140
    %2143 = vset.pattern.permute.xlu0 9
    %2144 = vperm.xlu0 %2143, %v2071
    %v2145 = vpop.permute.xlu0 %2144
    %v2147 = vmul.f32 %v2145, %v244
    %v2148 = vmul.f32 %v2145, %v245
    %v2149 = vadd.f32 %v2141, %v2147
    %v2150 = vadd.f32 %v2142, %v2148
    %2151 = vset.pattern.permute.xlu0 10
    %2152 = vperm.xlu0 %2151, %v2071
    %v2153 = vpop.permute.xlu0 %2152
    %v2155 = vmul.f32 %v2153, %v266
    %v2156 = vmul.f32 %v2153, %v267
    %v2157 = vadd.f32 %v2149, %v2155
    %v2158 = vadd.f32 %v2150, %v2156
    %2159 = vset.pattern.permute.xlu0 11
    %2160 = vperm.xlu0 %2159, %v2071
    %v2161 = vpop.permute.xlu0 %2160
    %v2163 = vmul.f32 %v2161, %v288
    %v2164 = vmul.f32 %v2161, %v289
    %v2165 = vadd.f32 %v2157, %v2163
    %v2166 = vadd.f32 %v2158, %v2164
    %2167 = vset.pattern.permute.xlu0 12
    %2168 = vperm.xlu0 %2167, %v2071
    %v2169 = vpop.permute.xlu0 %2168
    %v2171 = vmul.f32 %v2169, %v310
    %v2172 = vmul.f32 %v2169, %v311
    %v2173 = vadd.f32 %v2165, %v2171
    %v2174 = vadd.f32 %v2166, %v2172
    %2175 = vset.pattern.permute.xlu0 13
    %2176 = vperm.xlu0 %2175, %v2071
    %v2177 = vpop.permute.xlu0 %2176
    %v2179 = vmul.f32 %v2177, %v332
    %v2180 = vmul.f32 %v2177, %v333
    %v2181 = vadd.f32 %v2173, %v2179
    %v2182 = vadd.f32 %v2174, %v2180
    %2183 = vset.pattern.permute.xlu0 14
    %2184 = vperm.xlu0 %2183, %v2071
    %v2185 = vpop.permute.xlu0 %2184
    %v2187 = vmul.f32 %v2185, %v354
    %v2188 = vmul.f32 %v2185, %v355
    %v2189 = vadd.f32 %v2181, %v2187
    %v2190 = vadd.f32 %v2182, %v2188
    %2191 = vrot.lane.b32.xlu0 %v2189, 48
    %v2192 = vpop.permute.xlu0 %2191
    %2193 = vrot.lane.b32.xlu0 %v2190, 48
    %v2194 = vpop.permute.xlu0 %2193
    %v2195 = vsel %vm1054, %v2192, %v2194
    %v2196 = vsel %vm1054, %v2194, %v2192
    %s2197 = scalar_lea.vmem %s1, 51
    %v2198 = vld [vmem:[%s2197] ss:$8 sm:$0x3]
    %v2200 = vlaneseq
    %v2201 = vshrl.u32 %v2200, 7
    %v2202 = vsub.s32 0, %v2201
    %v2203 = vrot.slane %v2198, %v2202
    %v2204 = vlaneseq
    %v2205 = vshrl.u32 %v2204, 7
    %v2206 = vsub.s32 1, %v2205
    %v2207 = vrot.slane %v2198, %v2206
    %v2210 = vmul.f32 %v2195, %v2203
    %v2211 = vmul.f32 %v2196, %v2207
    %v2212 = vadd.f32 %v2069, %v2210
    %v2213 = vadd.f32 %v2070, %v2211
    %v2214 = vld [vmem:[%s2 + $0x68] sm:$0xff]
    %2216 = vset.pattern.permute.xlu0 0
    %2217 = vperm.xlu0 %2216, %v2214
    %v2218 = vpop.permute.xlu0 %2217
    %v2220 = vmul.f32 %v2218, %v53
    %v2221 = vmul.f32 %v2218, %v54
    %2222 = vset.pattern.permute.xlu0 1
    %2223 = vperm.xlu0 %2222, %v2214
    %v2224 = vpop.permute.xlu0 %2223
    %v2226 = vmul.f32 %v2224, %v75
    %v2227 = vmul.f32 %v2224, %v76
    %v2228 = vadd.f32 %v2220, %v2226
    %v2229 = vadd.f32 %v2221, %v2227
    %2230 = vset.pattern.permute.xlu0 2
    %2231 = vperm.xlu0 %2230, %v2214
    %v2232 = vpop.permute.xlu0 %2231
    %v2234 = vmul.f32 %v2232, %v97
    %v2235 = vmul.f32 %v2232, %v98
    %v2236 = vadd.f32 %v2228, %v2234
    %v2237 = vadd.f32 %v2229, %v2235
    %2238 = vset.pattern.permute.xlu0 3
    %2239 = vperm.xlu0 %2238, %v2214
    %v2240 = vpop.permute.xlu0 %2239
    %v2242 = vmul.f32 %v2240, %v119
    %v2243 = vmul.f32 %v2240, %v120
    %v2244 = vadd.f32 %v2236, %v2242
    %v2245 = vadd.f32 %v2237, %v2243
    %2246 = vset.pattern.permute.xlu0 4
    %2247 = vperm.xlu0 %2246, %v2214
    %v2248 = vpop.permute.xlu0 %2247
    %v2250 = vmul.f32 %v2248, %v141
    %v2251 = vmul.f32 %v2248, %v142
    %v2252 = vadd.f32 %v2244, %v2250
    %v2253 = vadd.f32 %v2245, %v2251
    %2254 = vset.pattern.permute.xlu0 5
    %2255 = vperm.xlu0 %2254, %v2214
    %v2256 = vpop.permute.xlu0 %2255
    %v2258 = vmul.f32 %v2256, %v163
    %v2259 = vmul.f32 %v2256, %v164
    %v2260 = vadd.f32 %v2252, %v2258
    %v2261 = vadd.f32 %v2253, %v2259
    %2262 = vset.pattern.permute.xlu0 6
    %2263 = vperm.xlu0 %2262, %v2214
    %v2264 = vpop.permute.xlu0 %2263
    %v2266 = vmul.f32 %v2264, %v185
    %v2267 = vmul.f32 %v2264, %v186
    %v2268 = vadd.f32 %v2260, %v2266
    %v2269 = vadd.f32 %v2261, %v2267
    %2270 = vset.pattern.permute.xlu0 7
    %2271 = vperm.xlu0 %2270, %v2214
    %v2272 = vpop.permute.xlu0 %2271
    %v2274 = vmul.f32 %v2272, %v200
    %v2275 = vmul.f32 %v2272, %v201
    %v2276 = vadd.f32 %v2268, %v2274
    %v2277 = vadd.f32 %v2269, %v2275
    %2278 = vset.pattern.permute.xlu0 8
    %2279 = vperm.xlu0 %2278, %v2214
    %v2280 = vpop.permute.xlu0 %2279
    %v2282 = vmul.f32 %v2280, %v222
    %v2283 = vmul.f32 %v2280, %v223
    %v2284 = vadd.f32 %v2276, %v2282
    %v2285 = vadd.f32 %v2277, %v2283
    %2286 = vset.pattern.permute.xlu0 9
    %2287 = vperm.xlu0 %2286, %v2214
    %v2288 = vpop.permute.xlu0 %2287
    %v2290 = vmul.f32 %v2288, %v244
    %v2291 = vmul.f32 %v2288, %v245
    %v2292 = vadd.f32 %v2284, %v2290
    %v2293 = vadd.f32 %v2285, %v2291
    %2294 = vset.pattern.permute.xlu0 10
    %2295 = vperm.xlu0 %2294, %v2214
    %v2296 = vpop.permute.xlu0 %2295
    %v2298 = vmul.f32 %v2296, %v266
    %v2299 = vmul.f32 %v2296, %v267
    %v2300 = vadd.f32 %v2292, %v2298
    %v2301 = vadd.f32 %v2293, %v2299
    %2302 = vset.pattern.permute.xlu0 11
    %2303 = vperm.xlu0 %2302, %v2214
    %v2304 = vpop.permute.xlu0 %2303
    %v2306 = vmul.f32 %v2304, %v288
    %v2307 = vmul.f32 %v2304, %v289
    %v2308 = vadd.f32 %v2300, %v2306
    %v2309 = vadd.f32 %v2301, %v2307
    %2310 = vset.pattern.permute.xlu0 12
    %2311 = vperm.xlu0 %2310, %v2214
    %v2312 = vpop.permute.xlu0 %2311
    %v2314 = vmul.f32 %v2312, %v310
    %v2315 = vmul.f32 %v2312, %v311
    %v2316 = vadd.f32 %v2308, %v2314
    %v2317 = vadd.f32 %v2309, %v2315
    %2318 = vset.pattern.permute.xlu0 13
    %2319 = vperm.xlu0 %2318, %v2214
    %v2320 = vpop.permute.xlu0 %2319
    %v2322 = vmul.f32 %v2320, %v332
    %v2323 = vmul.f32 %v2320, %v333
    %v2324 = vadd.f32 %v2316, %v2322
    %v2325 = vadd.f32 %v2317, %v2323
    %2326 = vset.pattern.permute.xlu0 14
    %2327 = vperm.xlu0 %2326, %v2214
    %v2328 = vpop.permute.xlu0 %2327
    %v2330 = vmul.f32 %v2328, %v354
    %v2331 = vmul.f32 %v2328, %v355
    %v2332 = vadd.f32 %v2324, %v2330
    %v2333 = vadd.f32 %v2325, %v2331
    %2334 = vrot.lane.b32.xlu0 %v2332, 32
    %v2335 = vpop.permute.xlu0 %2334
    %2336 = vrot.lane.b32.xlu0 %v2333, 32
    %v2337 = vpop.permute.xlu0 %2336
    %v2338 = vsel %vm1198, %v2335, %v2337
    %v2339 = vsel %vm1198, %v2337, %v2335
    %s2340 = scalar_lea.vmem %s1, 52
    %v2341 = vld [vmem:[%s2340] ss:$8 sm:$0x3]
    %v2343 = vlaneseq
    %v2344 = vshrl.u32 %v2343, 7
    %v2345 = vsub.s32 0, %v2344
    %v2346 = vrot.slane %v2341, %v2345
    %v2347 = vlaneseq
    %v2348 = vshrl.u32 %v2347, 7
    %v2349 = vsub.s32 1, %v2348
    %v2350 = vrot.slane %v2341, %v2349
    %v2353 = vmul.f32 %v2338, %v2346
    %v2354 = vmul.f32 %v2339, %v2350
    %v2355 = vadd.f32 %v2212, %v2353
    %v2356 = vadd.f32 %v2213, %v2354
    %v2357 = vld [vmem:[%s2 + $0x70] sm:$0xff]
    %2359 = vset.pattern.permute.xlu0 0
    %2360 = vperm.xlu0 %2359, %v2357
    %v2361 = vpop.permute.xlu0 %2360
    %v2363 = vmul.f32 %v2361, %v53
    %v2364 = vmul.f32 %v2361, %v54
    %2365 = vset.pattern.permute.xlu0 1
    %2366 = vperm.xlu0 %2365, %v2357
    %v2367 = vpop.permute.xlu0 %2366
    %v2369 = vmul.f32 %v2367, %v75
    %v2370 = vmul.f32 %v2367, %v76
    %v2371 = vadd.f32 %v2363, %v2369
    %v2372 = vadd.f32 %v2364, %v2370
    %2373 = vset.pattern.permute.xlu0 2
    %2374 = vperm.xlu0 %2373, %v2357
    %v2375 = vpop.permute.xlu0 %2374
    %v2377 = vmul.f32 %v2375, %v97
    %v2378 = vmul.f32 %v2375, %v98
    %v2379 = vadd.f32 %v2371, %v2377
    %v2380 = vadd.f32 %v2372, %v2378
    %2381 = vset.pattern.permute.xlu0 3
    %2382 = vperm.xlu0 %2381, %v2357
    %v2383 = vpop.permute.xlu0 %2382
    %v2385 = vmul.f32 %v2383, %v119
    %v2386 = vmul.f32 %v2383, %v120
    %v2387 = vadd.f32 %v2379, %v2385
    %v2388 = vadd.f32 %v2380, %v2386
    %2389 = vset.pattern.permute.xlu0 4
    %2390 = vperm.xlu0 %2389, %v2357
    %v2391 = vpop.permute.xlu0 %2390
    %v2393 = vmul.f32 %v2391, %v141
    %v2394 = vmul.f32 %v2391, %v142
    %v2395 = vadd.f32 %v2387, %v2393
    %v2396 = vadd.f32 %v2388, %v2394
    %2397 = vset.pattern.permute.xlu0 5
    %2398 = vperm.xlu0 %2397, %v2357
    %v2399 = vpop.permute.xlu0 %2398
    %v2401 = vmul.f32 %v2399, %v163
    %v2402 = vmul.f32 %v2399, %v164
    %v2403 = vadd.f32 %v2395, %v2401
    %v2404 = vadd.f32 %v2396, %v2402
    %2405 = vset.pattern.permute.xlu0 6
    %2406 = vperm.xlu0 %2405, %v2357
    %v2407 = vpop.permute.xlu0 %2406
    %v2409 = vmul.f32 %v2407, %v185
    %v2410 = vmul.f32 %v2407, %v186
    %v2411 = vadd.f32 %v2403, %v2409
    %v2412 = vadd.f32 %v2404, %v2410
    %2413 = vset.pattern.permute.xlu0 7
    %2414 = vperm.xlu0 %2413, %v2357
    %v2415 = vpop.permute.xlu0 %2414
    %v2417 = vmul.f32 %v2415, %v200
    %v2418 = vmul.f32 %v2415, %v201
    %v2419 = vadd.f32 %v2411, %v2417
    %v2420 = vadd.f32 %v2412, %v2418
    %2421 = vset.pattern.permute.xlu0 8
    %2422 = vperm.xlu0 %2421, %v2357
    %v2423 = vpop.permute.xlu0 %2422
    %v2425 = vmul.f32 %v2423, %v222
    %v2426 = vmul.f32 %v2423, %v223
    %v2427 = vadd.f32 %v2419, %v2425
    %v2428 = vadd.f32 %v2420, %v2426
    %2429 = vset.pattern.permute.xlu0 9
    %2430 = vperm.xlu0 %2429, %v2357
    %v2431 = vpop.permute.xlu0 %2430
    %v2433 = vmul.f32 %v2431, %v244
    %v2434 = vmul.f32 %v2431, %v245
    %v2435 = vadd.f32 %v2427, %v2433
    %v2436 = vadd.f32 %v2428, %v2434
    %2437 = vset.pattern.permute.xlu0 10
    %2438 = vperm.xlu0 %2437, %v2357
    %v2439 = vpop.permute.xlu0 %2438
    %v2441 = vmul.f32 %v2439, %v266
    %v2442 = vmul.f32 %v2439, %v267
    %v2443 = vadd.f32 %v2435, %v2441
    %v2444 = vadd.f32 %v2436, %v2442
    %2445 = vset.pattern.permute.xlu0 11
    %2446 = vperm.xlu0 %2445, %v2357
    %v2447 = vpop.permute.xlu0 %2446
    %v2449 = vmul.f32 %v2447, %v288
    %v2450 = vmul.f32 %v2447, %v289
    %v2451 = vadd.f32 %v2443, %v2449
    %v2452 = vadd.f32 %v2444, %v2450
    %2453 = vset.pattern.permute.xlu0 12
    %2454 = vperm.xlu0 %2453, %v2357
    %v2455 = vpop.permute.xlu0 %2454
    %v2457 = vmul.f32 %v2455, %v310
    %v2458 = vmul.f32 %v2455, %v311
    %v2459 = vadd.f32 %v2451, %v2457
    %v2460 = vadd.f32 %v2452, %v2458
    %2461 = vset.pattern.permute.xlu0 13
    %2462 = vperm.xlu0 %2461, %v2357
    %v2463 = vpop.permute.xlu0 %2462
    %v2465 = vmul.f32 %v2463, %v332
    %v2466 = vmul.f32 %v2463, %v333
    %v2467 = vadd.f32 %v2459, %v2465
    %v2468 = vadd.f32 %v2460, %v2466
    %2469 = vset.pattern.permute.xlu0 14
    %2470 = vperm.xlu0 %2469, %v2357
    %v2471 = vpop.permute.xlu0 %2470
    %v2473 = vmul.f32 %v2471, %v354
    %v2474 = vmul.f32 %v2471, %v355
    %v2475 = vadd.f32 %v2467, %v2473
    %v2476 = vadd.f32 %v2468, %v2474
    %2477 = vrot.lane.b32.xlu0 %v2475, 16
    %v2478 = vpop.permute.xlu0 %2477
    %2479 = vrot.lane.b32.xlu0 %v2476, 16
    %v2480 = vpop.permute.xlu0 %2479
    %v2481 = vsel %vm1342, %v2478, %v2480
    %v2482 = vsel %vm1342, %v2480, %v2478
    %s2483 = scalar_lea.vmem %s1, 53
    %v2484 = vld [vmem:[%s2483] ss:$8 sm:$0x3]
    %v2486 = vlaneseq
    %v2487 = vshrl.u32 %v2486, 7
    %v2488 = vsub.s32 0, %v2487
    %v2489 = vrot.slane %v2484, %v2488
    %v2490 = vlaneseq
    %v2491 = vshrl.u32 %v2490, 7
    %v2492 = vsub.s32 1, %v2491
    %v2493 = vrot.slane %v2484, %v2492
    %v2496 = vmul.f32 %v2481, %v2489
    %v2497 = vmul.f32 %v2482, %v2493
    %v2498 = vadd.f32 %v2355, %v2496
    %v2499 = vadd.f32 %v2356, %v2497
    %v2500 = vld [vmem:[%s3] sm:$0xff]
    %2502 = vset.pattern.permute.xlu0 0
    %2503 = vperm.xlu0 %2502, %v2500
    %v2504 = vpop.permute.xlu0 %2503
    %v2506 = vmul.f32 %v2498, %v2504
    %v2507 = vmul.f32 %v2499, %v2504
    %v2508 = vld [vmem:[%s4] sm:$0xff]
    %2510 = vset.pattern.permute.xlu0 0
    %2511 = vperm.xlu0 %2510, %v2508
    %v2512 = vpop.permute.xlu0 %2511
    %v2514 = vadd.f32 %v2506, %v2512
    %v2515 = vadd.f32 %v2507, %v2512
    %2516 = vrot.lane.b32.xlu0 %v2514, 1
    %v2517 = vpop.permute.xlu0 %2516
    %2518 = vrot.lane.b32.xlu0 %v2515, 1
    %v2519 = vpop.permute.xlu0 %2518
    %v2520 = vsel %vm169, %v2517, %v2519
    %v2521 = vsel %vm169, %v2519, %v2517
    %v2522 = vmul.f32 %v2521, %v178
    %v2523 = vmul.f32 %v2520, %v182
    %2524 = vrot.lane.b32.xlu0 %v2514, 127
    %v2525 = vpop.permute.xlu0 %2524
    %2526 = vrot.lane.b32.xlu0 %v2515, 127
    %v2527 = vpop.permute.xlu0 %2526
    %v2528 = vsel %vm206, %v2525, %v2527
    %v2529 = vsel %vm206, %v2527, %v2525
    %v2530 = vmul.f32 %v2528, %v215
    %v2531 = vmul.f32 %v2529, %v219
    %v2532 = vadd.f32 %v2514, %v2522
    %v2533 = vadd.f32 %v2515, %v2523
    %v2534 = vadd.f32 %v2532, %v2530
    %v2535 = vadd.f32 %v2533, %v2531
    %2536 = vrot.lane.b32.xlu0 %v2534, 16
    %v2537 = vpop.permute.xlu0 %2536
    %2538 = vrot.lane.b32.xlu0 %v2535, 16
    %v2539 = vpop.permute.xlu0 %2538
    %v2540 = vsel %vm1342, %v2537, %v2539
    %v2541 = vsel %vm1342, %v2539, %v2537
    %v2542 = vmul.f32 %v2541, %v1351
    %v2543 = vmul.f32 %v2540, %v1355
    %2544 = vrot.lane.b32.xlu0 %v2534, 112
    %v2545 = vpop.permute.xlu0 %2544
    %2546 = vrot.lane.b32.xlu0 %v2535, 112
    %v2547 = vpop.permute.xlu0 %2546
    %v2548 = vsel %vm480, %v2545, %v2547
    %v2549 = vsel %vm480, %v2547, %v2545
    %v2550 = vmul.f32 %v2548, %v1631
    %v2551 = vmul.f32 %v2549, %v1635
    %v2552 = vadd.f32 %v2534, %v2542
    %v2553 = vadd.f32 %v2535, %v2543
    %v2554 = vadd.f32 %v2552, %v2550
    %v2555 = vadd.f32 %v2553, %v2551
    %v2556 = vmul.f32 %v2554, 0.11111111
    %v2557 = vmul.f32 %v2555, 0.11111111
    %v2558 = vsub.f32 %v2514, %v2556
    %v2559 = vsub.f32 %v2515, %v2557
    %v2560 = vld [vmem:[%s5] sm:$0xff]
    %vm2561 = vcmask 64512
    %v2563 = vsel %vm2561, %v2560, 0
    %2565 = vmatprep.subr.mxu0 0.0
    %2566 = vmatpush1.msra.mxu0 0.0
    %2567 = vmatprep.subr.mxu0 0.0
    %2568 = vmatpush1.msra.mxu0 0.0
    %2569 = vmatprep.subr.mxu0 0.0
    %2570 = vmatpush1.msra.mxu0 0.0
    %2571 = vmatprep.subr.mxu0 0.0
    %2572 = vmatpush1.msra.mxu0 0.0
    %2573 = vmatprep.subr.mxu0 0.0
    %2574 = vmatpush1.msra.mxu0 0.0
    %2575 = vmatprep.subr.mxu0 0.0
    %2576 = vmatpush1.msra.mxu0 0.0
    %2577 = vmatprep.subr.mxu0 0.0
    %2578 = vmatpush1.msra.mxu0 0.0
    %2579 = vmatprep.subr.mxu0 0.0
    %2580 = vmatpush1.msra.mxu0 0.0
    %2581 = vmatprep.subr.mxu0 0.0
    %2582 = vmatpush1.msra.mxu0 0.0
    %2583 = vmatprep.subr.mxu0 0.0
    %2584 = vmatpush1.msra.mxu0 0.0
    %2585 = vmatprep.subr.mxu0 0.0
    %2586 = vmatpush1.msra.mxu0 0.0
    %2587 = vmatprep.subr.mxu0 0.0
    %2588 = vmatpush1.msra.mxu0 0.0
    %2589 = vmatprep.subr.mxu0 0.0
    %2590 = vmatpush1.msra.mxu0 0.0
    %2591 = vmatprep.subr.mxu0 0.0
    %2592 = vmatpush1.msra.mxu0 0.0
    %2593 = vmatprep.subr.mxu0 0.0
    %2594 = vmatpush1.msra.mxu0 0.0
    %2595 = vmatprep.subr.mxu0 %v2559
    %2596 = vmatpush1.msra.mxu0 %v2558
    %2597 = vmatprep.subr.mxu0 0.0
    %2598 = vmatpush2.msra.mxu0 0.0
    %2599 = vmatprep.subr.mxu0 0.0
    %2600 = vmatpush2.msra.mxu0 0.0
    %2601 = vmatprep.subr.mxu0 0.0
    %2602 = vmatpush2.msra.mxu0 0.0
    %2603 = vmatprep.subr.mxu0 0.0
    %2604 = vmatpush2.msra.mxu0 0.0
    %2605 = vmatprep.subr.mxu0 0.0
    %2606 = vmatpush2.msra.mxu0 0.0
    %2607 = vmatprep.subr.mxu0 0.0
    %2608 = vmatpush2.msra.mxu0 0.0
    %2609 = vmatprep.subr.mxu0 0.0
    %2610 = vmatpush2.msra.mxu0 0.0
    %2611 = vmatprep.subr.mxu0 0.0
    %2612 = vmatpush2.msra.mxu0 0.0
    %2613 = vmatprep.subr.mxu0 0.0
    %2614 = vmatpush2.msra.mxu0 0.0
    %2615 = vmatprep.subr.mxu0 0.0
    %2616 = vmatpush2.msra.mxu0 0.0
    %2617 = vmatprep.subr.mxu0 0.0
    %2618 = vmatpush2.msra.mxu0 0.0
    %2619 = vmatprep.subr.mxu0 0.0
    %2620 = vmatpush2.msra.mxu0 0.0
    %2621 = vmatprep.subr.mxu0 0.0
    %2622 = vmatpush2.msra.mxu0 0.0
    %2623 = vmatprep.subr.mxu0 0.0
    %2624 = vmatpush2.msra.mxu0 0.0
    %2625 = vmatprep.subr.mxu0 0.0
    %2626 = vmatpush2.msra.mxu0 0.0
    %2627 = vmatprep.subr.mxu0 0.0
    %2628 = vmatpush2.msra.mxu0 0.0
    %2629 = vmatprep.mubr.f32.mxu0 0.0
    %2630 = vmatmul.mubr.f32.gmra.mxu0 %v2563
    %v2631 = vpop.f32.mrf.mxu0
    %v2632 = vadd.f32 0.0, %v2631
    %v2633 = vpop.f32.mrf.mxu0
    %v2634 = vadd.f32 0.0, %v2633
    %2635 = vdwg.mxu0
    %v2636 = vld [vmem:[%s6] sm:$0xff]
    %2638 = vset.pattern.permute.xlu0 0
    %2639 = vperm.xlu0 %2638, %v2636
    %v2640 = vpop.permute.xlu0 %2639
    %v2642 = vmul.f32 %v2632, %v2640
    %v2643 = vmul.f32 %v2634, %v2640
    %v2644 = vld [vmem:[%s7] sm:$0xff]
    %2646 = vset.pattern.permute.xlu0 0
    %2647 = vperm.xlu0 %2646, %v2644
    %v2648 = vpop.permute.xlu0 %2647
    %v2650 = vadd.f32 %v2642, %v2648
    %v2651 = vadd.f32 %v2643, %v2648
    %v2652 = vxor.u32 %v2650, 2147483648
    %v2653 = vxor.u32 %v2651, 2147483648
    %v2654 = vmul.f32 %v2652, 1.442695
    %v2655 = vpow.pop %v2654
    %v2656 = vmul.f32 %v2653, 1.442695
    %v2657 = vpow.pop %v2656
    %v2658 = vadd.f32 %v2655, 1.0
    %v2659 = vadd.f32 %v2657, 1.0
    %v2660 = vrcp.pop %v2658
    %v2661 = vmul.f32 1.0, %v2660
    %v2662 = vrcp.pop %v2659
    %v2663 = vmul.f32 1.0, %v2662
    %v2664 = vmul.f32 %v2661, %v30
    %v2665 = vmul.f32 %v2663, %v31
    %2666 = vst [vmem:[#allocation2] sm:$0xff] %v2664
    %2667 = vst [vmem:[#allocation2 + $0x8] sm:$0xff] %v2665
    // Predicated region
    $region34: #{tpu_custom_call.1} parent=1 // pred_check
      _
    $region35: #{tpu_custom_call.1} parent=1 // pred_check_branch
      %2669 = sbr.rel (0) target = $region37
    $region36: #{tpu_custom_call.1} parent=1 // pred_region
      %s2671 = ssub.s32 256, 256
      %2672 = vsyncadd [#allocation3], %s2671
      %s2674 = sshll.u32 [#allocation2], 4
      %s2675 = int_to_ptr.vmem [resolvable:$true] %s2674
      %2677 = dma.vmem_to_hbm [thread:$0]  %s2675, 256, %s8, [#allocation3]
    $region37: #{tpu_custom_call.1} parent=1 // pred_fallthru
      _
    // Predicated region
    $region38: #{tpu_custom_call.1} parent=1 // pred_check
      _
    $region39: #{tpu_custom_call.1} parent=1 // pred_check_branch
      %2679 = sbr.rel (0) target = $region41
    $region40: #{tpu_custom_call.1} parent=1 // pred_region
      %2680 = dma.done [#allocation3], 256
    $region41: #{tpu_custom_call.1} parent=1 // pred_fallthru
      _
    %2681 = vsyncpa [#allocation3], 1

</llo_original>
